<compile_context>
chip_gen: v5e
topology: v5e:2x2
jax: 0.10.0
libtpu: 0.0.40
codegen_flags: <defaults>
</compile_context>

<pallas_src>
import math

import jax
import jax.numpy as jnp
from jax.experimental import pallas as pl
from jax.experimental.pallas import tpu as pltpu

EPS = 1e-5  # nn.LayerNorm default eps (encoder-final norm uses 1e-6)


# ----------------------------- in-kernel helpers -----------------------------
def _sigmoid(x):
    # tanh formulation routes through the EUP (transcendental) slot instead of a VALU divide.
    return 0.5 * (jnp.tanh(0.5 * x) + 1.0)


def _swish(x):  # speechbrain Swish (beta=1) == SiLU
    return x * _sigmoid(x)


def _layer_norm(x, g, b, eps=EPS):
    mu = jnp.mean(x, axis=-1, keepdims=True)
    var = jnp.mean((x - mu) ** 2, axis=-1, keepdims=True)
    return (x - mu) * jax.lax.rsqrt(var + eps) * g + b


def _rep_spec(shape):
    """BlockSpec for a parameter replicated across the grid (full array every step)."""
    n = len(shape)
    return pl.BlockSpec(shape, lambda *args, n=n: (0,) * n)


# Fixed flattening order of a layer's parameters (kernel arg order == this order).
# NOTE: w_pos is consumed in the wrapper (batch-independent pos projection), not here.
PARAM_ORDER = (
    # ffn_module1: LayerNorm + Linear/Swish/Linear
    "f1_ln_g", "f1_ln_b", "f1_w1", "f1_b1", "f1_w2", "f1_b2",
    # norm1
    "n1_g", "n1_b",
    # RelPosMHAXL: fused in-proj, rel biases, out-proj
    "w_qkv", "bias_u", "bias_v", "w_o", "b_o",
    # ConvolutionModule: LN, bottleneck(1x1 conv -> GLU), depthwise conv, LN, Swish, Linear
    "c_ln1_g", "c_ln1_b", "c_wb", "c_bb", "c_wdw", "c_bdw",
    "c_ln2_g", "c_ln2_b", "c_wa", "c_ba",
    # ffn_module2
    "f2_ln_g", "f2_ln_b", "f2_w1", "f2_b1", "f2_w2", "f2_b2",
    # norm2
    "n2_g", "n2_b",
)
_NP = len(PARAM_ORDER)  # 31


# ----------------------------- fused ConformerEncoderLayer kernel -----------------------------
def _make_layer_kernel(H, *, return_attn, final_eps):
    """final_eps is not None => the encoder-final LayerNorm (gamma/beta passed as two extra
    params) is fused after norm2 (only used for the last layer)."""

    def kernel(x_ref, pe_ref, *rest):
        p = dict(zip(PARAM_ORDER, rest[:_NP]))
        idx = _NP
        if final_eps is not None:
            fin_g_ref, fin_b_ref = rest[idx], rest[idx + 1]
            idx += 2
        o_ref = rest[idx]
        idx += 1
        attn_ref = None
        if return_attn:
            attn_ref = rest[idx]
            idx += 1
        qu_s, qv_s, k_s, v_s, ctx_s = rest[idx:idx + 5]

        T, D = x_ref.shape[1], x_ref.shape[2]
        hd = D // H
        K = p["c_wdw"].shape[0]       # depthwise kernel size (assumed odd, 'same' padding)
        pad = (K - 1) // 2            # non-causal, dilation=1
        scale = 1.0 / math.sqrt(D)    # speechbrain RelPosMHAXL: 1/sqrt(embed_dim)
        bf16 = jnp.bfloat16
        f32 = jnp.float32

        def ffw_half(xin, ln_g, ln_b, w1, b1, w2, b2):
            h = _layer_norm(xin, ln_g[...], ln_b[...])
            h = _swish(jnp.dot(h.astype(bf16), w1[...], preferred_element_type=f32) + b1[...])
            return jnp.dot(h.astype(bf16), w2[...], preferred_element_type=f32) + b2[...]

        x = x_ref[0]                  # (T, D) f32, resident for the whole layer

        # ---------- x = x + 0.5 * ffn_module1(x) ----------
        x = x + 0.5 * ffw_half(x, p["f1_ln_g"], p["f1_ln_b"],
                               p["f1_w1"], p["f1_b1"], p["f1_w2"], p["f1_b2"])
        skip = x

        # ---------- norm1 + RelPosMHAXL self-attention ----------
        xn = _layer_norm(x, p["n1_g"][...], p["n1_b"][...])
        qkv = jnp.dot(xn.astype(bf16), p["w_qkv"][...], preferred_element_type=f32)   # (T, 3D) f32
        q, k, v = qkv[:, :D], qkv[:, D:2 * D], qkv[:, 2 * D:]
        qu = q + p["bias_u"][...]     # pos_bias_u packed as (1, D) = heads concatenated
        qv = q + p["bias_v"][...]

        # head-major bf16 slabs so score/context matmuls are single batched einsums
        for hh in range(H):
            sl = slice(hh * hd, (hh + 1) * hd)
            qu_s[hh] = qu[:, sl].astype(bf16)
            qv_s[hh] = qv[:, sl].astype(bf16)
            k_s[hh] = k[:, sl].astype(bf16)
            v_s[hh] = v[:, sl].astype(bf16)

        ac = jnp.einsum("htd,hsd->hts", qu_s[...], k_s[...],
                        preferred_element_type=f32)                       # (H, T, T)
        bd = jnp.einsum("htd,hpd->htp", qv_s[...], pe_ref[...],
                        preferred_element_type=f32)                       # (H, T, 2T-1)
        # Transformer-XL relative shift: bd_s[:, i, j] = bd[:, i, (T-1)-i+j]
        # (T static lane slices + one sublane concat; O(T*P) layout work, no O(T^2*P) selects)
        bd_s = jnp.concatenate(
            [bd[:, i:i + 1, (T - 1) - i:(2 * T - 1) - i] for i in range(T)], axis=1)  # (H, T, T)

        s = (ac + bd_s) * scale
        m = jnp.max(s, axis=-1, keepdims=True)
        e = jnp.exp(s - m)
        denom = jnp.sum(e, axis=-1, keepdims=True)
        # exact reciprocal when the weights are externally consumed, approx (EUP) otherwise
        a = e * pl.reciprocal(denom, approx=not return_attn)
        if return_attn:
            attn_ref[0] = a
        ctx = jnp.einsum("hts,hsd->htd", a.astype(bf16), v_s[...],
                         preferred_element_type=f32)                      # (H, T, hd)
        for hh in range(H):
            ctx_s[:, hh * hd:(hh + 1) * hd] = ctx[hh].astype(bf16)        # merge heads in VMEM slab
        x = skip + jnp.dot(ctx_s[...], p["w_o"][...], preferred_element_type=f32) + p["b_o"][...]

        # ---------- x = x + convolution_module(x)  (conv_mask is None) ----------
        h1 = _layer_norm(x, p["c_ln1_g"][...], p["c_ln1_b"][...])
        bt = jnp.dot(h1.astype(bf16), p["c_wb"][...], preferred_element_type=f32) + p["c_bb"][...]
        glu = bt[:, :D] * _sigmoid(bt[:, D:])                             # GLU over channels
        # depthwise Conv1d(D->D, groups=D), 'same' zero padding: per-tap sublane roll (XLU) + mask
        row = jax.lax.broadcasted_iota(jnp.int32, (T, D), 0)
        acc = glu * p["c_wdw"][pad:pad + 1, :]                            # center tap (offset 0)
        for kk in range(K):
            off = kk - pad
            if off == 0:
                continue
            rolled = pltpu.roll(glu, shift=(-off) % T, axis=0)            # rolled[t] = glu[t+off mod T]
            valid = jnp.logical_and(row + off >= 0, row + off < T)        # zero-pad boundary mask
            acc = acc + jnp.where(valid, rolled, 0.0) * p["c_wdw"][kk:kk + 1, :]
        acc = acc + p["c_bdw"][...]
        h2 = _swish(_layer_norm(acc, p["c_ln2_g"][...], p["c_ln2_b"][...]))
        x = x + jnp.dot(h2.astype(bf16), p["c_wa"][...], preferred_element_type=f32) + p["c_ba"][...]

        # ---------- x = norm2(x + 0.5 * ffn_module2(x))  (+ fused encoder-final LN) ----------
        x = x + 0.5 * ffw_half(x, p["f2_ln_g"], p["f2_ln_b"],
                               p["f2_w1"], p["f2_b1"], p["f2_w2"], p["f2_b2"])
        x = _layer_norm(x, p["n2_g"][...], p["n2_b"][...])
        if final_eps is not None:
            x = _layer_norm(x, fin_g_ref[...], fin_b_ref[...], eps=final_eps)
        o_ref[0] = x

    return kernel


def conformer_layer(x, pe_h, lp, nhead, *, return_attn=True, final_ln=None):
    """One ConformerEncoderLayer forward as a single fused pallas_call.

    pe_h: (H, 2T-1, hd) bf16 head-major positional projection (computed once per layer).
    final_ln: optional (gamma, beta) of the encoder-final LayerNorm, fused into this kernel.
    """
    B, T, D = x.shape
    H = nhead
    hd = D // H
    params = [lp[name] for name in PARAM_ORDER]
    extra = list(final_ln) if final_ln is not None else []

    in_specs = ([pl.BlockSpec((1, T, D), lambda i: (i, 0, 0)),
                 _rep_spec(pe_h.shape)]
                + [_rep_spec(a.shape) for a in params]
                + [_rep_spec(a.shape) for a in extra])

    if return_attn:
        out_shape = (jax.ShapeDtypeStruct((B, T, D), jnp.float32),
                     jax.ShapeDtypeStruct((B, H, T, T), jnp.float32))
        out_specs = (pl.BlockSpec((1, T, D), lambda i: (i, 0, 0)),
                     pl.BlockSpec((1, H, T, T), lambda i: (i, 0, 0, 0)))
    else:
        out_shape = jax.ShapeDtypeStruct((B, T, D), jnp.float32)
        out_specs = pl.BlockSpec((1, T, D), lambda i: (i, 0, 0))

    kernel = _make_layer_kernel(H, return_attn=return_attn,
                                final_eps=1e-6 if final_ln is not None else None)

    res = pl.pallas_call(
        kernel,
        out_shape=out_shape,
        grid=(B,),
        in_specs=in_specs,
        out_specs=out_specs,
        scratch_shapes=[
            pltpu.VMEM((H, T, hd), jnp.bfloat16),   # q + pos_bias_u, head-major
            pltpu.VMEM((H, T, hd), jnp.bfloat16),   # q + pos_bias_v
            pltpu.VMEM((H, T, hd), jnp.bfloat16),   # k
            pltpu.VMEM((H, T, hd), jnp.bfloat16),   # v
            pltpu.VMEM((T, D), jnp.bfloat16),       # merged per-head context
        ],
        compiler_params=pltpu.CompilerParams(
            dimension_semantics=("parallel",),
            vmem_limit_bytes=48 * 1024 * 1024,
        ),
    )(x, pe_h, *params, *extra)

    if return_attn:
        return res[0], res[1]
    return res, None


# ----------------------------- full ConformerEncoder forward -----------------------------
def conformer_encoder(x, pos_embs, params, *, return_attn=True):
    """x: (B, T, D), pos_embs: (1, 2T-1, D). Returns (output, attention_lst)."""
    B, T, D = x.shape
    H = params["nhead"]
    hd = D // H
    pe2d = pos_embs.reshape(pos_embs.shape[-2], pos_embs.shape[-1]).astype(jnp.float32)  # (2T-1, D)
    layers = params["layers"]
    out = x
    attn_lst = []
    for li, lp in enumerate(layers):
        # Positional projection is batch-independent -> compute once per layer in the wrapper
        # and hand the kernel a head-major bf16 slab (avoids B redundant in-kernel matmuls).
        pe_proj = jnp.dot(pe2d.astype(jnp.bfloat16), lp["w_pos"],
                          preferred_element_type=jnp.float32)                     # (2T-1, D)
        pe_h = pe_proj.reshape(-1, H, hd).transpose(1, 0, 2).astype(jnp.bfloat16)  # (H, 2T-1, hd)
        final_ln = (params["norm_g"], params["norm_b"]) if li == len(layers) - 1 else None
        out, attn = conformer_layer(out, pe_h, lp, H,
                                    return_attn=return_attn, final_ln=final_ln)
        if attn is not None:
            attn_lst.append(attn)
    return out, attn_lst


# ----------------------------- deterministic parameter init -----------------------------
def init_layer_params(key, D, F, H, K):
    keys = iter(jax.random.split(key, 24))
    bf = jnp.bfloat16

    def w(shape, scale=0.1, dtype=jnp.float32):
        return (scale * jax.random.normal(next(keys), shape)).astype(dtype)

    ones = lambda s: jnp.ones(s, jnp.float32)
    zeros = lambda s: jnp.zeros(s, jnp.float32)

    return {
        "f1_ln_g": ones((1, D)), "f1_ln_b": zeros((1, D)),
        "f1_w1": w((D, F), dtype=bf), "f1_b1": w((1, F), 0.02),
        "f1_w2": w((F, D), dtype=bf), "f1_b2": w((1, D), 0.02),
        "n1_g": ones((1, D)), "n1_b": zeros((1, D)),
        # fused in_proj (Wq|Wk|Wv) and pos projection; rel biases packed head-concatenated
        "w_qkv": w((D, 3 * D), dtype=bf), "w_pos": w((D, D), dtype=bf),
        "bias_u": w((1, D)), "bias_v": w((1, D)),
        "w_o": w((D, D), dtype=bf), "b_o": w((1, D), 0.02),
        "c_ln1_g": ones((1, D)), "c_ln1_b": zeros((1, D)),
        "c_wb": w((D, 2 * D), dtype=bf), "c_bb": w((1, 2 * D), 0.02),
        "c_wdw": w((K, D)), "c_bdw": w((1, D), 0.02),      # wdw[k,c] == torch w[c,0,k]
        "c_ln2_g": ones((1, D)), "c_ln2_b": zeros((1, D)),
        "c_wa": w((D, D), dtype=bf), "c_ba": w((1, D), 0.02),
        "f2_ln_g": ones((1, D)), "f2_ln_b": zeros((1, D)),
        "f2_w1": w((D, F), dtype=bf), "f2_b1": w((1, F), 0.02),
        "f2_w2": w((F, D), dtype=bf), "f2_b2": w((1, D), 0.02),
        "n2_g": ones((1, D)), "n2_b": zeros((1, D)),
    }


def init_encoder_params(key, num_layers, D, F, H, K):
    keys = jax.random.split(key, num_layers)
    return {
        "nhead": H,
        "layers": [init_layer_params(keys[i], D, F, H, K) for i in range(num_layers)],
        "norm_g": jnp.ones((1, D), jnp.float32),
        "norm_b": jnp.zeros((1, D), jnp.float32),
    }


if __name__ == "__main__":
    # num_layers=2, d_model=32, d_ffn=64, nhead=4, kernel_size=7
    B, T, D, F, H, K, L = 2, 8, 32, 64, 4, 7, 2
    key = jax.random.PRNGKey(0)
    kx, kp, kw = jax.random.split(key, 3)
    x = jax.random.normal(kx, (B, T, D), dtype=jnp.float32)
    pos_embs = jax.random.normal(kp, (1, 2 * T - 1, D), dtype=jnp.float32)
    params = init_encoder_params(kw, L, D, F, H, K)

    # default path: matches the PyTorch module's (output, attention_lst) signature
    out, attn_lst = conformer_encoder(x, pos_embs, params)
    out = jax.block_until_ready(out)
    attn_lst = [jax.block_until_ready(a) for a in attn_lst]
    assert out.shape == (B, T, D), out.shape
    assert len(attn_lst) == L and all(a.shape == (B, H, T, T) for a in attn_lst)
    assert bool(jnp.all(jnp.isfinite(out)))

    # fast path: skip the (B, H, T, T) attention-weights writeback entirely
    out2, _ = conformer_encoder(x, pos_embs, params, return_attn=False)
    out2 = jax.block_until_ready(out2)
    assert out2.shape == (B, T, D)
    assert bool(jnp.all(jnp.isfinite(out2)))

    print("KERNEL_OK")
</pallas_src>

<mosaic_0001>
module attributes {stable_mosaic.version = 11 : i64} {
  func.func @kernel(%arg0: i32, %arg1: memref<1x8x32xf32, #tpu.memory_space<vmem>>, %arg2: memref<4x15x8xbf16, #tpu.memory_space<vmem>>, %arg3: memref<1x32xf32, #tpu.memory_space<vmem>>, %arg4: memref<1x32xf32, #tpu.memory_space<vmem>>, %arg5: memref<32x64xbf16, #tpu.memory_space<vmem>>, %arg6: memref<1x64xf32, #tpu.memory_space<vmem>>, %arg7: memref<64x32xbf16, #tpu.memory_space<vmem>>, %arg8: memref<1x32xf32, #tpu.memory_space<vmem>>, %arg9: memref<1x32xf32, #tpu.memory_space<vmem>>, %arg10: memref<1x32xf32, #tpu.memory_space<vmem>>, %arg11: memref<32x96xbf16, #tpu.memory_space<vmem>>, %arg12: memref<1x32xf32, #tpu.memory_space<vmem>>, %arg13: memref<1x32xf32, #tpu.memory_space<vmem>>, %arg14: memref<32x32xbf16, #tpu.memory_space<vmem>>, %arg15: memref<1x32xf32, #tpu.memory_space<vmem>>, %arg16: memref<1x32xf32, #tpu.memory_space<vmem>>, %arg17: memref<1x32xf32, #tpu.memory_space<vmem>>, %arg18: memref<32x64xbf16, #tpu.memory_space<vmem>>, %arg19: memref<1x64xf32, #tpu.memory_space<vmem>>, %arg20: memref<7x32xf32, #tpu.memory_space<vmem>>, %arg21: memref<1x32xf32, #tpu.memory_space<vmem>>, %arg22: memref<1x32xf32, #tpu.memory_space<vmem>>, %arg23: memref<1x32xf32, #tpu.memory_space<vmem>>, %arg24: memref<32x32xbf16, #tpu.memory_space<vmem>>, %arg25: memref<1x32xf32, #tpu.memory_space<vmem>>, %arg26: memref<1x32xf32, #tpu.memory_space<vmem>>, %arg27: memref<1x32xf32, #tpu.memory_space<vmem>>, %arg28: memref<32x64xbf16, #tpu.memory_space<vmem>>, %arg29: memref<1x64xf32, #tpu.memory_space<vmem>>, %arg30: memref<64x32xbf16, #tpu.memory_space<vmem>>, %arg31: memref<1x32xf32, #tpu.memory_space<vmem>>, %arg32: memref<1x32xf32, #tpu.memory_space<vmem>>, %arg33: memref<1x32xf32, #tpu.memory_space<vmem>>, %arg34: memref<1x8x32xf32, #tpu.memory_space<vmem>>, %arg35: memref<1x4x8x8xf32, #tpu.memory_space<vmem>>, %arg36: memref<4x8x8xbf16, #tpu.memory_space<vmem>>, %arg37: memref<4x8x8xbf16, #tpu.memory_space<vmem>>, %arg38: memref<4x8x8xbf16, #tpu.memory_space<vmem>>, %arg39: memref<4x8x8xbf16, #tpu.memory_space<vmem>>, %arg40: memref<8x32xbf16, #tpu.memory_space<vmem>>) attributes {dimension_semantics = [#tpu.dimension_semantics<parallel>], iteration_bounds = array<i64: 2>, scalar_prefetch = 0 : i64, scratch_operands = 5 : i64, tpu.core_type = #tpu.core_type<tc>, window_params = [{transform_indices = @transform_0, window_bounds = array<i64: 1, 8, 32>}, {pipeline_mode = #tpu.pipeline_mode<synchronous>, transform_indices = @transform_1, window_bounds = array<i64: 4, 15, 8>}, {pipeline_mode = #tpu.pipeline_mode<synchronous>, transform_indices = @transform_2, window_bounds = array<i64: 1, 32>}, {pipeline_mode = #tpu.pipeline_mode<synchronous>, transform_indices = @transform_3, window_bounds = array<i64: 1, 32>}, {pipeline_mode = #tpu.pipeline_mode<synchronous>, transform_indices = @transform_4, window_bounds = array<i64: 32, 64>}, {pipeline_mode = #tpu.pipeline_mode<synchronous>, transform_indices = @transform_5, window_bounds = array<i64: 1, 64>}, {pipeline_mode = #tpu.pipeline_mode<synchronous>, transform_indices = @transform_6, window_bounds = array<i64: 64, 32>}, {pipeline_mode = #tpu.pipeline_mode<synchronous>, transform_indices = @transform_7, window_bounds = array<i64: 1, 32>}, {pipeline_mode = #tpu.pipeline_mode<synchronous>, transform_indices = @transform_8, window_bounds = array<i64: 1, 32>}, {pipeline_mode = #tpu.pipeline_mode<synchronous>, transform_indices = @transform_9, window_bounds = array<i64: 1, 32>}, {pipeline_mode = #tpu.pipeline_mode<synchronous>, transform_indices = @transform_10, window_bounds = array<i64: 32, 96>}, {pipeline_mode = #tpu.pipeline_mode<synchronous>, transform_indices = @transform_11, window_bounds = array<i64: 1, 32>}, {pipeline_mode = #tpu.pipeline_mode<synchronous>, transform_indices = @transform_12, window_bounds = array<i64: 1, 32>}, {pipeline_mode = #tpu.pipeline_mode<synchronous>, transform_indices = @transform_13, window_bounds = array<i64: 32, 32>}, {pipeline_mode = #tpu.pipeline_mode<synchronous>, transform_indices = @transform_14, window_bounds = array<i64: 1, 32>}, {pipeline_mode = #tpu.pipeline_mode<synchronous>, transform_indices = @transform_15, window_bounds = array<i64: 1, 32>}, {pipeline_mode = #tpu.pipeline_mode<synchronous>, transform_indices = @transform_16, window_bounds = array<i64: 1, 32>}, {pipeline_mode = #tpu.pipeline_mode<synchronous>, transform_indices = @transform_17, window_bounds = array<i64: 32, 64>}, {pipeline_mode = #tpu.pipeline_mode<synchronous>, transform_indices = @transform_18, window_bounds = array<i64: 1, 64>}, {pipeline_mode = #tpu.pipeline_mode<synchronous>, transform_indices = @transform_19, window_bounds = array<i64: 7, 32>}, {pipeline_mode = #tpu.pipeline_mode<synchronous>, transform_indices = @transform_20, window_bounds = array<i64: 1, 32>}, {pipeline_mode = #tpu.pipeline_mode<synchronous>, transform_indices = @transform_21, window_bounds = array<i64: 1, 32>}, {pipeline_mode = #tpu.pipeline_mode<synchronous>, transform_indices = @transform_22, window_bounds = array<i64: 1, 32>}, {pipeline_mode = #tpu.pipeline_mode<synchronous>, transform_indices = @transform_23, window_bounds = array<i64: 32, 32>}, {pipeline_mode = #tpu.pipeline_mode<synchronous>, transform_indices = @transform_24, window_bounds = array<i64: 1, 32>}, {pipeline_mode = #tpu.pipeline_mode<synchronous>, transform_indices = @transform_25, window_bounds = array<i64: 1, 32>}, {pipeline_mode = #tpu.pipeline_mode<synchronous>, transform_indices = @transform_26, window_bounds = array<i64: 1, 32>}, {pipeline_mode = #tpu.pipeline_mode<synchronous>, transform_indices = @transform_27, window_bounds = array<i64: 32, 64>}, {pipeline_mode = #tpu.pipeline_mode<synchronous>, transform_indices = @transform_28, window_bounds = array<i64: 1, 64>}, {pipeline_mode = #tpu.pipeline_mode<synchronous>, transform_indices = @transform_29, window_bounds = array<i64: 64, 32>}, {pipeline_mode = #tpu.pipeline_mode<synchronous>, transform_indices = @transform_30, window_bounds = array<i64: 1, 32>}, {pipeline_mode = #tpu.pipeline_mode<synchronous>, transform_indices = @transform_31, window_bounds = array<i64: 1, 32>}, {pipeline_mode = #tpu.pipeline_mode<synchronous>, transform_indices = @transform_32, window_bounds = array<i64: 1, 32>}, {transform_indices = @transform_33, window_bounds = array<i64: 1, 8, 32>}, {transform_indices = @transform_34, window_bounds = array<i64: 1, 4, 8, 8>}]} {
    %c0 = arith.constant 0 : index
    %c0_0 = arith.constant 0 : index
    %c0_1 = arith.constant 0 : index
    %0 = vector.load %arg1[%c0, %c0_0, %c0_1] : memref<1x8x32xf32, #tpu.memory_space<vmem>>, vector<1x8x32xf32>
    %1 = vector.shape_cast %0 : vector<1x8x32xf32> to vector<8x32xf32>
    %c0_2 = arith.constant 0 : index
    %c0_3 = arith.constant 0 : index
    %2 = vector.load %arg3[%c0_2, %c0_3] : memref<1x32xf32, #tpu.memory_space<vmem>>, vector<1x32xf32>
    %c0_4 = arith.constant 0 : index
    %c0_5 = arith.constant 0 : index
    %3 = vector.load %arg4[%c0_4, %c0_5] : memref<1x32xf32, #tpu.memory_space<vmem>>, vector<1x32xf32>
    %cst = arith.constant dense<0.000000e+00> : vector<8xf32>
    %4 = vector.multi_reduction <add>, %1, %cst [1] : vector<8x32xf32> to vector<8xf32>
    %5 = vector.shape_cast %4 : vector<8xf32> to vector<8x1xf32>
    %cst_6 = arith.constant 3.200000e+01 : f32
    %6 = vector.broadcast %cst_6 : f32 to vector<8x1xf32>
    %7 = arith.divf %5, %6 : vector<8x1xf32>
    %8 = vector.broadcast %7 : vector<8x1xf32> to vector<8x32xf32>
    %9 = arith.subf %1, %8 : vector<8x32xf32>
    %10 = arith.mulf %9, %9 : vector<8x32xf32>
    %cst_7 = arith.constant dense<0.000000e+00> : vector<8xf32>
    %11 = vector.multi_reduction <add>, %10, %cst_7 [1] : vector<8x32xf32> to vector<8xf32>
    %12 = vector.shape_cast %11 : vector<8xf32> to vector<8x1xf32>
    %cst_8 = arith.constant 3.200000e+01 : f32
    %13 = vector.broadcast %cst_8 : f32 to vector<8x1xf32>
    %14 = arith.divf %12, %13 : vector<8x1xf32>
    %15 = vector.broadcast %7 : vector<8x1xf32> to vector<8x32xf32>
    %16 = arith.subf %1, %15 : vector<8x32xf32>
    %cst_9 = arith.constant 9.99999974E-6 : f32
    %17 = vector.broadcast %cst_9 : f32 to vector<8x1xf32>
    %18 = arith.addf %14, %17 : vector<8x1xf32>
    %19 = math.rsqrt %18 : vector<8x1xf32>
    %20 = vector.broadcast %19 : vector<8x1xf32> to vector<8x32xf32>
    %21 = arith.mulf %16, %20 : vector<8x32xf32>
    %22 = vector.broadcast %2 : vector<1x32xf32> to vector<8x32xf32>
    %23 = arith.mulf %21, %22 : vector<8x32xf32>
    %24 = vector.broadcast %3 : vector<1x32xf32> to vector<8x32xf32>
    %25 = arith.addf %23, %24 : vector<8x32xf32>
    %26 = arith.truncf %25 : vector<8x32xf32> to vector<8x32xbf16>
    %c0_10 = arith.constant 0 : index
    %c0_11 = arith.constant 0 : index
    %27 = vector.load %arg5[%c0_10, %c0_11] : memref<32x64xbf16, #tpu.memory_space<vmem>>, vector<32x64xbf16>
    %cst_12 = arith.constant dense<0.000000e+00> : vector<8x64xf32>
    %28 = tpu.matmul %26, %27, %cst_12 {dimension_numbers = #tpu.dot_dimension_numbers<[1], [0], [0], [1], [0, 0, 1, 1], [], []>} : vector<8x32xbf16>, vector<32x64xbf16>, vector<8x64xf32> -> vector<8x64xf32>
    %c0_13 = arith.constant 0 : index
    %c0_14 = arith.constant 0 : index
    %29 = vector.load %arg6[%c0_13, %c0_14] : memref<1x64xf32, #tpu.memory_space<vmem>>, vector<1x64xf32>
    %30 = vector.broadcast %29 : vector<1x64xf32> to vector<8x64xf32>
    %31 = arith.addf %28, %30 : vector<8x64xf32>
    %cst_15 = arith.constant 5.000000e-01 : f32
    %32 = vector.broadcast %cst_15 : f32 to vector<8x64xf32>
    %33 = arith.mulf %32, %31 : vector<8x64xf32>
    %34 = math.tanh %33 : vector<8x64xf32>
    %cst_16 = arith.constant 1.000000e+00 : f32
    %35 = vector.broadcast %cst_16 : f32 to vector<8x64xf32>
    %36 = arith.addf %34, %35 : vector<8x64xf32>
    %cst_17 = arith.constant 5.000000e-01 : f32
    %37 = vector.broadcast %cst_17 : f32 to vector<8x64xf32>
    %38 = arith.mulf %37, %36 : vector<8x64xf32>
    %39 = arith.mulf %31, %38 : vector<8x64xf32>
    %40 = arith.truncf %39 : vector<8x64xf32> to vector<8x64xbf16>
    %c0_18 = arith.constant 0 : index
    %c0_19 = arith.constant 0 : index
    %41 = vector.load %arg7[%c0_18, %c0_19] : memref<64x32xbf16, #tpu.memory_space<vmem>>, vector<64x32xbf16>
    %cst_20 = arith.constant dense<0.000000e+00> : vector<8x32xf32>
    %42 = tpu.matmul %40, %41, %cst_20 {dimension_numbers = #tpu.dot_dimension_numbers<[1], [0], [0], [1], [0, 0, 1, 1], [], []>} : vector<8x64xbf16>, vector<64x32xbf16>, vector<8x32xf32> -> vector<8x32xf32>
    %c0_21 = arith.constant 0 : index
    %c0_22 = arith.constant 0 : index
    %43 = vector.load %arg8[%c0_21, %c0_22] : memref<1x32xf32, #tpu.memory_space<vmem>>, vector<1x32xf32>
    %44 = vector.broadcast %43 : vector<1x32xf32> to vector<8x32xf32>
    %45 = arith.addf %42, %44 : vector<8x32xf32>
    %cst_23 = arith.constant 5.000000e-01 : f32
    %46 = vector.broadcast %cst_23 : f32 to vector<8x32xf32>
    %47 = arith.mulf %46, %45 : vector<8x32xf32>
    %48 = arith.addf %1, %47 : vector<8x32xf32>
    %c0_24 = arith.constant 0 : index
    %c0_25 = arith.constant 0 : index
    %49 = vector.load %arg9[%c0_24, %c0_25] : memref<1x32xf32, #tpu.memory_space<vmem>>, vector<1x32xf32>
    %c0_26 = arith.constant 0 : index
    %c0_27 = arith.constant 0 : index
    %50 = vector.load %arg10[%c0_26, %c0_27] : memref<1x32xf32, #tpu.memory_space<vmem>>, vector<1x32xf32>
    %cst_28 = arith.constant dense<0.000000e+00> : vector<8xf32>
    %51 = vector.multi_reduction <add>, %48, %cst_28 [1] : vector<8x32xf32> to vector<8xf32>
    %52 = vector.shape_cast %51 : vector<8xf32> to vector<8x1xf32>
    %cst_29 = arith.constant 3.200000e+01 : f32
    %53 = vector.broadcast %cst_29 : f32 to vector<8x1xf32>
    %54 = arith.divf %52, %53 : vector<8x1xf32>
    %55 = vector.broadcast %54 : vector<8x1xf32> to vector<8x32xf32>
    %56 = arith.subf %48, %55 : vector<8x32xf32>
    %57 = arith.mulf %56, %56 : vector<8x32xf32>
    %cst_30 = arith.constant dense<0.000000e+00> : vector<8xf32>
    %58 = vector.multi_reduction <add>, %57, %cst_30 [1] : vector<8x32xf32> to vector<8xf32>
    %59 = vector.shape_cast %58 : vector<8xf32> to vector<8x1xf32>
    %cst_31 = arith.constant 3.200000e+01 : f32
    %60 = vector.broadcast %cst_31 : f32 to vector<8x1xf32>
    %61 = arith.divf %59, %60 : vector<8x1xf32>
    %62 = vector.broadcast %54 : vector<8x1xf32> to vector<8x32xf32>
    %63 = arith.subf %48, %62 : vector<8x32xf32>
    %cst_32 = arith.constant 9.99999974E-6 : f32
    %64 = vector.broadcast %cst_32 : f32 to vector<8x1xf32>
    %65 = arith.addf %61, %64 : vector<8x1xf32>
    %66 = math.rsqrt %65 : vector<8x1xf32>
    %67 = vector.broadcast %66 : vector<8x1xf32> to vector<8x32xf32>
    %68 = arith.mulf %63, %67 : vector<8x32xf32>
    %69 = vector.broadcast %49 : vector<1x32xf32> to vector<8x32xf32>
    %70 = arith.mulf %68, %69 : vector<8x32xf32>
    %71 = vector.broadcast %50 : vector<1x32xf32> to vector<8x32xf32>
    %72 = arith.addf %70, %71 : vector<8x32xf32>
    %73 = arith.truncf %72 : vector<8x32xf32> to vector<8x32xbf16>
    %c0_33 = arith.constant 0 : index
    %c0_34 = arith.constant 0 : index
    %74 = vector.load %arg11[%c0_33, %c0_34] : memref<32x96xbf16, #tpu.memory_space<vmem>>, vector<32x96xbf16>
    %cst_35 = arith.constant dense<0.000000e+00> : vector<8x96xf32>
    %75 = tpu.matmul %73, %74, %cst_35 {dimension_numbers = #tpu.dot_dimension_numbers<[1], [0], [0], [1], [0, 0, 1, 1], [], []>} : vector<8x32xbf16>, vector<32x96xbf16>, vector<8x96xf32> -> vector<8x96xf32>
    %76 = vector.extract_strided_slice %75 {offsets = [0, 0], sizes = [8, 32], strides = [1, 1]} : vector<8x96xf32> to vector<8x32xf32>
    %77 = vector.extract_strided_slice %75 {offsets = [0, 32], sizes = [8, 32], strides = [1, 1]} : vector<8x96xf32> to vector<8x32xf32>
    %78 = vector.extract_strided_slice %75 {offsets = [0, 64], sizes = [8, 32], strides = [1, 1]} : vector<8x96xf32> to vector<8x32xf32>
    %c0_36 = arith.constant 0 : index
    %c0_37 = arith.constant 0 : index
    %79 = vector.load %arg12[%c0_36, %c0_37] : memref<1x32xf32, #tpu.memory_space<vmem>>, vector<1x32xf32>
    %80 = vector.broadcast %79 : vector<1x32xf32> to vector<8x32xf32>
    %81 = arith.addf %76, %80 : vector<8x32xf32>
    %c0_38 = arith.constant 0 : index
    %c0_39 = arith.constant 0 : index
    %82 = vector.load %arg13[%c0_38, %c0_39] : memref<1x32xf32, #tpu.memory_space<vmem>>, vector<1x32xf32>
    %83 = vector.broadcast %82 : vector<1x32xf32> to vector<8x32xf32>
    %84 = arith.addf %76, %83 : vector<8x32xf32>
    %85 = vector.extract_strided_slice %81 {offsets = [0, 0], sizes = [8, 8], strides = [1, 1]} : vector<8x32xf32> to vector<8x8xf32>
    %86 = arith.truncf %85 : vector<8x8xf32> to vector<8x8xbf16>
    %c0_40 = arith.constant 0 : index
    %c0_41 = arith.constant 0 : index
    %c0_42 = arith.constant 0 : index
    %87 = vector.load %arg36[%c0_40, %c0_41, %c0_42] : memref<4x8x8xbf16, #tpu.memory_space<vmem>>, vector<1x8x8xbf16>
    %88 = vector.shape_cast %87 : vector<1x8x8xbf16> to vector<8x8xbf16>
    %89 = vector.shape_cast %86 : vector<8x8xbf16> to vector<1x8x8xbf16>
    tpu.vector_store %arg36[%c0_40, %c0_41, %c0_42], %89 {strides = array<i32>} : memref<4x8x8xbf16, #tpu.memory_space<vmem>>, vector<1x8x8xbf16>,
    %90 = vector.extract_strided_slice %84 {offsets = [0, 0], sizes = [8, 8], strides = [1, 1]} : vector<8x32xf32> to vector<8x8xf32>
    %91 = arith.truncf %90 : vector<8x8xf32> to vector<8x8xbf16>
    %c0_43 = arith.constant 0 : index
    %c0_44 = arith.constant 0 : index
    %c0_45 = arith.constant 0 : index
    %92 = vector.load %arg37[%c0_43, %c0_44, %c0_45] : memref<4x8x8xbf16, #tpu.memory_space<vmem>>, vector<1x8x8xbf16>
    %93 = vector.shape_cast %92 : vector<1x8x8xbf16> to vector<8x8xbf16>
    %94 = vector.shape_cast %91 : vector<8x8xbf16> to vector<1x8x8xbf16>
    tpu.vector_store %arg37[%c0_43, %c0_44, %c0_45], %94 {strides = array<i32>} : memref<4x8x8xbf16, #tpu.memory_space<vmem>>, vector<1x8x8xbf16>,
    %95 = vector.extract_strided_slice %77 {offsets = [0, 0], sizes = [8, 8], strides = [1, 1]} : vector<8x32xf32> to vector<8x8xf32>
    %96 = arith.truncf %95 : vector<8x8xf32> to vector<8x8xbf16>
    %c0_46 = arith.constant 0 : index
    %c0_47 = arith.constant 0 : index
    %c0_48 = arith.constant 0 : index
    %97 = vector.load %arg38[%c0_46, %c0_47, %c0_48] : memref<4x8x8xbf16, #tpu.memory_space<vmem>>, vector<1x8x8xbf16>
    %98 = vector.shape_cast %97 : vector<1x8x8xbf16> to vector<8x8xbf16>
    %99 = vector.shape_cast %96 : vector<8x8xbf16> to vector<1x8x8xbf16>
    tpu.vector_store %arg38[%c0_46, %c0_47, %c0_48], %99 {strides = array<i32>} : memref<4x8x8xbf16, #tpu.memory_space<vmem>>, vector<1x8x8xbf16>,
    %100 = vector.extract_strided_slice %78 {offsets = [0, 0], sizes = [8, 8], strides = [1, 1]} : vector<8x32xf32> to vector<8x8xf32>
    %101 = arith.truncf %100 : vector<8x8xf32> to vector<8x8xbf16>
    %c0_49 = arith.constant 0 : index
    %c0_50 = arith.constant 0 : index
    %c0_51 = arith.constant 0 : index
    %102 = vector.load %arg39[%c0_49, %c0_50, %c0_51] : memref<4x8x8xbf16, #tpu.memory_space<vmem>>, vector<1x8x8xbf16>
    %103 = vector.shape_cast %102 : vector<1x8x8xbf16> to vector<8x8xbf16>
    %104 = vector.shape_cast %101 : vector<8x8xbf16> to vector<1x8x8xbf16>
    tpu.vector_store %arg39[%c0_49, %c0_50, %c0_51], %104 {strides = array<i32>} : memref<4x8x8xbf16, #tpu.memory_space<vmem>>, vector<1x8x8xbf16>,
    %105 = vector.extract_strided_slice %81 {offsets = [0, 8], sizes = [8, 8], strides = [1, 1]} : vector<8x32xf32> to vector<8x8xf32>
    %106 = arith.truncf %105 : vector<8x8xf32> to vector<8x8xbf16>
    %c1 = arith.constant 1 : index
    %c0_52 = arith.constant 0 : index
    %c0_53 = arith.constant 0 : index
    %107 = vector.load %arg36[%c1, %c0_52, %c0_53] : memref<4x8x8xbf16, #tpu.memory_space<vmem>>, vector<1x8x8xbf16>
    %108 = vector.shape_cast %107 : vector<1x8x8xbf16> to vector<8x8xbf16>
    %109 = vector.shape_cast %106 : vector<8x8xbf16> to vector<1x8x8xbf16>
    tpu.vector_store %arg36[%c1, %c0_52, %c0_53], %109 {strides = array<i32>} : memref<4x8x8xbf16, #tpu.memory_space<vmem>>, vector<1x8x8xbf16>,
    %110 = vector.extract_strided_slice %84 {offsets = [0, 8], sizes = [8, 8], strides = [1, 1]} : vector<8x32xf32> to vector<8x8xf32>
    %111 = arith.truncf %110 : vector<8x8xf32> to vector<8x8xbf16>
    %c1_54 = arith.constant 1 : index
    %c0_55 = arith.constant 0 : index
    %c0_56 = arith.constant 0 : index
    %112 = vector.load %arg37[%c1_54, %c0_55, %c0_56] : memref<4x8x8xbf16, #tpu.memory_space<vmem>>, vector<1x8x8xbf16>
    %113 = vector.shape_cast %112 : vector<1x8x8xbf16> to vector<8x8xbf16>
    %114 = vector.shape_cast %111 : vector<8x8xbf16> to vector<1x8x8xbf16>
    tpu.vector_store %arg37[%c1_54, %c0_55, %c0_56], %114 {strides = array<i32>} : memref<4x8x8xbf16, #tpu.memory_space<vmem>>, vector<1x8x8xbf16>,
    %115 = vector.extract_strided_slice %77 {offsets = [0, 8], sizes = [8, 8], strides = [1, 1]} : vector<8x32xf32> to vector<8x8xf32>
    %116 = arith.truncf %115 : vector<8x8xf32> to vector<8x8xbf16>
    %c1_57 = arith.constant 1 : index
    %c0_58 = arith.constant 0 : index
    %c0_59 = arith.constant 0 : index
    %117 = vector.load %arg38[%c1_57, %c0_58, %c0_59] : memref<4x8x8xbf16, #tpu.memory_space<vmem>>, vector<1x8x8xbf16>
    %118 = vector.shape_cast %117 : vector<1x8x8xbf16> to vector<8x8xbf16>
    %119 = vector.shape_cast %116 : vector<8x8xbf16> to vector<1x8x8xbf16>
    tpu.vector_store %arg38[%c1_57, %c0_58, %c0_59], %119 {strides = array<i32>} : memref<4x8x8xbf16, #tpu.memory_space<vmem>>, vector<1x8x8xbf16>,
    %120 = vector.extract_strided_slice %78 {offsets = [0, 8], sizes = [8, 8], strides = [1, 1]} : vector<8x32xf32> to vector<8x8xf32>
    %121 = arith.truncf %120 : vector<8x8xf32> to vector<8x8xbf16>
    %c1_60 = arith.constant 1 : index
    %c0_61 = arith.constant 0 : index
    %c0_62 = arith.constant 0 : index
    %122 = vector.load %arg39[%c1_60, %c0_61, %c0_62] : memref<4x8x8xbf16, #tpu.memory_space<vmem>>, vector<1x8x8xbf16>
    %123 = vector.shape_cast %122 : vector<1x8x8xbf16> to vector<8x8xbf16>
    %124 = vector.shape_cast %121 : vector<8x8xbf16> to vector<1x8x8xbf16>
    tpu.vector_store %arg39[%c1_60, %c0_61, %c0_62], %124 {strides = array<i32>} : memref<4x8x8xbf16, #tpu.memory_space<vmem>>, vector<1x8x8xbf16>,
    %125 = vector.extract_strided_slice %81 {offsets = [0, 16], sizes = [8, 8], strides = [1, 1]} : vector<8x32xf32> to vector<8x8xf32>
    %126 = arith.truncf %125 : vector<8x8xf32> to vector<8x8xbf16>
    %c2 = arith.constant 2 : index
    %c0_63 = arith.constant 0 : index
    %c0_64 = arith.constant 0 : index
    %127 = vector.load %arg36[%c2, %c0_63, %c0_64] : memref<4x8x8xbf16, #tpu.memory_space<vmem>>, vector<1x8x8xbf16>
    %128 = vector.shape_cast %127 : vector<1x8x8xbf16> to vector<8x8xbf16>
    %129 = vector.shape_cast %126 : vector<8x8xbf16> to vector<1x8x8xbf16>
    tpu.vector_store %arg36[%c2, %c0_63, %c0_64], %129 {strides = array<i32>} : memref<4x8x8xbf16, #tpu.memory_space<vmem>>, vector<1x8x8xbf16>,
    %130 = vector.extract_strided_slice %84 {offsets = [0, 16], sizes = [8, 8], strides = [1, 1]} : vector<8x32xf32> to vector<8x8xf32>
    %131 = arith.truncf %130 : vector<8x8xf32> to vector<8x8xbf16>
    %c2_65 = arith.constant 2 : index
    %c0_66 = arith.constant 0 : index
    %c0_67 = arith.constant 0 : index
    %132 = vector.load %arg37[%c2_65, %c0_66, %c0_67] : memref<4x8x8xbf16, #tpu.memory_space<vmem>>, vector<1x8x8xbf16>
    %133 = vector.shape_cast %132 : vector<1x8x8xbf16> to vector<8x8xbf16>
    %134 = vector.shape_cast %131 : vector<8x8xbf16> to vector<1x8x8xbf16>
    tpu.vector_store %arg37[%c2_65, %c0_66, %c0_67], %134 {strides = array<i32>} : memref<4x8x8xbf16, #tpu.memory_space<vmem>>, vector<1x8x8xbf16>,
    %135 = vector.extract_strided_slice %77 {offsets = [0, 16], sizes = [8, 8], strides = [1, 1]} : vector<8x32xf32> to vector<8x8xf32>
    %136 = arith.truncf %135 : vector<8x8xf32> to vector<8x8xbf16>
    %c2_68 = arith.constant 2 : index
    %c0_69 = arith.constant 0 : index
    %c0_70 = arith.constant 0 : index
    %137 = vector.load %arg38[%c2_68, %c0_69, %c0_70] : memref<4x8x8xbf16, #tpu.memory_space<vmem>>, vector<1x8x8xbf16>
    %138 = vector.shape_cast %137 : vector<1x8x8xbf16> to vector<8x8xbf16>
    %139 = vector.shape_cast %136 : vector<8x8xbf16> to vector<1x8x8xbf16>
    tpu.vector_store %arg38[%c2_68, %c0_69, %c0_70], %139 {strides = array<i32>} : memref<4x8x8xbf16, #tpu.memory_space<vmem>>, vector<1x8x8xbf16>,
    %140 = vector.extract_strided_slice %78 {offsets = [0, 16], sizes = [8, 8], strides = [1, 1]} : vector<8x32xf32> to vector<8x8xf32>
    %141 = arith.truncf %140 : vector<8x8xf32> to vector<8x8xbf16>
    %c2_71 = arith.constant 2 : index
    %c0_72 = arith.constant 0 : index
    %c0_73 = arith.constant 0 : index
    %142 = vector.load %arg39[%c2_71, %c0_72, %c0_73] : memref<4x8x8xbf16, #tpu.memory_space<vmem>>, vector<1x8x8xbf16>
    %143 = vector.shape_cast %142 : vector<1x8x8xbf16> to vector<8x8xbf16>
    %144 = vector.shape_cast %141 : vector<8x8xbf16> to vector<1x8x8xbf16>
    tpu.vector_store %arg39[%c2_71, %c0_72, %c0_73], %144 {strides = array<i32>} : memref<4x8x8xbf16, #tpu.memory_space<vmem>>, vector<1x8x8xbf16>,
    %145 = vector.extract_strided_slice %81 {offsets = [0, 24], sizes = [8, 8], strides = [1, 1]} : vector<8x32xf32> to vector<8x8xf32>
    %146 = arith.truncf %145 : vector<8x8xf32> to vector<8x8xbf16>
    %c3 = arith.constant 3 : index
    %c0_74 = arith.constant 0 : index
    %c0_75 = arith.constant 0 : index
    %147 = vector.load %arg36[%c3, %c0_74, %c0_75] : memref<4x8x8xbf16, #tpu.memory_space<vmem>>, vector<1x8x8xbf16>
    %148 = vector.shape_cast %147 : vector<1x8x8xbf16> to vector<8x8xbf16>
    %149 = vector.shape_cast %146 : vector<8x8xbf16> to vector<1x8x8xbf16>
    tpu.vector_store %arg36[%c3, %c0_74, %c0_75], %149 {strides = array<i32>} : memref<4x8x8xbf16, #tpu.memory_space<vmem>>, vector<1x8x8xbf16>,
    %150 = vector.extract_strided_slice %84 {offsets = [0, 24], sizes = [8, 8], strides = [1, 1]} : vector<8x32xf32> to vector<8x8xf32>
    %151 = arith.truncf %150 : vector<8x8xf32> to vector<8x8xbf16>
    %c3_76 = arith.constant 3 : index
    %c0_77 = arith.constant 0 : index
    %c0_78 = arith.constant 0 : index
    %152 = vector.load %arg37[%c3_76, %c0_77, %c0_78] : memref<4x8x8xbf16, #tpu.memory_space<vmem>>, vector<1x8x8xbf16>
    %153 = vector.shape_cast %152 : vector<1x8x8xbf16> to vector<8x8xbf16>
    %154 = vector.shape_cast %151 : vector<8x8xbf16> to vector<1x8x8xbf16>
    tpu.vector_store %arg37[%c3_76, %c0_77, %c0_78], %154 {strides = array<i32>} : memref<4x8x8xbf16, #tpu.memory_space<vmem>>, vector<1x8x8xbf16>,
    %155 = vector.extract_strided_slice %77 {offsets = [0, 24], sizes = [8, 8], strides = [1, 1]} : vector<8x32xf32> to vector<8x8xf32>
    %156 = arith.truncf %155 : vector<8x8xf32> to vector<8x8xbf16>
    %c3_79 = arith.constant 3 : index
    %c0_80 = arith.constant 0 : index
    %c0_81 = arith.constant 0 : index
    %157 = vector.load %arg38[%c3_79, %c0_80, %c0_81] : memref<4x8x8xbf16, #tpu.memory_space<vmem>>, vector<1x8x8xbf16>
    %158 = vector.shape_cast %157 : vector<1x8x8xbf16> to vector<8x8xbf16>
    %159 = vector.shape_cast %156 : vector<8x8xbf16> to vector<1x8x8xbf16>
    tpu.vector_store %arg38[%c3_79, %c0_80, %c0_81], %159 {strides = array<i32>} : memref<4x8x8xbf16, #tpu.memory_space<vmem>>, vector<1x8x8xbf16>,
    %160 = vector.extract_strided_slice %78 {offsets = [0, 24], sizes = [8, 8], strides = [1, 1]} : vector<8x32xf32> to vector<8x8xf32>
    %161 = arith.truncf %160 : vector<8x8xf32> to vector<8x8xbf16>
    %c3_82 = arith.constant 3 : index
    %c0_83 = arith.constant 0 : index
    %c0_84 = arith.constant 0 : index
    %162 = vector.load %arg39[%c3_82, %c0_83, %c0_84] : memref<4x8x8xbf16, #tpu.memory_space<vmem>>, vector<1x8x8xbf16>
    %163 = vector.shape_cast %162 : vector<1x8x8xbf16> to vector<8x8xbf16>
    %164 = vector.shape_cast %161 : vector<8x8xbf16> to vector<1x8x8xbf16>
    tpu.vector_store %arg39[%c3_82, %c0_83, %c0_84], %164 {strides = array<i32>} : memref<4x8x8xbf16, #tpu.memory_space<vmem>>, vector<1x8x8xbf16>,
    %c0_85 = arith.constant 0 : index
    %c0_86 = arith.constant 0 : index
    %c0_87 = arith.constant 0 : index
    %165 = vector.load %arg36[%c0_85, %c0_86, %c0_87] : memref<4x8x8xbf16, #tpu.memory_space<vmem>>, vector<4x8x8xbf16>
    %c0_88 = arith.constant 0 : index
    %c0_89 = arith.constant 0 : index
    %c0_90 = arith.constant 0 : index
    %166 = vector.load %arg38[%c0_88, %c0_89, %c0_90] : memref<4x8x8xbf16, #tpu.memory_space<vmem>>, vector<4x8x8xbf16>
    "tpu.trace_start"() <{level = 10 : i32, message = "htd,hsd->hts"}> : () -> ()
    %cst_91 = arith.constant dense<0.000000e+00> : vector<4x8x8xf32>
    %167 = tpu.matmul %165, %166, %cst_91 {dimension_numbers = #tpu.dot_dimension_numbers<[2], [2], [1], [1], [0, 0, 0, 1, 1, 1], [0], [0]>} : vector<4x8x8xbf16>, vector<4x8x8xbf16>, vector<4x8x8xf32> -> vector<4x8x8xf32>
    "tpu.trace_stop"() : () -> ()
    %c0_92 = arith.constant 0 : index
    %c0_93 = arith.constant 0 : index
    %c0_94 = arith.constant 0 : index
    %168 = vector.load %arg37[%c0_92, %c0_93, %c0_94] : memref<4x8x8xbf16, #tpu.memory_space<vmem>>, vector<4x8x8xbf16>
    %c0_95 = arith.constant 0 : index
    %c0_96 = arith.constant 0 : index
    %c0_97 = arith.constant 0 : index
    %169 = vector.load %arg2[%c0_95, %c0_96, %c0_97] : memref<4x15x8xbf16, #tpu.memory_space<vmem>>, vector<4x15x8xbf16>
    "tpu.trace_start"() <{level = 10 : i32, message = "htd,hpd->htp"}> : () -> ()
    %cst_98 = arith.constant dense<0.000000e+00> : vector<4x8x15xf32>
    %170 = tpu.matmul %168, %169, %cst_98 {dimension_numbers = #tpu.dot_dimension_numbers<[2], [2], [1], [1], [0, 0, 0, 1, 1, 1], [0], [0]>} : vector<4x8x8xbf16>, vector<4x15x8xbf16>, vector<4x8x15xf32> -> vector<4x8x15xf32>
    "tpu.trace_stop"() : () -> ()
    %171 = vector.extract_strided_slice %170 {offsets = [0, 0, 7], sizes = [4, 1, 8], strides = [1, 1, 1]} : vector<4x8x15xf32> to vector<4x1x8xf32>
    %172 = vector.extract_strided_slice %170 {offsets = [0, 1, 6], sizes = [4, 1, 8], strides = [1, 1, 1]} : vector<4x8x15xf32> to vector<4x1x8xf32>
    %173 = vector.extract_strided_slice %170 {offsets = [0, 2, 5], sizes = [4, 1, 8], strides = [1, 1, 1]} : vector<4x8x15xf32> to vector<4x1x8xf32>
    %174 = vector.extract_strided_slice %170 {offsets = [0, 3, 4], sizes = [4, 1, 8], strides = [1, 1, 1]} : vector<4x8x15xf32> to vector<4x1x8xf32>
    %175 = vector.extract_strided_slice %170 {offsets = [0, 4, 3], sizes = [4, 1, 8], strides = [1, 1, 1]} : vector<4x8x15xf32> to vector<4x1x8xf32>
    %176 = vector.extract_strided_slice %170 {offsets = [0, 5, 2], sizes = [4, 1, 8], strides = [1, 1, 1]} : vector<4x8x15xf32> to vector<4x1x8xf32>
    %177 = vector.extract_strided_slice %170 {offsets = [0, 6, 1], sizes = [4, 1, 8], strides = [1, 1, 1]} : vector<4x8x15xf32> to vector<4x1x8xf32>
    %178 = vector.extract_strided_slice %170 {offsets = [0, 7, 0], sizes = [4, 1, 8], strides = [1, 1, 1]} : vector<4x8x15xf32> to vector<4x1x8xf32>
    %179 = tpu.concatenate %171, %172, %173, %174, %175, %176, %177, %178 in 1 : vector<4x1x8xf32>, vector<4x1x8xf32>, vector<4x1x8xf32>, vector<4x1x8xf32>, vector<4x1x8xf32>, vector<4x1x8xf32>, vector<4x1x8xf32>, vector<4x1x8xf32> -> vector<4x8x8xf32>
    %180 = arith.addf %167, %179 : vector<4x8x8xf32>
    %cst_99 = arith.constant 0.176776692 : f32
    %181 = vector.broadcast %cst_99 : f32 to vector<4x8x8xf32>
    %182 = arith.mulf %180, %181 : vector<4x8x8xf32>
    %cst_100 = arith.constant dense<0xFF800000> : vector<4x8xf32>
    %183 = vector.multi_reduction <maximumf>, %182, %cst_100 [2] : vector<4x8x8xf32> to vector<4x8xf32>
    %184 = vector.shape_cast %183 : vector<4x8xf32> to vector<4x8x1xf32>
    %185 = vector.broadcast %184 : vector<4x8x1xf32> to vector<4x8x8xf32>
    %186 = arith.subf %182, %185 : vector<4x8x8xf32>
    %187 = math.exp %186 : vector<4x8x8xf32>
    %cst_101 = arith.constant dense<0.000000e+00> : vector<4x8xf32>
    %188 = vector.multi_reduction <add>, %187, %cst_101 [2] : vector<4x8x8xf32> to vector<4x8xf32>
    %189 = vector.shape_cast %188 : vector<4x8xf32> to vector<4x8x1xf32>
    %190 = tpu.reciprocal %189 : vector<4x8x1xf32> -> vector<4x8x1xf32>
    %191 = vector.broadcast %190 : vector<4x8x1xf32> to vector<4x8x8xf32>
    %192 = arith.mulf %187, %191 : vector<4x8x8xf32>
    %c0_102 = arith.constant 0 : index
    %c0_103 = arith.constant 0 : index
    %c0_104 = arith.constant 0 : index
    %c0_105 = arith.constant 0 : index
    %193 = vector.load %arg35[%c0_102, %c0_103, %c0_104, %c0_105] : memref<1x4x8x8xf32, #tpu.memory_space<vmem>>, vector<1x4x8x8xf32>
    %194 = vector.shape_cast %193 : vector<1x4x8x8xf32> to vector<4x8x8xf32>
    %195 = vector.shape_cast %192 : vector<4x8x8xf32> to vector<1x4x8x8xf32>
    tpu.vector_store %arg35[%c0_102, %c0_103, %c0_104, %c0_105], %195 {strides = array<i32>} : memref<1x4x8x8xf32, #tpu.memory_space<vmem>>, vector<1x4x8x8xf32>,
    %196 = arith.truncf %192 : vector<4x8x8xf32> to vector<4x8x8xbf16>
    %c0_106 = arith.constant 0 : index
    %c0_107 = arith.constant 0 : index
    %c0_108 = arith.constant 0 : index
    %197 = vector.load %arg39[%c0_106, %c0_107, %c0_108] : memref<4x8x8xbf16, #tpu.memory_space<vmem>>, vector<4x8x8xbf16>
    "tpu.trace_start"() <{level = 10 : i32, message = "hts,hsd->htd"}> : () -> ()
    %cst_109 = arith.constant dense<0.000000e+00> : vector<4x8x8xf32>
    %198 = tpu.matmul %196, %197, %cst_109 {dimension_numbers = #tpu.dot_dimension_numbers<[2], [1], [1], [2], [0, 0, 0, 1, 1, 2], [0], [0]>} : vector<4x8x8xbf16>, vector<4x8x8xbf16>, vector<4x8x8xf32> -> vector<4x8x8xf32>
    "tpu.trace_stop"() : () -> ()
    %199 = vector.extract_strided_slice %198 {offsets = [0, 0, 0], sizes = [1, 8, 8], strides = [1, 1, 1]} : vector<4x8x8xf32> to vector<1x8x8xf32>
    %200 = vector.shape_cast %199 : vector<1x8x8xf32> to vector<8x8xf32>
    %201 = arith.truncf %200 : vector<8x8xf32> to vector<8x8xbf16>
    %c0_110 = arith.constant 0 : index
    %c0_111 = arith.constant 0 : index
    %202 = vector.load %arg40[%c0_110, %c0_111] : memref<8x32xbf16, #tpu.memory_space<vmem>>, vector<8x8xbf16>
    tpu.vector_store %arg40[%c0_110, %c0_111], %201 {strides = array<i32>} : memref<8x32xbf16, #tpu.memory_space<vmem>>, vector<8x8xbf16>,
    %203 = vector.extract_strided_slice %198 {offsets = [1, 0, 0], sizes = [1, 8, 8], strides = [1, 1, 1]} : vector<4x8x8xf32> to vector<1x8x8xf32>
    %204 = vector.shape_cast %203 : vector<1x8x8xf32> to vector<8x8xf32>
    %205 = arith.truncf %204 : vector<8x8xf32> to vector<8x8xbf16>
    %c0_112 = arith.constant 0 : index
    %c8 = arith.constant 8 : index
    %206 = vector.load %arg40[%c0_112, %c8] : memref<8x32xbf16, #tpu.memory_space<vmem>>, vector<8x8xbf16>
    tpu.vector_store %arg40[%c0_112, %c8], %205 {strides = array<i32>} : memref<8x32xbf16, #tpu.memory_space<vmem>>, vector<8x8xbf16>,
    %207 = vector.extract_strided_slice %198 {offsets = [2, 0, 0], sizes = [1, 8, 8], strides = [1, 1, 1]} : vector<4x8x8xf32> to vector<1x8x8xf32>
    %208 = vector.shape_cast %207 : vector<1x8x8xf32> to vector<8x8xf32>
    %209 = arith.truncf %208 : vector<8x8xf32> to vector<8x8xbf16>
    %c0_113 = arith.constant 0 : index
    %c16 = arith.constant 16 : index
    %210 = vector.load %arg40[%c0_113, %c16] : memref<8x32xbf16, #tpu.memory_space<vmem>>, vector<8x8xbf16>
    tpu.vector_store %arg40[%c0_113, %c16], %209 {strides = array<i32>} : memref<8x32xbf16, #tpu.memory_space<vmem>>, vector<8x8xbf16>,
    %211 = vector.extract_strided_slice %198 {offsets = [3, 0, 0], sizes = [1, 8, 8], strides = [1, 1, 1]} : vector<4x8x8xf32> to vector<1x8x8xf32>
    %212 = vector.shape_cast %211 : vector<1x8x8xf32> to vector<8x8xf32>
    %213 = arith.truncf %212 : vector<8x8xf32> to vector<8x8xbf16>
    %c0_114 = arith.constant 0 : index
    %c24 = arith.constant 24 : index
    %214 = vector.load %arg40[%c0_114, %c24] : memref<8x32xbf16, #tpu.memory_space<vmem>>, vector<8x8xbf16>
    tpu.vector_store %arg40[%c0_114, %c24], %213 {strides = array<i32>} : memref<8x32xbf16, #tpu.memory_space<vmem>>, vector<8x8xbf16>,
    %c0_115 = arith.constant 0 : index
    %c0_116 = arith.constant 0 : index
    %215 = vector.load %arg40[%c0_115, %c0_116] : memref<8x32xbf16, #tpu.memory_space<vmem>>, vector<8x32xbf16>
    %c0_117 = arith.constant 0 : index
    %c0_118 = arith.constant 0 : index
    %216 = vector.load %arg14[%c0_117, %c0_118] : memref<32x32xbf16, #tpu.memory_space<vmem>>, vector<32x32xbf16>
    %cst_119 = arith.constant dense<0.000000e+00> : vector<8x32xf32>
    %217 = tpu.matmul %215, %216, %cst_119 {dimension_numbers = #tpu.dot_dimension_numbers<[1], [0], [0], [1], [0, 0, 1, 1], [], []>} : vector<8x32xbf16>, vector<32x32xbf16>, vector<8x32xf32> -> vector<8x32xf32>
    %218 = arith.addf %48, %217 : vector<8x32xf32>
    %c0_120 = arith.constant 0 : index
    %c0_121 = arith.constant 0 : index
    %219 = vector.load %arg15[%c0_120, %c0_121] : memref<1x32xf32, #tpu.memory_space<vmem>>, vector<1x32xf32>
    %220 = vector.broadcast %219 : vector<1x32xf32> to vector<8x32xf32>
    %221 = arith.addf %218, %220 : vector<8x32xf32>
    %c0_122 = arith.constant 0 : index
    %c0_123 = arith.constant 0 : index
    %222 = vector.load %arg16[%c0_122, %c0_123] : memref<1x32xf32, #tpu.memory_space<vmem>>, vector<1x32xf32>
    %c0_124 = arith.constant 0 : index
    %c0_125 = arith.constant 0 : index
    %223 = vector.load %arg17[%c0_124, %c0_125] : memref<1x32xf32, #tpu.memory_space<vmem>>, vector<1x32xf32>
    %cst_126 = arith.constant dense<0.000000e+00> : vector<8xf32>
    %224 = vector.multi_reduction <add>, %221, %cst_126 [1] : vector<8x32xf32> to vector<8xf32>
    %225 = vector.shape_cast %224 : vector<8xf32> to vector<8x1xf32>
    %cst_127 = arith.constant 3.200000e+01 : f32
    %226 = vector.broadcast %cst_127 : f32 to vector<8x1xf32>
    %227 = arith.divf %225, %226 : vector<8x1xf32>
    %228 = vector.broadcast %227 : vector<8x1xf32> to vector<8x32xf32>
    %229 = arith.subf %221, %228 : vector<8x32xf32>
    %230 = arith.mulf %229, %229 : vector<8x32xf32>
    %cst_128 = arith.constant dense<0.000000e+00> : vector<8xf32>
    %231 = vector.multi_reduction <add>, %230, %cst_128 [1] : vector<8x32xf32> to vector<8xf32>
    %232 = vector.shape_cast %231 : vector<8xf32> to vector<8x1xf32>
    %cst_129 = arith.constant 3.200000e+01 : f32
    %233 = vector.broadcast %cst_129 : f32 to vector<8x1xf32>
    %234 = arith.divf %232, %233 : vector<8x1xf32>
    %235 = vector.broadcast %227 : vector<8x1xf32> to vector<8x32xf32>
    %236 = arith.subf %221, %235 : vector<8x32xf32>
    %cst_130 = arith.constant 9.99999974E-6 : f32
    %237 = vector.broadcast %cst_130 : f32 to vector<8x1xf32>
    %238 = arith.addf %234, %237 : vector<8x1xf32>
    %239 = math.rsqrt %238 : vector<8x1xf32>
    %240 = vector.broadcast %239 : vector<8x1xf32> to vector<8x32xf32>
    %241 = arith.mulf %236, %240 : vector<8x32xf32>
    %242 = vector.broadcast %222 : vector<1x32xf32> to vector<8x32xf32>
    %243 = arith.mulf %241, %242 : vector<8x32xf32>
    %244 = vector.broadcast %223 : vector<1x32xf32> to vector<8x32xf32>
    %245 = arith.addf %243, %244 : vector<8x32xf32>
    %246 = arith.truncf %245 : vector<8x32xf32> to vector<8x32xbf16>
    %c0_131 = arith.constant 0 : index
    %c0_132 = arith.constant 0 : index
    %247 = vector.load %arg18[%c0_131, %c0_132] : memref<32x64xbf16, #tpu.memory_space<vmem>>, vector<32x64xbf16>
    %cst_133 = arith.constant dense<0.000000e+00> : vector<8x64xf32>
    %248 = tpu.matmul %246, %247, %cst_133 {dimension_numbers = #tpu.dot_dimension_numbers<[1], [0], [0], [1], [0, 0, 1, 1], [], []>} : vector<8x32xbf16>, vector<32x64xbf16>, vector<8x64xf32> -> vector<8x64xf32>
    %c0_134 = arith.constant 0 : index
    %c0_135 = arith.constant 0 : index
    %249 = vector.load %arg19[%c0_134, %c0_135] : memref<1x64xf32, #tpu.memory_space<vmem>>, vector<1x64xf32>
    %250 = vector.broadcast %249 : vector<1x64xf32> to vector<8x64xf32>
    %251 = arith.addf %248, %250 : vector<8x64xf32>
    %252 = vector.extract_strided_slice %251 {offsets = [0, 0], sizes = [8, 32], strides = [1, 1]} : vector<8x64xf32> to vector<8x32xf32>
    %253 = vector.extract_strided_slice %251 {offsets = [0, 32], sizes = [8, 32], strides = [1, 1]} : vector<8x64xf32> to vector<8x32xf32>
    %cst_136 = arith.constant 5.000000e-01 : f32
    %254 = vector.broadcast %cst_136 : f32 to vector<8x32xf32>
    %255 = arith.mulf %254, %253 : vector<8x32xf32>
    %256 = math.tanh %255 : vector<8x32xf32>
    %cst_137 = arith.constant 1.000000e+00 : f32
    %257 = vector.broadcast %cst_137 : f32 to vector<8x32xf32>
    %258 = arith.addf %256, %257 : vector<8x32xf32>
    %cst_138 = arith.constant 5.000000e-01 : f32
    %259 = vector.broadcast %cst_138 : f32 to vector<8x32xf32>
    %260 = arith.mulf %259, %258 : vector<8x32xf32>
    %261 = arith.mulf %252, %260 : vector<8x32xf32>
    %262 = tpu.iota {dimensions = array<i32: 0>} : vector<8x32xi32>
    %c3_139 = arith.constant 3 : index
    %c0_140 = arith.constant 0 : index
    %263 = vector.load %arg20[%c3_139, %c0_140] : memref<7x32xf32, #tpu.memory_space<vmem>>, vector<1x32xf32>
    %264 = vector.broadcast %263 : vector<1x32xf32> to vector<8x32xf32>
    %265 = arith.mulf %261, %264 : vector<8x32xf32>
    %c3_i32 = arith.constant 3 : i32
    %266 = tpu.dynamic_rotate %261 by %c3_i32 dim 0 : vector<8x32xf32>, i32 -> vector<8x32xf32>
    %c-3_i32 = arith.constant -3 : i32
    %267 = vector.broadcast %c-3_i32 : i32 to vector<8x32xi32>
    %268 = arith.addi %262, %267 : vector<8x32xi32>
    %c0_i32 = arith.constant 0 : i32
    %269 = vector.broadcast %c0_i32 : i32 to vector<8x32xi32>
    %270 = arith.cmpi sge, %268, %269 : vector<8x32xi32>
    %c-3_i32_141 = arith.constant -3 : i32
    %271 = vector.broadcast %c-3_i32_141 : i32 to vector<8x32xi32>
    %272 = arith.addi %262, %271 : vector<8x32xi32>
    %c8_i32 = arith.constant 8 : i32
    %273 = vector.broadcast %c8_i32 : i32 to vector<8x32xi32>
    %274 = arith.cmpi slt, %272, %273 : vector<8x32xi32>
    %275 = arith.andi %270, %274 : vector<8x32xi1>
    %cst_142 = arith.constant 0.000000e+00 : f32
    %276 = vector.broadcast %cst_142 : f32 to vector<8x32xf32>
    %277 = arith.select %275, %266, %276 : vector<8x32xi1>, vector<8x32xf32>
    %c0_143 = arith.constant 0 : index
    %c0_144 = arith.constant 0 : index
    %278 = vector.load %arg20[%c0_143, %c0_144] : memref<7x32xf32, #tpu.memory_space<vmem>>, vector<1x32xf32>
    %279 = vector.broadcast %278 : vector<1x32xf32> to vector<8x32xf32>
    %280 = arith.mulf %277, %279 : vector<8x32xf32>
    %281 = arith.addf %265, %280 : vector<8x32xf32>
    %c2_i32 = arith.constant 2 : i32
    %282 = tpu.dynamic_rotate %261 by %c2_i32 dim 0 : vector<8x32xf32>, i32 -> vector<8x32xf32>
    %c-2_i32 = arith.constant -2 : i32
    %283 = vector.broadcast %c-2_i32 : i32 to vector<8x32xi32>
    %284 = arith.addi %262, %283 : vector<8x32xi32>
    %c0_i32_145 = arith.constant 0 : i32
    %285 = vector.broadcast %c0_i32_145 : i32 to vector<8x32xi32>
    %286 = arith.cmpi sge, %284, %285 : vector<8x32xi32>
    %c-2_i32_146 = arith.constant -2 : i32
    %287 = vector.broadcast %c-2_i32_146 : i32 to vector<8x32xi32>
    %288 = arith.addi %262, %287 : vector<8x32xi32>
    %c8_i32_147 = arith.constant 8 : i32
    %289 = vector.broadcast %c8_i32_147 : i32 to vector<8x32xi32>
    %290 = arith.cmpi slt, %288, %289 : vector<8x32xi32>
    %291 = arith.andi %286, %290 : vector<8x32xi1>
    %cst_148 = arith.constant 0.000000e+00 : f32
    %292 = vector.broadcast %cst_148 : f32 to vector<8x32xf32>
    %293 = arith.select %291, %282, %292 : vector<8x32xi1>, vector<8x32xf32>
    %c1_149 = arith.constant 1 : index
    %c0_150 = arith.constant 0 : index
    %294 = vector.load %arg20[%c1_149, %c0_150] : memref<7x32xf32, #tpu.memory_space<vmem>>, vector<1x32xf32>
    %295 = vector.broadcast %294 : vector<1x32xf32> to vector<8x32xf32>
    %296 = arith.mulf %293, %295 : vector<8x32xf32>
    %297 = arith.addf %281, %296 : vector<8x32xf32>
    %c1_i32 = arith.constant 1 : i32
    %298 = tpu.dynamic_rotate %261 by %c1_i32 dim 0 : vector<8x32xf32>, i32 -> vector<8x32xf32>
    %c-1_i32 = arith.constant -1 : i32
    %299 = vector.broadcast %c-1_i32 : i32 to vector<8x32xi32>
    %300 = arith.addi %262, %299 : vector<8x32xi32>
    %c0_i32_151 = arith.constant 0 : i32
    %301 = vector.broadcast %c0_i32_151 : i32 to vector<8x32xi32>
    %302 = arith.cmpi sge, %300, %301 : vector<8x32xi32>
    %c-1_i32_152 = arith.constant -1 : i32
    %303 = vector.broadcast %c-1_i32_152 : i32 to vector<8x32xi32>
    %304 = arith.addi %262, %303 : vector<8x32xi32>
    %c8_i32_153 = arith.constant 8 : i32
    %305 = vector.broadcast %c8_i32_153 : i32 to vector<8x32xi32>
    %306 = arith.cmpi slt, %304, %305 : vector<8x32xi32>
    %307 = arith.andi %302, %306 : vector<8x32xi1>
    %cst_154 = arith.constant 0.000000e+00 : f32
    %308 = vector.broadcast %cst_154 : f32 to vector<8x32xf32>
    %309 = arith.select %307, %298, %308 : vector<8x32xi1>, vector<8x32xf32>
    %c2_155 = arith.constant 2 : index
    %c0_156 = arith.constant 0 : index
    %310 = vector.load %arg20[%c2_155, %c0_156] : memref<7x32xf32, #tpu.memory_space<vmem>>, vector<1x32xf32>
    %311 = vector.broadcast %310 : vector<1x32xf32> to vector<8x32xf32>
    %312 = arith.mulf %309, %311 : vector<8x32xf32>
    %313 = arith.addf %297, %312 : vector<8x32xf32>
    %c7_i32 = arith.constant 7 : i32
    %314 = tpu.dynamic_rotate %261 by %c7_i32 dim 0 : vector<8x32xf32>, i32 -> vector<8x32xf32>
    %c1_i32_157 = arith.constant 1 : i32
    %315 = vector.broadcast %c1_i32_157 : i32 to vector<8x32xi32>
    %316 = arith.addi %262, %315 : vector<8x32xi32>
    %c0_i32_158 = arith.constant 0 : i32
    %317 = vector.broadcast %c0_i32_158 : i32 to vector<8x32xi32>
    %318 = arith.cmpi sge, %316, %317 : vector<8x32xi32>
    %c1_i32_159 = arith.constant 1 : i32
    %319 = vector.broadcast %c1_i32_159 : i32 to vector<8x32xi32>
    %320 = arith.addi %262, %319 : vector<8x32xi32>
    %c8_i32_160 = arith.constant 8 : i32
    %321 = vector.broadcast %c8_i32_160 : i32 to vector<8x32xi32>
    %322 = arith.cmpi slt, %320, %321 : vector<8x32xi32>
    %323 = arith.andi %318, %322 : vector<8x32xi1>
    %cst_161 = arith.constant 0.000000e+00 : f32
    %324 = vector.broadcast %cst_161 : f32 to vector<8x32xf32>
    %325 = arith.select %323, %314, %324 : vector<8x32xi1>, vector<8x32xf32>
    %c4 = arith.constant 4 : index
    %c0_162 = arith.constant 0 : index
    %326 = vector.load %arg20[%c4, %c0_162] : memref<7x32xf32, #tpu.memory_space<vmem>>, vector<1x32xf32>
    %327 = vector.broadcast %326 : vector<1x32xf32> to vector<8x32xf32>
    %328 = arith.mulf %325, %327 : vector<8x32xf32>
    %329 = arith.addf %313, %328 : vector<8x32xf32>
    %c6_i32 = arith.constant 6 : i32
    %330 = tpu.dynamic_rotate %261 by %c6_i32 dim 0 : vector<8x32xf32>, i32 -> vector<8x32xf32>
    %c2_i32_163 = arith.constant 2 : i32
    %331 = vector.broadcast %c2_i32_163 : i32 to vector<8x32xi32>
    %332 = arith.addi %262, %331 : vector<8x32xi32>
    %c0_i32_164 = arith.constant 0 : i32
    %333 = vector.broadcast %c0_i32_164 : i32 to vector<8x32xi32>
    %334 = arith.cmpi sge, %332, %333 : vector<8x32xi32>
    %c2_i32_165 = arith.constant 2 : i32
    %335 = vector.broadcast %c2_i32_165 : i32 to vector<8x32xi32>
    %336 = arith.addi %262, %335 : vector<8x32xi32>
    %c8_i32_166 = arith.constant 8 : i32
    %337 = vector.broadcast %c8_i32_166 : i32 to vector<8x32xi32>
    %338 = arith.cmpi slt, %336, %337 : vector<8x32xi32>
    %339 = arith.andi %334, %338 : vector<8x32xi1>
    %cst_167 = arith.constant 0.000000e+00 : f32
    %340 = vector.broadcast %cst_167 : f32 to vector<8x32xf32>
    %341 = arith.select %339, %330, %340 : vector<8x32xi1>, vector<8x32xf32>
    %c5 = arith.constant 5 : index
    %c0_168 = arith.constant 0 : index
    %342 = vector.load %arg20[%c5, %c0_168] : memref<7x32xf32, #tpu.memory_space<vmem>>, vector<1x32xf32>
    %343 = vector.broadcast %342 : vector<1x32xf32> to vector<8x32xf32>
    %344 = arith.mulf %341, %343 : vector<8x32xf32>
    %345 = arith.addf %329, %344 : vector<8x32xf32>
    %c5_i32 = arith.constant 5 : i32
    %346 = tpu.dynamic_rotate %261 by %c5_i32 dim 0 : vector<8x32xf32>, i32 -> vector<8x32xf32>
    %c3_i32_169 = arith.constant 3 : i32
    %347 = vector.broadcast %c3_i32_169 : i32 to vector<8x32xi32>
    %348 = arith.addi %262, %347 : vector<8x32xi32>
    %c0_i32_170 = arith.constant 0 : i32
    %349 = vector.broadcast %c0_i32_170 : i32 to vector<8x32xi32>
    %350 = arith.cmpi sge, %348, %349 : vector<8x32xi32>
    %c3_i32_171 = arith.constant 3 : i32
    %351 = vector.broadcast %c3_i32_171 : i32 to vector<8x32xi32>
    %352 = arith.addi %262, %351 : vector<8x32xi32>
    %c8_i32_172 = arith.constant 8 : i32
    %353 = vector.broadcast %c8_i32_172 : i32 to vector<8x32xi32>
    %354 = arith.cmpi slt, %352, %353 : vector<8x32xi32>
    %355 = arith.andi %350, %354 : vector<8x32xi1>
    %cst_173 = arith.constant 0.000000e+00 : f32
    %356 = vector.broadcast %cst_173 : f32 to vector<8x32xf32>
    %357 = arith.select %355, %346, %356 : vector<8x32xi1>, vector<8x32xf32>
    %c6 = arith.constant 6 : index
    %c0_174 = arith.constant 0 : index
    %358 = vector.load %arg20[%c6, %c0_174] : memref<7x32xf32, #tpu.memory_space<vmem>>, vector<1x32xf32>
    %359 = vector.broadcast %358 : vector<1x32xf32> to vector<8x32xf32>
    %360 = arith.mulf %357, %359 : vector<8x32xf32>
    %361 = arith.addf %345, %360 : vector<8x32xf32>
    %c0_175 = arith.constant 0 : index
    %c0_176 = arith.constant 0 : index
    %362 = vector.load %arg21[%c0_175, %c0_176] : memref<1x32xf32, #tpu.memory_space<vmem>>, vector<1x32xf32>
    %363 = vector.broadcast %362 : vector<1x32xf32> to vector<8x32xf32>
    %364 = arith.addf %361, %363 : vector<8x32xf32>
    %c0_177 = arith.constant 0 : index
    %c0_178 = arith.constant 0 : index
    %365 = vector.load %arg22[%c0_177, %c0_178] : memref<1x32xf32, #tpu.memory_space<vmem>>, vector<1x32xf32>
    %c0_179 = arith.constant 0 : index
    %c0_180 = arith.constant 0 : index
    %366 = vector.load %arg23[%c0_179, %c0_180] : memref<1x32xf32, #tpu.memory_space<vmem>>, vector<1x32xf32>
    %cst_181 = arith.constant dense<0.000000e+00> : vector<8xf32>
    %367 = vector.multi_reduction <add>, %364, %cst_181 [1] : vector<8x32xf32> to vector<8xf32>
    %368 = vector.shape_cast %367 : vector<8xf32> to vector<8x1xf32>
    %cst_182 = arith.constant 3.200000e+01 : f32
    %369 = vector.broadcast %cst_182 : f32 to vector<8x1xf32>
    %370 = arith.divf %368, %369 : vector<8x1xf32>
    %371 = vector.broadcast %370 : vector<8x1xf32> to vector<8x32xf32>
    %372 = arith.subf %364, %371 : vector<8x32xf32>
    %373 = arith.mulf %372, %372 : vector<8x32xf32>
    %cst_183 = arith.constant dense<0.000000e+00> : vector<8xf32>
    %374 = vector.multi_reduction <add>, %373, %cst_183 [1] : vector<8x32xf32> to vector<8xf32>
    %375 = vector.shape_cast %374 : vector<8xf32> to vector<8x1xf32>
    %cst_184 = arith.constant 3.200000e+01 : f32
    %376 = vector.broadcast %cst_184 : f32 to vector<8x1xf32>
    %377 = arith.divf %375, %376 : vector<8x1xf32>
    %378 = vector.broadcast %370 : vector<8x1xf32> to vector<8x32xf32>
    %379 = arith.subf %364, %378 : vector<8x32xf32>
    %cst_185 = arith.constant 9.99999974E-6 : f32
    %380 = vector.broadcast %cst_185 : f32 to vector<8x1xf32>
    %381 = arith.addf %377, %380 : vector<8x1xf32>
    %382 = math.rsqrt %381 : vector<8x1xf32>
    %383 = vector.broadcast %382 : vector<8x1xf32> to vector<8x32xf32>
    %384 = arith.mulf %379, %383 : vector<8x32xf32>
    %385 = vector.broadcast %365 : vector<1x32xf32> to vector<8x32xf32>
    %386 = arith.mulf %384, %385 : vector<8x32xf32>
    %387 = vector.broadcast %366 : vector<1x32xf32> to vector<8x32xf32>
    %388 = arith.addf %386, %387 : vector<8x32xf32>
    %cst_186 = arith.constant 5.000000e-01 : f32
    %389 = vector.broadcast %cst_186 : f32 to vector<8x32xf32>
    %390 = arith.mulf %389, %388 : vector<8x32xf32>
    %391 = math.tanh %390 : vector<8x32xf32>
    %cst_187 = arith.constant 1.000000e+00 : f32
    %392 = vector.broadcast %cst_187 : f32 to vector<8x32xf32>
    %393 = arith.addf %391, %392 : vector<8x32xf32>
    %cst_188 = arith.constant 5.000000e-01 : f32
    %394 = vector.broadcast %cst_188 : f32 to vector<8x32xf32>
    %395 = arith.mulf %394, %393 : vector<8x32xf32>
    %396 = arith.mulf %388, %395 : vector<8x32xf32>
    %397 = arith.truncf %396 : vector<8x32xf32> to vector<8x32xbf16>
    %c0_189 = arith.constant 0 : index
    %c0_190 = arith.constant 0 : index
    %398 = vector.load %arg24[%c0_189, %c0_190] : memref<32x32xbf16, #tpu.memory_space<vmem>>, vector<32x32xbf16>
    %cst_191 = arith.constant dense<0.000000e+00> : vector<8x32xf32>
    %399 = tpu.matmul %397, %398, %cst_191 {dimension_numbers = #tpu.dot_dimension_numbers<[1], [0], [0], [1], [0, 0, 1, 1], [], []>} : vector<8x32xbf16>, vector<32x32xbf16>, vector<8x32xf32> -> vector<8x32xf32>
    %400 = arith.addf %221, %399 : vector<8x32xf32>
    %c0_192 = arith.constant 0 : index
    %c0_193 = arith.constant 0 : index
    %401 = vector.load %arg25[%c0_192, %c0_193] : memref<1x32xf32, #tpu.memory_space<vmem>>, vector<1x32xf32>
    %402 = vector.broadcast %401 : vector<1x32xf32> to vector<8x32xf32>
    %403 = arith.addf %400, %402 : vector<8x32xf32>
    %c0_194 = arith.constant 0 : index
    %c0_195 = arith.constant 0 : index
    %404 = vector.load %arg26[%c0_194, %c0_195] : memref<1x32xf32, #tpu.memory_space<vmem>>, vector<1x32xf32>
    %c0_196 = arith.constant 0 : index
    %c0_197 = arith.constant 0 : index
    %405 = vector.load %arg27[%c0_196, %c0_197] : memref<1x32xf32, #tpu.memory_space<vmem>>, vector<1x32xf32>
    %cst_198 = arith.constant dense<0.000000e+00> : vector<8xf32>
    %406 = vector.multi_reduction <add>, %403, %cst_198 [1] : vector<8x32xf32> to vector<8xf32>
    %407 = vector.shape_cast %406 : vector<8xf32> to vector<8x1xf32>
    %cst_199 = arith.constant 3.200000e+01 : f32
    %408 = vector.broadcast %cst_199 : f32 to vector<8x1xf32>
    %409 = arith.divf %407, %408 : vector<8x1xf32>
    %410 = vector.broadcast %409 : vector<8x1xf32> to vector<8x32xf32>
    %411 = arith.subf %403, %410 : vector<8x32xf32>
    %412 = arith.mulf %411, %411 : vector<8x32xf32>
    %cst_200 = arith.constant dense<0.000000e+00> : vector<8xf32>
    %413 = vector.multi_reduction <add>, %412, %cst_200 [1] : vector<8x32xf32> to vector<8xf32>
    %414 = vector.shape_cast %413 : vector<8xf32> to vector<8x1xf32>
    %cst_201 = arith.constant 3.200000e+01 : f32
    %415 = vector.broadcast %cst_201 : f32 to vector<8x1xf32>
    %416 = arith.divf %414, %415 : vector<8x1xf32>
    %417 = vector.broadcast %409 : vector<8x1xf32> to vector<8x32xf32>
    %418 = arith.subf %403, %417 : vector<8x32xf32>
    %cst_202 = arith.constant 9.99999974E-6 : f32
    %419 = vector.broadcast %cst_202 : f32 to vector<8x1xf32>
    %420 = arith.addf %416, %419 : vector<8x1xf32>
    %421 = math.rsqrt %420 : vector<8x1xf32>
    %422 = vector.broadcast %421 : vector<8x1xf32> to vector<8x32xf32>
    %423 = arith.mulf %418, %422 : vector<8x32xf32>
    %424 = vector.broadcast %404 : vector<1x32xf32> to vector<8x32xf32>
    %425 = arith.mulf %423, %424 : vector<8x32xf32>
    %426 = vector.broadcast %405 : vector<1x32xf32> to vector<8x32xf32>
    %427 = arith.addf %425, %426 : vector<8x32xf32>
    %428 = arith.truncf %427 : vector<8x32xf32> to vector<8x32xbf16>
    %c0_203 = arith.constant 0 : index
    %c0_204 = arith.constant 0 : index
    %429 = vector.load %arg28[%c0_203, %c0_204] : memref<32x64xbf16, #tpu.memory_space<vmem>>, vector<32x64xbf16>
    %cst_205 = arith.constant dense<0.000000e+00> : vector<8x64xf32>
    %430 = tpu.matmul %428, %429, %cst_205 {dimension_numbers = #tpu.dot_dimension_numbers<[1], [0], [0], [1], [0, 0, 1, 1], [], []>} : vector<8x32xbf16>, vector<32x64xbf16>, vector<8x64xf32> -> vector<8x64xf32>
    %c0_206 = arith.constant 0 : index
    %c0_207 = arith.constant 0 : index
    %431 = vector.load %arg29[%c0_206, %c0_207] : memref<1x64xf32, #tpu.memory_space<vmem>>, vector<1x64xf32>
    %432 = vector.broadcast %431 : vector<1x64xf32> to vector<8x64xf32>
    %433 = arith.addf %430, %432 : vector<8x64xf32>
    %cst_208 = arith.constant 5.000000e-01 : f32
    %434 = vector.broadcast %cst_208 : f32 to vector<8x64xf32>
    %435 = arith.mulf %434, %433 : vector<8x64xf32>
    %436 = math.tanh %435 : vector<8x64xf32>
    %cst_209 = arith.constant 1.000000e+00 : f32
    %437 = vector.broadcast %cst_209 : f32 to vector<8x64xf32>
    %438 = arith.addf %436, %437 : vector<8x64xf32>
    %cst_210 = arith.constant 5.000000e-01 : f32
    %439 = vector.broadcast %cst_210 : f32 to vector<8x64xf32>
    %440 = arith.mulf %439, %438 : vector<8x64xf32>
    %441 = arith.mulf %433, %440 : vector<8x64xf32>
    %442 = arith.truncf %441 : vector<8x64xf32> to vector<8x64xbf16>
    %c0_211 = arith.constant 0 : index
    %c0_212 = arith.constant 0 : index
    %443 = vector.load %arg30[%c0_211, %c0_212] : memref<64x32xbf16, #tpu.memory_space<vmem>>, vector<64x32xbf16>
    %cst_213 = arith.constant dense<0.000000e+00> : vector<8x32xf32>
    %444 = tpu.matmul %442, %443, %cst_213 {dimension_numbers = #tpu.dot_dimension_numbers<[1], [0], [0], [1], [0, 0, 1, 1], [], []>} : vector<8x64xbf16>, vector<64x32xbf16>, vector<8x32xf32> -> vector<8x32xf32>
    %c0_214 = arith.constant 0 : index
    %c0_215 = arith.constant 0 : index
    %445 = vector.load %arg31[%c0_214, %c0_215] : memref<1x32xf32, #tpu.memory_space<vmem>>, vector<1x32xf32>
    %446 = vector.broadcast %445 : vector<1x32xf32> to vector<8x32xf32>
    %447 = arith.addf %444, %446 : vector<8x32xf32>
    %cst_216 = arith.constant 5.000000e-01 : f32
    %448 = vector.broadcast %cst_216 : f32 to vector<8x32xf32>
    %449 = arith.mulf %448, %447 : vector<8x32xf32>
    %450 = arith.addf %403, %449 : vector<8x32xf32>
    %c0_217 = arith.constant 0 : index
    %c0_218 = arith.constant 0 : index
    %451 = vector.load %arg32[%c0_217, %c0_218] : memref<1x32xf32, #tpu.memory_space<vmem>>, vector<1x32xf32>
    %c0_219 = arith.constant 0 : index
    %c0_220 = arith.constant 0 : index
    %452 = vector.load %arg33[%c0_219, %c0_220] : memref<1x32xf32, #tpu.memory_space<vmem>>, vector<1x32xf32>
    %cst_221 = arith.constant dense<0.000000e+00> : vector<8xf32>
    %453 = vector.multi_reduction <add>, %450, %cst_221 [1] : vector<8x32xf32> to vector<8xf32>
    %454 = vector.shape_cast %453 : vector<8xf32> to vector<8x1xf32>
    %cst_222 = arith.constant 3.200000e+01 : f32
    %455 = vector.broadcast %cst_222 : f32 to vector<8x1xf32>
    %456 = arith.divf %454, %455 : vector<8x1xf32>
    %457 = vector.broadcast %456 : vector<8x1xf32> to vector<8x32xf32>
    %458 = arith.subf %450, %457 : vector<8x32xf32>
    %459 = arith.mulf %458, %458 : vector<8x32xf32>
    %cst_223 = arith.constant dense<0.000000e+00> : vector<8xf32>
    %460 = vector.multi_reduction <add>, %459, %cst_223 [1] : vector<8x32xf32> to vector<8xf32>
    %461 = vector.shape_cast %460 : vector<8xf32> to vector<8x1xf32>
    %cst_224 = arith.constant 3.200000e+01 : f32
    %462 = vector.broadcast %cst_224 : f32 to vector<8x1xf32>
    %463 = arith.divf %461, %462 : vector<8x1xf32>
    %464 = vector.broadcast %456 : vector<8x1xf32> to vector<8x32xf32>
    %465 = arith.subf %450, %464 : vector<8x32xf32>
    %cst_225 = arith.constant 9.99999974E-6 : f32
    %466 = vector.broadcast %cst_225 : f32 to vector<8x1xf32>
    %467 = arith.addf %463, %466 : vector<8x1xf32>
    %468 = math.rsqrt %467 : vector<8x1xf32>
    %469 = vector.broadcast %468 : vector<8x1xf32> to vector<8x32xf32>
    %470 = arith.mulf %465, %469 : vector<8x32xf32>
    %471 = vector.broadcast %451 : vector<1x32xf32> to vector<8x32xf32>
    %472 = arith.mulf %470, %471 : vector<8x32xf32>
    %473 = vector.broadcast %452 : vector<1x32xf32> to vector<8x32xf32>
    %474 = arith.addf %472, %473 : vector<8x32xf32>
    %c0_226 = arith.constant 0 : index
    %c0_227 = arith.constant 0 : index
    %c0_228 = arith.constant 0 : index
    %475 = vector.load %arg34[%c0_226, %c0_227, %c0_228] : memref<1x8x32xf32, #tpu.memory_space<vmem>>, vector<1x8x32xf32>
    %476 = vector.shape_cast %475 : vector<1x8x32xf32> to vector<8x32xf32>
    %477 = vector.shape_cast %474 : vector<8x32xf32> to vector<1x8x32xf32>
    tpu.vector_store %arg34[%c0_226, %c0_227, %c0_228], %477 {strides = array<i32>} : memref<1x8x32xf32, #tpu.memory_space<vmem>>, vector<1x8x32xf32>,
    return
  }
  func.func @transform_0(%arg0: i32) -> (i32, i32, i32) {
    %c0_i32 = arith.constant 0 : i32
    %c0_i32_0 = arith.constant 0 : i32
    %c0_i32_1 = arith.constant 0 : i32
    return %arg0, %c0_i32, %c0_i32_0 : i32, i32, i32
  }
  func.func @transform_1(%arg0: i32) -> (i32, i32, i32) {
    %c0_i32 = arith.constant 0 : i32
    %c0_i32_0 = arith.constant 0 : i32
    %c0_i32_1 = arith.constant 0 : i32
    %c0_i32_2 = arith.constant 0 : i32
    return %c0_i32, %c0_i32_0, %c0_i32_1 : i32, i32, i32
  }
  func.func @transform_2(%arg0: i32) -> (i32, i32) {
    %c0_i32 = arith.constant 0 : i32
    %c0_i32_0 = arith.constant 0 : i32
    %c0_i32_1 = arith.constant 0 : i32
    return %c0_i32, %c0_i32_0 : i32, i32
  }
  func.func @transform_3(%arg0: i32) -> (i32, i32) {
    %c0_i32 = arith.constant 0 : i32
    %c0_i32_0 = arith.constant 0 : i32
    %c0_i32_1 = arith.constant 0 : i32
    return %c0_i32, %c0_i32_0 : i32, i32
  }
  func.func @transform_4(%arg0: i32) -> (i32, i32) {
    %c0_i32 = arith.constant 0 : i32
    %c0_i32_0 = arith.constant 0 : i32
    %c0_i32_1 = arith.constant 0 : i32
    return %c0_i32, %c0_i32_0 : i32, i32
  }
  func.func @transform_5(%arg0: i32) -> (i32, i32) {
    %c0_i32 = arith.constant 0 : i32
    %c0_i32_0 = arith.constant 0 : i32
    %c0_i32_1 = arith.constant 0 : i32
    return %c0_i32, %c0_i32_0 : i32, i32
  }
  func.func @transform_6(%arg0: i32) -> (i32, i32) {
    %c0_i32 = arith.constant 0 : i32
    %c0_i32_0 = arith.constant 0 : i32
    %c0_i32_1 = arith.constant 0 : i32
    return %c0_i32, %c0_i32_0 : i32, i32
  }
  func.func @transform_7(%arg0: i32) -> (i32, i32) {
    %c0_i32 = arith.constant 0 : i32
    %c0_i32_0 = arith.constant 0 : i32
    %c0_i32_1 = arith.constant 0 : i32
    return %c0_i32, %c0_i32_0 : i32, i32
  }
  func.func @transform_8(%arg0: i32) -> (i32, i32) {
    %c0_i32 = arith.constant 0 : i32
    %c0_i32_0 = arith.constant 0 : i32
    %c0_i32_1 = arith.constant 0 : i32
    return %c0_i32, %c0_i32_0 : i32, i32
  }
  func.func @transform_9(%arg0: i32) -> (i32, i32) {
    %c0_i32 = arith.constant 0 : i32
    %c0_i32_0 = arith.constant 0 : i32
    %c0_i32_1 = arith.constant 0 : i32
    return %c0_i32, %c0_i32_0 : i32, i32
  }
  func.func @transform_10(%arg0: i32) -> (i32, i32) {
    %c0_i32 = arith.constant 0 : i32
    %c0_i32_0 = arith.constant 0 : i32
    %c0_i32_1 = arith.constant 0 : i32
    return %c0_i32, %c0_i32_0 : i32, i32
  }
  func.func @transform_11(%arg0: i32) -> (i32, i32) {
    %c0_i32 = arith.constant 0 : i32
    %c0_i32_0 = arith.constant 0 : i32
    %c0_i32_1 = arith.constant 0 : i32
    return %c0_i32, %c0_i32_0 : i32, i32
  }
  func.func @transform_12(%arg0: i32) -> (i32, i32) {
    %c0_i32 = arith.constant 0 : i32
    %c0_i32_0 = arith.constant 0 : i32
    %c0_i32_1 = arith.constant 0 : i32
    return %c0_i32, %c0_i32_0 : i32, i32
  }
  func.func @transform_13(%arg0: i32) -> (i32, i32) {
    %c0_i32 = arith.constant 0 : i32
    %c0_i32_0 = arith.constant 0 : i32
    %c0_i32_1 = arith.constant 0 : i32
    return %c0_i32, %c0_i32_0 : i32, i32
  }
  func.func @transform_14(%arg0: i32) -> (i32, i32) {
    %c0_i32 = arith.constant 0 : i32
    %c0_i32_0 = arith.constant 0 : i32
    %c0_i32_1 = arith.constant 0 : i32
    return %c0_i32, %c0_i32_0 : i32, i32
  }
  func.func @transform_15(%arg0: i32) -> (i32, i32) {
    %c0_i32 = arith.constant 0 : i32
    %c0_i32_0 = arith.constant 0 : i32
    %c0_i32_1 = arith.constant 0 : i32
    return %c0_i32, %c0_i32_0 : i32, i32
  }
  func.func @transform_16(%arg0: i32) -> (i32, i32) {
    %c0_i32 = arith.constant 0 : i32
    %c0_i32_0 = arith.constant 0 : i32
    %c0_i32_1 = arith.constant 0 : i32
    return %c0_i32, %c0_i32_0 : i32, i32
  }
  func.func @transform_17(%arg0: i32) -> (i32, i32) {
    %c0_i32 = arith.constant 0 : i32
    %c0_i32_0 = arith.constant 0 : i32
    %c0_i32_1 = arith.constant 0 : i32
    return %c0_i32, %c0_i32_0 : i32, i32
  }
  func.func @transform_18(%arg0: i32) -> (i32, i32) {
    %c0_i32 = arith.constant 0 : i32
    %c0_i32_0 = arith.constant 0 : i32
    %c0_i32_1 = arith.constant 0 : i32
    return %c0_i32, %c0_i32_0 : i32, i32
  }
  func.func @transform_19(%arg0: i32) -> (i32, i32) {
    %c0_i32 = arith.constant 0 : i32
    %c0_i32_0 = arith.constant 0 : i32
    %c0_i32_1 = arith.constant 0 : i32
    return %c0_i32, %c0_i32_0 : i32, i32
  }
  func.func @transform_20(%arg0: i32) -> (i32, i32) {
    %c0_i32 = arith.constant 0 : i32
    %c0_i32_0 = arith.constant 0 : i32
    %c0_i32_1 = arith.constant 0 : i32
    return %c0_i32, %c0_i32_0 : i32, i32
  }
  func.func @transform_21(%arg0: i32) -> (i32, i32) {
    %c0_i32 = arith.constant 0 : i32
    %c0_i32_0 = arith.constant 0 : i32
    %c0_i32_1 = arith.constant 0 : i32
    return %c0_i32, %c0_i32_0 : i32, i32
  }
  func.func @transform_22(%arg0: i32) -> (i32, i32) {
    %c0_i32 = arith.constant 0 : i32
    %c0_i32_0 = arith.constant 0 : i32
    %c0_i32_1 = arith.constant 0 : i32
    return %c0_i32, %c0_i32_0 : i32, i32
  }
  func.func @transform_23(%arg0: i32) -> (i32, i32) {
    %c0_i32 = arith.constant 0 : i32
    %c0_i32_0 = arith.constant 0 : i32
    %c0_i32_1 = arith.constant 0 : i32
    return %c0_i32, %c0_i32_0 : i32, i32
  }
  func.func @transform_24(%arg0: i32) -> (i32, i32) {
    %c0_i32 = arith.constant 0 : i32
    %c0_i32_0 = arith.constant 0 : i32
    %c0_i32_1 = arith.constant 0 : i32
    return %c0_i32, %c0_i32_0 : i32, i32
  }
  func.func @transform_25(%arg0: i32) -> (i32, i32) {
    %c0_i32 = arith.constant 0 : i32
    %c0_i32_0 = arith.constant 0 : i32
    %c0_i32_1 = arith.constant 0 : i32
    return %c0_i32, %c0_i32_0 : i32, i32
  }
  func.func @transform_26(%arg0: i32) -> (i32, i32) {
    %c0_i32 = arith.constant 0 : i32
    %c0_i32_0 = arith.constant 0 : i32
    %c0_i32_1 = arith.constant 0 : i32
    return %c0_i32, %c0_i32_0 : i32, i32
  }
  func.func @transform_27(%arg0: i32) -> (i32, i32) {
    %c0_i32 = arith.constant 0 : i32
    %c0_i32_0 = arith.constant 0 : i32
    %c0_i32_1 = arith.constant 0 : i32
    return %c0_i32, %c0_i32_0 : i32, i32
  }
  func.func @transform_28(%arg0: i32) -> (i32, i32) {
    %c0_i32 = arith.constant 0 : i32
    %c0_i32_0 = arith.constant 0 : i32
    %c0_i32_1 = arith.constant 0 : i32
    return %c0_i32, %c0_i32_0 : i32, i32
  }
  func.func @transform_29(%arg0: i32) -> (i32, i32) {
    %c0_i32 = arith.constant 0 : i32
    %c0_i32_0 = arith.constant 0 : i32
    %c0_i32_1 = arith.constant 0 : i32
    return %c0_i32, %c0_i32_0 : i32, i32
  }
  func.func @transform_30(%arg0: i32) -> (i32, i32) {
    %c0_i32 = arith.constant 0 : i32
    %c0_i32_0 = arith.constant 0 : i32
    %c0_i32_1 = arith.constant 0 : i32
    return %c0_i32, %c0_i32_0 : i32, i32
  }
  func.func @transform_31(%arg0: i32) -> (i32, i32) {
    %c0_i32 = arith.constant 0 : i32
    %c0_i32_0 = arith.constant 0 : i32
    %c0_i32_1 = arith.constant 0 : i32
    return %c0_i32, %c0_i32_0 : i32, i32
  }
  func.func @transform_32(%arg0: i32) -> (i32, i32) {
    %c0_i32 = arith.constant 0 : i32
    %c0_i32_0 = arith.constant 0 : i32
    %c0_i32_1 = arith.constant 0 : i32
    return %c0_i32, %c0_i32_0 : i32, i32
  }
  func.func @transform_33(%arg0: i32) -> (i32, i32, i32) {
    %c0_i32 = arith.constant 0 : i32
    %c0_i32_0 = arith.constant 0 : i32
    %c0_i32_1 = arith.constant 0 : i32
    return %arg0, %c0_i32, %c0_i32_0 : i32, i32, i32
  }
  func.func @transform_34(%arg0: i32) -> (i32, i32, i32, i32) {
    %c0_i32 = arith.constant 0 : i32
    %c0_i32_0 = arith.constant 0 : i32
    %c0_i32_1 = arith.constant 0 : i32
    %c0_i32_2 = arith.constant 0 : i32
    return %arg0, %c0_i32, %c0_i32_0, %c0_i32_1 : i32, i32, i32, i32
  }
}

</mosaic_0001>

<llo_original>
// kernel: tpu_custom_call.1
$region0: #{tpu_custom_call.1}
  #allocation0 [shape = 'u32[]', space=smem, size = 0x4, offset = 0x4, fixed_abs, tag = 'smem constant byte address 0x4 - core index']
  #allocation1 [shape = 'u32[72,128]{1,0:T(1,128)}', space=vmem, size = 0x9000, scoped, tag = 'internal scratch']
  #allocation2 [shape = 'bf16[4,8,8]{2,1,0:T(8,128)(2,1)}', space=vmem, size = 0x2000, scoped, tag = 'scratch operand']
  #allocation3 [shape = 'bf16[4,8,8]{2,1,0:T(8,128)(2,1)}', space=vmem, size = 0x2000, scoped, tag = 'scratch operand']
  #allocation4 [shape = 'bf16[4,8,8]{2,1,0:T(8,128)(2,1)}', space=vmem, size = 0x2000, scoped, tag = 'scratch operand']
  #allocation5 [shape = 'bf16[4,8,8]{2,1,0:T(8,128)(2,1)}', space=vmem, size = 0x2000, scoped, tag = 'scratch operand']
  #allocation6 [shape = 'bf16[8,32]{1,0:T(8,128)(2,1)}', space=vmem, size = 0x800, scoped, tag = 'scratch operand']
  %s0 = inlined_call_operand.smem [shape: u32[35], index: -1, kind: input, shape index: {}]
  %s1 = sld [smem:[%s0]]
  %s2 = scalar_lea.smem %s0, 1
  %s3 = sld [smem:[%s2]]
  %s4 = scalar_lea.smem %s0, 2
  %s5 = sld [smem:[%s4]]
  %s6 = scalar_lea.smem %s0, 3
  %s7 = sld [smem:[%s6]]
  %s8 = scalar_lea.smem %s0, 4
  %s9 = sld [smem:[%s8]]
  %s10 = scalar_lea.smem %s0, 5
  %s11 = sld [smem:[%s10]]
  %s12 = scalar_lea.smem %s0, 6
  %s13 = sld [smem:[%s12]]
  %s14 = scalar_lea.smem %s0, 7
  %s15 = sld [smem:[%s14]]
  %s16 = scalar_lea.smem %s0, 8
  %s17 = sld [smem:[%s16]]
  %s18 = scalar_lea.smem %s0, 9
  %s19 = sld [smem:[%s18]]
  %s20 = scalar_lea.smem %s0, 10
  %s21 = sld [smem:[%s20]]
  %s22 = scalar_lea.smem %s0, 11
  %s23 = sld [smem:[%s22]]
  %s24 = scalar_lea.smem %s0, 12
  %s25 = sld [smem:[%s24]]
  %s26 = scalar_lea.smem %s0, 13
  %s27 = sld [smem:[%s26]]
  %s28 = scalar_lea.smem %s0, 14
  %s29 = sld [smem:[%s28]]
  %s30 = scalar_lea.smem %s0, 15
  %s31 = sld [smem:[%s30]]
  %s32 = scalar_lea.smem %s0, 16
  %s33 = sld [smem:[%s32]]
  %s34 = scalar_lea.smem %s0, 17
  %s35 = sld [smem:[%s34]]
  %s36 = scalar_lea.smem %s0, 18
  %s37 = sld [smem:[%s36]]
  %s38 = scalar_lea.smem %s0, 19
  %s39 = sld [smem:[%s38]]
  %s40 = scalar_lea.smem %s0, 20
  %s41 = sld [smem:[%s40]]
  %s42 = scalar_lea.smem %s0, 21
  %s43 = sld [smem:[%s42]]
  %s44 = scalar_lea.smem %s0, 22
  %s45 = sld [smem:[%s44]]
  %s46 = scalar_lea.smem %s0, 23
  %s47 = sld [smem:[%s46]]
  %s48 = scalar_lea.smem %s0, 24
  %s49 = sld [smem:[%s48]]
  %s50 = scalar_lea.smem %s0, 25
  %s51 = sld [smem:[%s50]]
  %s52 = scalar_lea.smem %s0, 26
  %s53 = sld [smem:[%s52]]
  %s54 = scalar_lea.smem %s0, 27
  %s55 = sld [smem:[%s54]]
  %s56 = scalar_lea.smem %s0, 28
  %s57 = sld [smem:[%s56]]
  %s58 = scalar_lea.smem %s0, 29
  %s59 = sld [smem:[%s58]]
  %s60 = scalar_lea.smem %s0, 30
  %s61 = sld [smem:[%s60]]
  %s62 = scalar_lea.smem %s0, 31
  %s63 = sld [smem:[%s62]]
  %s64 = scalar_lea.smem %s0, 32
  %s65 = sld [smem:[%s64]]
  %s66 = scalar_lea.smem %s0, 33
  %s67 = sld [smem:[%s66]]
  %s68 = scalar_lea.smem %s0, 34
  %s69 = sld [smem:[%s68]]
  %70 = xla_tuple %s67, %s69
  %s71 = sld [smem:[#allocation0]]
  $region197: #{tpu_custom_call.1} parent=0
    _
  %s73 = ssub.s32 1, %s71
  %s74 = scalar_select 0, %s73, %s71
  $region1: #{tpu_custom_call.1} parent=0
    #allocation7 [shape = 'u8[512]{0}', space=vmem, size = 0x400, scoped, tag = 'input window, operand 3, single buffered']
    #allocation8 [shape = 's32[2]{0}', space=sflag, size = 0x8, scoped, tag = 'scoped memory for tpu_custom_call.1']
    #allocation9 [shape = 's32[2]{0}', space=sflag, size = 0x8, scoped, tag = 'scoped memory for tpu_custom_call.1']
    #allocation10 [shape = 'u8[512]{0}', space=vmem, size = 0x400, scoped, tag = 'input window, operand 5, single buffered']
    #allocation11 [shape = 's32[1]{0}', space=sflag, size = 0x4, scoped, tag = 'scoped memory for tpu_custom_call.1']
    #allocation12 [shape = 'u8[512]{0}', space=vmem, size = 0x400, scoped, tag = 'input window, operand 7, single buffered']
    #allocation13 [shape = 'u8[512]{0}', space=vmem, size = 0x400, scoped, tag = 'input window, operand 8, single buffered']
    #allocation14 [shape = 's32[1]{0}', space=sflag, size = 0x4, scoped, tag = 'scoped memory for tpu_custom_call.1']
    #allocation15 [shape = 'u8[512]{0}', space=vmem, size = 0x400, scoped, tag = 'input window, operand 9, single buffered']
    #allocation16 [shape = 'u8[512]{0}', space=vmem, size = 0x400, scoped, tag = 'input window, operand 11, single buffered']
    #allocation17 [shape = 's32[1]{0}', space=sflag, size = 0x4, scoped, tag = 'scoped memory for tpu_custom_call.1']
    #allocation18 [shape = 'u8[8192]{0}', space=vmem, size = 0x2000, scoped, tag = 'output window, operand 0']
    #allocation19 [shape = 'u8[32768]{0}', space=vmem, size = 0x8000, scoped, tag = 'output window, operand 1']
    #allocation20 [shape = 's32[2]{0}', space=sflag, size = 0x8, scoped, tag = 'scoped memory for tpu_custom_call.1']
    %75 = vsyncpa [#allocation8], 0
    %76 = vsyncpa [#allocation11], 0
    %77 = vsyncpa [#allocation14], 0
    %78 = vsyncpa [#allocation17], 0
    %79 = vsyncpa [#allocation9], 0
    %s80 = scalar_lea.sflag [#allocation9], 1
    %81 = vsyncpa %s80, 0
    %82 = vsyncpa [#allocation20], 0
    %s83 = scalar_lea.sflag [#allocation20], 1
    %84 = vsyncpa %s83, 0
    loop: start=0, step=1, limit=4
    $region2: #{tpu_custom_call.1} parent=1 // loop_pre_header
      _
    $region3: #{tpu_custom_call.1} parent=1 // loop_header
      %s86 = sphi 0, %s90
      %p87 = scmp.ge.s32.totalorder %s86, 4
      %s96 = sphi 0, %s98
      %s99 = sphi 0, %s96
      %s100 = sphi 0, %s99
      %s116 = sphi 0, %s100
      %s120 = sphi 0, %s120
      %s122 = sphi 0, %s120
      %s123 = sphi 0, %s122
      %s137 = sphi 0, %s123
      %s141 = sphi 0, %s141
      %s143 = sphi 0, %s141
      %s144 = sphi 0, %s143
      %s158 = sphi 0, %s144
      %s162 = sphi 0, %s162
      %s164 = sphi 0, %s162
      %s165 = sphi 0, %s164
      %s179 = sphi 0, %s165
      %s183 = sphi 0, %s183
      %s185 = sphi 0, %s183
      %s186 = sphi 0, %s185
      %s200 = sphi 0, %s186
      %s204 = sphi 0, %s204
      %s206 = sphi 0, %s204
      %s207 = sphi 0, %s206
      %s221 = sphi 0, %s207
      %s225 = sphi 0, %s225
      %s227 = sphi 0, %s225
      %s228 = sphi 0, %s227
      %s242 = sphi 0, %s228
      %s246 = sphi 0, %s246
      %s248 = sphi 0, %s246
      %s249 = sphi 0, %s248
      %s263 = sphi 0, %s249
      %s267 = sphi 0, %s267
      %s269 = sphi 0, %s267
      %s270 = sphi 0, %s269
      %s284 = sphi 0, %s270
      %s288 = sphi 0, %s288
      %s290 = sphi 0, %s288
      %s291 = sphi 0, %s290
      %s305 = sphi 0, %s291
      %s309 = sphi 0, %s309
      %s311 = sphi 0, %s309
      %s312 = sphi 0, %s311
      %s326 = sphi 0, %s312
      %s330 = sphi 0, %s330
      %s332 = sphi 0, %s330
      %s333 = sphi 0, %s332
      %s347 = sphi 0, %s333
      %s351 = sphi 0, %s351
      %s353 = sphi 0, %s351
      %s354 = sphi 0, %s353
      %s368 = sphi 0, %s354
      %s372 = sphi 0, %s372
      %s374 = sphi 0, %s372
      %s375 = sphi 0, %s374
      %s389 = sphi 0, %s375
      %s393 = sphi 0, %s393
      %s395 = sphi 0, %s393
      %s396 = sphi 0, %s395
      %s410 = sphi 0, %s396
      %s414 = sphi 0, %s414
      %s416 = sphi 0, %s414
      %s417 = sphi 0, %s416
      %s431 = sphi 0, %s417
      %s435 = sphi 0, %s435
      %s437 = sphi 0, %s435
      %s438 = sphi 0, %s437
      %s452 = sphi 0, %s438
      %s456 = sphi 0, %s456
      %s458 = sphi 0, %s456
      %s459 = sphi 0, %s458
      %s473 = sphi 0, %s459
      %s477 = sphi 0, %s477
      %s479 = sphi 0, %s477
      %s480 = sphi 0, %s479
      %s494 = sphi 0, %s480
      %s498 = sphi 0, %s498
      %s500 = sphi 0, %s498
      %s501 = sphi 0, %s500
      %s515 = sphi 0, %s501
      %s519 = sphi 0, %s519
      %s521 = sphi 0, %s519
      %s522 = sphi 0, %s521
      %s536 = sphi 0, %s522
      %s540 = sphi 0, %s540
      %s542 = sphi 0, %s540
      %s543 = sphi 0, %s542
      %s557 = sphi 0, %s543
      %s561 = sphi 0, %s561
      %s563 = sphi 0, %s561
      %s564 = sphi 0, %s563
      %s578 = sphi 0, %s564
      %s582 = sphi 0, %s582
      %s584 = sphi 0, %s582
      %s585 = sphi 0, %s584
      %s599 = sphi 0, %s585
      %s603 = sphi 0, %s603
      %s605 = sphi 0, %s603
      %s606 = sphi 0, %s605
      %s620 = sphi 0, %s606
      %s624 = sphi 0, %s624
      %s626 = sphi 0, %s624
      %s627 = sphi 0, %s626
      %s641 = sphi 0, %s627
      %s645 = sphi 0, %s645
      %s647 = sphi 0, %s645
      %s648 = sphi 0, %s647
      %s662 = sphi 0, %s648
      %s666 = sphi 0, %s666
      %s668 = sphi 0, %s666
      %s669 = sphi 0, %s668
      %s683 = sphi 0, %s669
      %s687 = sphi 0, %s687
      %s689 = sphi 0, %s687
      %s690 = sphi 0, %s689
      %s704 = sphi 0, %s690
      %s708 = sphi 0, %s708
      %s710 = sphi 0, %s708
      %s711 = sphi 0, %s710
      %s725 = sphi 0, %s711
      %s729 = sphi 0, %s729
      %s731 = sphi 0, %s729
      %s732 = sphi 0, %s731
      %s746 = sphi 0, %s732
      %s750 = sphi 0, %s750
      %s752 = sphi 0, %s750
      %s753 = sphi 0, %s752
      %s767 = sphi 0, %s753
      %s771 = sphi 0, %s771
      %s773 = sphi 0, %s771
      %s774 = sphi 0, %s773
      %s788 = sphi 0, %s774
      %s794 = sphi 0, %s796
      %s797 = sphi 0, %s794
      %s798 = sphi 0, %s797
      %s814 = sphi 0, %s798
      %s820 = sphi 0, %s822
      %s823 = sphi 0, %s820
      %s824 = sphi 0, %s823
      %s840 = sphi 0, %s824
    $region4: #{tpu_custom_call.1} parent=1 // loop_header_branch
      %89 = sbr.rel (%p87) target = $region8
    $region5: #{tpu_custom_call.1} parent=1 // loop_body
      %s91 = ssub.s32 %s86, 1
      %s92 = ssub.s32 %s86, 2
      %s93 = sadd.s32 %s86, 1
      %s94 = ssub.s32 %s86, %s93
      %p95 = scmp.eq.s32.totalorder %s94, 0
      %s97 = sadd.s32 %s96, 1
      %s98 = scalar_select %p95, %s96, %s97
      %p101 = pneg %p95
      %p102 = scmp.eq.s32.totalorder %s86, 1
      %p103 = por %p101, %p102
      %p104 = scmp.ne.s32.totalorder %s96, %s99
      %p105 = scmp.eq.s32.totalorder %s86, 0
      %p106 = por %p104, %p105
      %p107 = scmp.ne.s32.totalorder %s96, %s99
      %p108 = scmp.eq.s32.totalorder %s91, 1
      %p109 = por %p107, %p108
      %p110 = scmp.ne.s32.totalorder %s99, %s100
      %p111 = scmp.eq.s32.totalorder %s91, 0
      %p112 = por %p110, %p111
      %p113 = scmp.ne.s32.totalorder %s99, %s100
      %p114 = scmp.eq.s32.totalorder %s92, 1
      %p115 = por %p113, %p114
      %p117 = scmp.ne.s32.totalorder %s100, %s116
      %p118 = scmp.eq.s32.totalorder %s92, 0
      %p119 = por %p117, %p118
      %s121 = sadd.s32 %s120, 1
      %p124 = scmp.eq.s32.totalorder %s86, 1
      %p125 = scmp.ne.s32.totalorder %s120, %s122
      %p126 = scmp.eq.s32.totalorder %s86, 0
      %p127 = por %p125, %p126
      %p128 = scmp.ne.s32.totalorder %s120, %s122
      %p129 = scmp.eq.s32.totalorder %s91, 1
      %p130 = por %p128, %p129
      %p131 = scmp.ne.s32.totalorder %s122, %s123
      %p132 = scmp.eq.s32.totalorder %s91, 0
      %p133 = por %p131, %p132
      %p134 = scmp.ne.s32.totalorder %s122, %s123
      %p135 = scmp.eq.s32.totalorder %s92, 1
      %p136 = por %p134, %p135
      %p138 = scmp.ne.s32.totalorder %s123, %s137
      %p139 = scmp.eq.s32.totalorder %s92, 0
      %p140 = por %p138, %p139
      %s142 = sadd.s32 %s141, 1
      %p145 = scmp.eq.s32.totalorder %s86, 1
      %p146 = scmp.ne.s32.totalorder %s141, %s143
      %p147 = scmp.eq.s32.totalorder %s86, 0
      %p148 = por %p146, %p147
      %p149 = scmp.ne.s32.totalorder %s141, %s143
      %p150 = scmp.eq.s32.totalorder %s91, 1
      %p151 = por %p149, %p150
      %p152 = scmp.ne.s32.totalorder %s143, %s144
      %p153 = scmp.eq.s32.totalorder %s91, 0
      %p154 = por %p152, %p153
      %p155 = scmp.ne.s32.totalorder %s143, %s144
      %p156 = scmp.eq.s32.totalorder %s92, 1
      %p157 = por %p155, %p156
      %p159 = scmp.ne.s32.totalorder %s144, %s158
      %p160 = scmp.eq.s32.totalorder %s92, 0
      %p161 = por %p159, %p160
      %s163 = sadd.s32 %s162, 1
      %p166 = scmp.eq.s32.totalorder %s86, 1
      %p167 = scmp.ne.s32.totalorder %s162, %s164
      %p168 = scmp.eq.s32.totalorder %s86, 0
      %p169 = por %p167, %p168
      %p170 = scmp.ne.s32.totalorder %s162, %s164
      %p171 = scmp.eq.s32.totalorder %s91, 1
      %p172 = por %p170, %p171
      %p173 = scmp.ne.s32.totalorder %s164, %s165
      %p174 = scmp.eq.s32.totalorder %s91, 0
      %p175 = por %p173, %p174
      %p176 = scmp.ne.s32.totalorder %s164, %s165
      %p177 = scmp.eq.s32.totalorder %s92, 1
      %p178 = por %p176, %p177
      %p180 = scmp.ne.s32.totalorder %s165, %s179
      %p181 = scmp.eq.s32.totalorder %s92, 0
      %p182 = por %p180, %p181
      %s184 = sadd.s32 %s183, 1
      %p187 = scmp.eq.s32.totalorder %s86, 1
      %p188 = scmp.ne.s32.totalorder %s183, %s185
      %p189 = scmp.eq.s32.totalorder %s86, 0
      %p190 = por %p188, %p189
      %p191 = scmp.ne.s32.totalorder %s183, %s185
      %p192 = scmp.eq.s32.totalorder %s91, 1
      %p193 = por %p191, %p192
      %p194 = scmp.ne.s32.totalorder %s185, %s186
      %p195 = scmp.eq.s32.totalorder %s91, 0
      %p196 = por %p194, %p195
      %p197 = scmp.ne.s32.totalorder %s185, %s186
      %p198 = scmp.eq.s32.totalorder %s92, 1
      %p199 = por %p197, %p198
      %p201 = scmp.ne.s32.totalorder %s186, %s200
      %p202 = scmp.eq.s32.totalorder %s92, 0
      %p203 = por %p201, %p202
      %s205 = sadd.s32 %s204, 1
      %p208 = scmp.eq.s32.totalorder %s86, 1
      %p209 = scmp.ne.s32.totalorder %s204, %s206
      %p210 = scmp.eq.s32.totalorder %s86, 0
      %p211 = por %p209, %p210
      %p212 = scmp.ne.s32.totalorder %s204, %s206
      %p213 = scmp.eq.s32.totalorder %s91, 1
      %p214 = por %p212, %p213
      %p215 = scmp.ne.s32.totalorder %s206, %s207
      %p216 = scmp.eq.s32.totalorder %s91, 0
      %p217 = por %p215, %p216
      %p218 = scmp.ne.s32.totalorder %s206, %s207
      %p219 = scmp.eq.s32.totalorder %s92, 1
      %p220 = por %p218, %p219
      %p222 = scmp.ne.s32.totalorder %s207, %s221
      %p223 = scmp.eq.s32.totalorder %s92, 0
      %p224 = por %p222, %p223
      %s226 = sadd.s32 %s225, 1
      %p229 = scmp.eq.s32.totalorder %s86, 1
      %p230 = scmp.ne.s32.totalorder %s225, %s227
      %p231 = scmp.eq.s32.totalorder %s86, 0
      %p232 = por %p230, %p231
      %p233 = scmp.ne.s32.totalorder %s225, %s227
      %p234 = scmp.eq.s32.totalorder %s91, 1
      %p235 = por %p233, %p234
      %p236 = scmp.ne.s32.totalorder %s227, %s228
      %p237 = scmp.eq.s32.totalorder %s91, 0
      %p238 = por %p236, %p237
      %p239 = scmp.ne.s32.totalorder %s227, %s228
      %p240 = scmp.eq.s32.totalorder %s92, 1
      %p241 = por %p239, %p240
      %p243 = scmp.ne.s32.totalorder %s228, %s242
      %p244 = scmp.eq.s32.totalorder %s92, 0
      %p245 = por %p243, %p244
      %s247 = sadd.s32 %s246, 1
      %p250 = scmp.eq.s32.totalorder %s86, 1
      %p251 = scmp.ne.s32.totalorder %s246, %s248
      %p252 = scmp.eq.s32.totalorder %s86, 0
      %p253 = por %p251, %p252
      %p254 = scmp.ne.s32.totalorder %s246, %s248
      %p255 = scmp.eq.s32.totalorder %s91, 1
      %p256 = por %p254, %p255
      %p257 = scmp.ne.s32.totalorder %s248, %s249
      %p258 = scmp.eq.s32.totalorder %s91, 0
      %p259 = por %p257, %p258
      %p260 = scmp.ne.s32.totalorder %s248, %s249
      %p261 = scmp.eq.s32.totalorder %s92, 1
      %p262 = por %p260, %p261
      %p264 = scmp.ne.s32.totalorder %s249, %s263
      %p265 = scmp.eq.s32.totalorder %s92, 0
      %p266 = por %p264, %p265
      %s268 = sadd.s32 %s267, 1
      %p271 = scmp.eq.s32.totalorder %s86, 1
      %p272 = scmp.ne.s32.totalorder %s267, %s269
      %p273 = scmp.eq.s32.totalorder %s86, 0
      %p274 = por %p272, %p273
      %p275 = scmp.ne.s32.totalorder %s267, %s269
      %p276 = scmp.eq.s32.totalorder %s91, 1
      %p277 = por %p275, %p276
      %p278 = scmp.ne.s32.totalorder %s269, %s270
      %p279 = scmp.eq.s32.totalorder %s91, 0
      %p280 = por %p278, %p279
      %p281 = scmp.ne.s32.totalorder %s269, %s270
      %p282 = scmp.eq.s32.totalorder %s92, 1
      %p283 = por %p281, %p282
      %p285 = scmp.ne.s32.totalorder %s270, %s284
      %p286 = scmp.eq.s32.totalorder %s92, 0
      %p287 = por %p285, %p286
      %s289 = sadd.s32 %s288, 1
      %p292 = scmp.eq.s32.totalorder %s86, 1
      %p293 = scmp.ne.s32.totalorder %s288, %s290
      %p294 = scmp.eq.s32.totalorder %s86, 0
      %p295 = por %p293, %p294
      %p296 = scmp.ne.s32.totalorder %s288, %s290
      %p297 = scmp.eq.s32.totalorder %s91, 1
      %p298 = por %p296, %p297
      %p299 = scmp.ne.s32.totalorder %s290, %s291
      %p300 = scmp.eq.s32.totalorder %s91, 0
      %p301 = por %p299, %p300
      %p302 = scmp.ne.s32.totalorder %s290, %s291
      %p303 = scmp.eq.s32.totalorder %s92, 1
      %p304 = por %p302, %p303
      %p306 = scmp.ne.s32.totalorder %s291, %s305
      %p307 = scmp.eq.s32.totalorder %s92, 0
      %p308 = por %p306, %p307
      %s310 = sadd.s32 %s309, 1
      %p313 = scmp.eq.s32.totalorder %s86, 1
      %p314 = scmp.ne.s32.totalorder %s309, %s311
      %p315 = scmp.eq.s32.totalorder %s86, 0
      %p316 = por %p314, %p315
      %p317 = scmp.ne.s32.totalorder %s309, %s311
      %p318 = scmp.eq.s32.totalorder %s91, 1
      %p319 = por %p317, %p318
      %p320 = scmp.ne.s32.totalorder %s311, %s312
      %p321 = scmp.eq.s32.totalorder %s91, 0
      %p322 = por %p320, %p321
      %p323 = scmp.ne.s32.totalorder %s311, %s312
      %p324 = scmp.eq.s32.totalorder %s92, 1
      %p325 = por %p323, %p324
      %p327 = scmp.ne.s32.totalorder %s312, %s326
      %p328 = scmp.eq.s32.totalorder %s92, 0
      %p329 = por %p327, %p328
      %s331 = sadd.s32 %s330, 1
      %p334 = scmp.eq.s32.totalorder %s86, 1
      %p335 = scmp.ne.s32.totalorder %s330, %s332
      %p336 = scmp.eq.s32.totalorder %s86, 0
      %p337 = por %p335, %p336
      %p338 = scmp.ne.s32.totalorder %s330, %s332
      %p339 = scmp.eq.s32.totalorder %s91, 1
      %p340 = por %p338, %p339
      %p341 = scmp.ne.s32.totalorder %s332, %s333
      %p342 = scmp.eq.s32.totalorder %s91, 0
      %p343 = por %p341, %p342
      %p344 = scmp.ne.s32.totalorder %s332, %s333
      %p345 = scmp.eq.s32.totalorder %s92, 1
      %p346 = por %p344, %p345
      %p348 = scmp.ne.s32.totalorder %s333, %s347
      %p349 = scmp.eq.s32.totalorder %s92, 0
      %p350 = por %p348, %p349
      %s352 = sadd.s32 %s351, 1
      %p355 = scmp.eq.s32.totalorder %s86, 1
      %p356 = scmp.ne.s32.totalorder %s351, %s353
      %p357 = scmp.eq.s32.totalorder %s86, 0
      %p358 = por %p356, %p357
      %p359 = scmp.ne.s32.totalorder %s351, %s353
      %p360 = scmp.eq.s32.totalorder %s91, 1
      %p361 = por %p359, %p360
      %p362 = scmp.ne.s32.totalorder %s353, %s354
      %p363 = scmp.eq.s32.totalorder %s91, 0
      %p364 = por %p362, %p363
      %p365 = scmp.ne.s32.totalorder %s353, %s354
      %p366 = scmp.eq.s32.totalorder %s92, 1
      %p367 = por %p365, %p366
      %p369 = scmp.ne.s32.totalorder %s354, %s368
      %p370 = scmp.eq.s32.totalorder %s92, 0
      %p371 = por %p369, %p370
      %s373 = sadd.s32 %s372, 1
      %p376 = scmp.eq.s32.totalorder %s86, 1
      %p377 = scmp.ne.s32.totalorder %s372, %s374
      %p378 = scmp.eq.s32.totalorder %s86, 0
      %p379 = por %p377, %p378
      %p380 = scmp.ne.s32.totalorder %s372, %s374
      %p381 = scmp.eq.s32.totalorder %s91, 1
      %p382 = por %p380, %p381
      %p383 = scmp.ne.s32.totalorder %s374, %s375
      %p384 = scmp.eq.s32.totalorder %s91, 0
      %p385 = por %p383, %p384
      %p386 = scmp.ne.s32.totalorder %s374, %s375
      %p387 = scmp.eq.s32.totalorder %s92, 1
      %p388 = por %p386, %p387
      %p390 = scmp.ne.s32.totalorder %s375, %s389
      %p391 = scmp.eq.s32.totalorder %s92, 0
      %p392 = por %p390, %p391
      %s394 = sadd.s32 %s393, 1
      %p397 = scmp.eq.s32.totalorder %s86, 1
      %p398 = scmp.ne.s32.totalorder %s393, %s395
      %p399 = scmp.eq.s32.totalorder %s86, 0
      %p400 = por %p398, %p399
      %p401 = scmp.ne.s32.totalorder %s393, %s395
      %p402 = scmp.eq.s32.totalorder %s91, 1
      %p403 = por %p401, %p402
      %p404 = scmp.ne.s32.totalorder %s395, %s396
      %p405 = scmp.eq.s32.totalorder %s91, 0
      %p406 = por %p404, %p405
      %p407 = scmp.ne.s32.totalorder %s395, %s396
      %p408 = scmp.eq.s32.totalorder %s92, 1
      %p409 = por %p407, %p408
      %p411 = scmp.ne.s32.totalorder %s396, %s410
      %p412 = scmp.eq.s32.totalorder %s92, 0
      %p413 = por %p411, %p412
      %s415 = sadd.s32 %s414, 1
      %p418 = scmp.eq.s32.totalorder %s86, 1
      %p419 = scmp.ne.s32.totalorder %s414, %s416
      %p420 = scmp.eq.s32.totalorder %s86, 0
      %p421 = por %p419, %p420
      %p422 = scmp.ne.s32.totalorder %s414, %s416
      %p423 = scmp.eq.s32.totalorder %s91, 1
      %p424 = por %p422, %p423
      %p425 = scmp.ne.s32.totalorder %s416, %s417
      %p426 = scmp.eq.s32.totalorder %s91, 0
      %p427 = por %p425, %p426
      %p428 = scmp.ne.s32.totalorder %s416, %s417
      %p429 = scmp.eq.s32.totalorder %s92, 1
      %p430 = por %p428, %p429
      %p432 = scmp.ne.s32.totalorder %s417, %s431
      %p433 = scmp.eq.s32.totalorder %s92, 0
      %p434 = por %p432, %p433
      %s436 = sadd.s32 %s435, 1
      %p439 = scmp.eq.s32.totalorder %s86, 1
      %p440 = scmp.ne.s32.totalorder %s435, %s437
      %p441 = scmp.eq.s32.totalorder %s86, 0
      %p442 = por %p440, %p441
      %p443 = scmp.ne.s32.totalorder %s435, %s437
      %p444 = scmp.eq.s32.totalorder %s91, 1
      %p445 = por %p443, %p444
      %p446 = scmp.ne.s32.totalorder %s437, %s438
      %p447 = scmp.eq.s32.totalorder %s91, 0
      %p448 = por %p446, %p447
      %p449 = scmp.ne.s32.totalorder %s437, %s438
      %p450 = scmp.eq.s32.totalorder %s92, 1
      %p451 = por %p449, %p450
      %p453 = scmp.ne.s32.totalorder %s438, %s452
      %p454 = scmp.eq.s32.totalorder %s92, 0
      %p455 = por %p453, %p454
      %s457 = sadd.s32 %s456, 1
      %p460 = scmp.eq.s32.totalorder %s86, 1
      %p461 = scmp.ne.s32.totalorder %s456, %s458
      %p462 = scmp.eq.s32.totalorder %s86, 0
      %p463 = por %p461, %p462
      %p464 = scmp.ne.s32.totalorder %s456, %s458
      %p465 = scmp.eq.s32.totalorder %s91, 1
      %p466 = por %p464, %p465
      %p467 = scmp.ne.s32.totalorder %s458, %s459
      %p468 = scmp.eq.s32.totalorder %s91, 0
      %p469 = por %p467, %p468
      %p470 = scmp.ne.s32.totalorder %s458, %s459
      %p471 = scmp.eq.s32.totalorder %s92, 1
      %p472 = por %p470, %p471
      %p474 = scmp.ne.s32.totalorder %s459, %s473
      %p475 = scmp.eq.s32.totalorder %s92, 0
      %p476 = por %p474, %p475
      %s478 = sadd.s32 %s477, 1
      %p481 = scmp.eq.s32.totalorder %s86, 1
      %p482 = scmp.ne.s32.totalorder %s477, %s479
      %p483 = scmp.eq.s32.totalorder %s86, 0
      %p484 = por %p482, %p483
      %p485 = scmp.ne.s32.totalorder %s477, %s479
      %p486 = scmp.eq.s32.totalorder %s91, 1
      %p487 = por %p485, %p486
      %p488 = scmp.ne.s32.totalorder %s479, %s480
      %p489 = scmp.eq.s32.totalorder %s91, 0
      %p490 = por %p488, %p489
      %p491 = scmp.ne.s32.totalorder %s479, %s480
      %p492 = scmp.eq.s32.totalorder %s92, 1
      %p493 = por %p491, %p492
      %p495 = scmp.ne.s32.totalorder %s480, %s494
      %p496 = scmp.eq.s32.totalorder %s92, 0
      %p497 = por %p495, %p496
      %s499 = sadd.s32 %s498, 1
      %p502 = scmp.eq.s32.totalorder %s86, 1
      %p503 = scmp.ne.s32.totalorder %s498, %s500
      %p504 = scmp.eq.s32.totalorder %s86, 0
      %p505 = por %p503, %p504
      %p506 = scmp.ne.s32.totalorder %s498, %s500
      %p507 = scmp.eq.s32.totalorder %s91, 1
      %p508 = por %p506, %p507
      %p509 = scmp.ne.s32.totalorder %s500, %s501
      %p510 = scmp.eq.s32.totalorder %s91, 0
      %p511 = por %p509, %p510
      %p512 = scmp.ne.s32.totalorder %s500, %s501
      %p513 = scmp.eq.s32.totalorder %s92, 1
      %p514 = por %p512, %p513
      %p516 = scmp.ne.s32.totalorder %s501, %s515
      %p517 = scmp.eq.s32.totalorder %s92, 0
      %p518 = por %p516, %p517
      %s520 = sadd.s32 %s519, 1
      %p523 = scmp.eq.s32.totalorder %s86, 1
      %p524 = scmp.ne.s32.totalorder %s519, %s521
      %p525 = scmp.eq.s32.totalorder %s86, 0
      %p526 = por %p524, %p525
      %p527 = scmp.ne.s32.totalorder %s519, %s521
      %p528 = scmp.eq.s32.totalorder %s91, 1
      %p529 = por %p527, %p528
      %p530 = scmp.ne.s32.totalorder %s521, %s522
      %p531 = scmp.eq.s32.totalorder %s91, 0
      %p532 = por %p530, %p531
      %p533 = scmp.ne.s32.totalorder %s521, %s522
      %p534 = scmp.eq.s32.totalorder %s92, 1
      %p535 = por %p533, %p534
      %p537 = scmp.ne.s32.totalorder %s522, %s536
      %p538 = scmp.eq.s32.totalorder %s92, 0
      %p539 = por %p537, %p538
      %s541 = sadd.s32 %s540, 1
      %p544 = scmp.eq.s32.totalorder %s86, 1
      %p545 = scmp.ne.s32.totalorder %s540, %s542
      %p546 = scmp.eq.s32.totalorder %s86, 0
      %p547 = por %p545, %p546
      %p548 = scmp.ne.s32.totalorder %s540, %s542
      %p549 = scmp.eq.s32.totalorder %s91, 1
      %p550 = por %p548, %p549
      %p551 = scmp.ne.s32.totalorder %s542, %s543
      %p552 = scmp.eq.s32.totalorder %s91, 0
      %p553 = por %p551, %p552
      %p554 = scmp.ne.s32.totalorder %s542, %s543
      %p555 = scmp.eq.s32.totalorder %s92, 1
      %p556 = por %p554, %p555
      %p558 = scmp.ne.s32.totalorder %s543, %s557
      %p559 = scmp.eq.s32.totalorder %s92, 0
      %p560 = por %p558, %p559
      %s562 = sadd.s32 %s561, 1
      %p565 = scmp.eq.s32.totalorder %s86, 1
      %p566 = scmp.ne.s32.totalorder %s561, %s563
      %p567 = scmp.eq.s32.totalorder %s86, 0
      %p568 = por %p566, %p567
      %p569 = scmp.ne.s32.totalorder %s561, %s563
      %p570 = scmp.eq.s32.totalorder %s91, 1
      %p571 = por %p569, %p570
      %p572 = scmp.ne.s32.totalorder %s563, %s564
      %p573 = scmp.eq.s32.totalorder %s91, 0
      %p574 = por %p572, %p573
      %p575 = scmp.ne.s32.totalorder %s563, %s564
      %p576 = scmp.eq.s32.totalorder %s92, 1
      %p577 = por %p575, %p576
      %p579 = scmp.ne.s32.totalorder %s564, %s578
      %p580 = scmp.eq.s32.totalorder %s92, 0
      %p581 = por %p579, %p580
      %s583 = sadd.s32 %s582, 1
      %p586 = scmp.eq.s32.totalorder %s86, 1
      %p587 = scmp.ne.s32.totalorder %s582, %s584
      %p588 = scmp.eq.s32.totalorder %s86, 0
      %p589 = por %p587, %p588
      %p590 = scmp.ne.s32.totalorder %s582, %s584
      %p591 = scmp.eq.s32.totalorder %s91, 1
      %p592 = por %p590, %p591
      %p593 = scmp.ne.s32.totalorder %s584, %s585
      %p594 = scmp.eq.s32.totalorder %s91, 0
      %p595 = por %p593, %p594
      %p596 = scmp.ne.s32.totalorder %s584, %s585
      %p597 = scmp.eq.s32.totalorder %s92, 1
      %p598 = por %p596, %p597
      %p600 = scmp.ne.s32.totalorder %s585, %s599
      %p601 = scmp.eq.s32.totalorder %s92, 0
      %p602 = por %p600, %p601
      %s604 = sadd.s32 %s603, 1
      %p607 = scmp.eq.s32.totalorder %s86, 1
      %p608 = scmp.ne.s32.totalorder %s603, %s605
      %p609 = scmp.eq.s32.totalorder %s86, 0
      %p610 = por %p608, %p609
      %p611 = scmp.ne.s32.totalorder %s603, %s605
      %p612 = scmp.eq.s32.totalorder %s91, 1
      %p613 = por %p611, %p612
      %p614 = scmp.ne.s32.totalorder %s605, %s606
      %p615 = scmp.eq.s32.totalorder %s91, 0
      %p616 = por %p614, %p615
      %p617 = scmp.ne.s32.totalorder %s605, %s606
      %p618 = scmp.eq.s32.totalorder %s92, 1
      %p619 = por %p617, %p618
      %p621 = scmp.ne.s32.totalorder %s606, %s620
      %p622 = scmp.eq.s32.totalorder %s92, 0
      %p623 = por %p621, %p622
      %s625 = sadd.s32 %s624, 1
      %p628 = scmp.eq.s32.totalorder %s86, 1
      %p629 = scmp.ne.s32.totalorder %s624, %s626
      %p630 = scmp.eq.s32.totalorder %s86, 0
      %p631 = por %p629, %p630
      %p632 = scmp.ne.s32.totalorder %s624, %s626
      %p633 = scmp.eq.s32.totalorder %s91, 1
      %p634 = por %p632, %p633
      %p635 = scmp.ne.s32.totalorder %s626, %s627
      %p636 = scmp.eq.s32.totalorder %s91, 0
      %p637 = por %p635, %p636
      %p638 = scmp.ne.s32.totalorder %s626, %s627
      %p639 = scmp.eq.s32.totalorder %s92, 1
      %p640 = por %p638, %p639
      %p642 = scmp.ne.s32.totalorder %s627, %s641
      %p643 = scmp.eq.s32.totalorder %s92, 0
      %p644 = por %p642, %p643
      %s646 = sadd.s32 %s645, 1
      %p649 = scmp.eq.s32.totalorder %s86, 1
      %p650 = scmp.ne.s32.totalorder %s645, %s647
      %p651 = scmp.eq.s32.totalorder %s86, 0
      %p652 = por %p650, %p651
      %p653 = scmp.ne.s32.totalorder %s645, %s647
      %p654 = scmp.eq.s32.totalorder %s91, 1
      %p655 = por %p653, %p654
      %p656 = scmp.ne.s32.totalorder %s647, %s648
      %p657 = scmp.eq.s32.totalorder %s91, 0
      %p658 = por %p656, %p657
      %p659 = scmp.ne.s32.totalorder %s647, %s648
      %p660 = scmp.eq.s32.totalorder %s92, 1
      %p661 = por %p659, %p660
      %p663 = scmp.ne.s32.totalorder %s648, %s662
      %p664 = scmp.eq.s32.totalorder %s92, 0
      %p665 = por %p663, %p664
      %s667 = sadd.s32 %s666, 1
      %p670 = scmp.eq.s32.totalorder %s86, 1
      %p671 = scmp.ne.s32.totalorder %s666, %s668
      %p672 = scmp.eq.s32.totalorder %s86, 0
      %p673 = por %p671, %p672
      %p674 = scmp.ne.s32.totalorder %s666, %s668
      %p675 = scmp.eq.s32.totalorder %s91, 1
      %p676 = por %p674, %p675
      %p677 = scmp.ne.s32.totalorder %s668, %s669
      %p678 = scmp.eq.s32.totalorder %s91, 0
      %p679 = por %p677, %p678
      %p680 = scmp.ne.s32.totalorder %s668, %s669
      %p681 = scmp.eq.s32.totalorder %s92, 1
      %p682 = por %p680, %p681
      %p684 = scmp.ne.s32.totalorder %s669, %s683
      %p685 = scmp.eq.s32.totalorder %s92, 0
      %p686 = por %p684, %p685
      %s688 = sadd.s32 %s687, 1
      %p691 = scmp.eq.s32.totalorder %s86, 1
      %p692 = scmp.ne.s32.totalorder %s687, %s689
      %p693 = scmp.eq.s32.totalorder %s86, 0
      %p694 = por %p692, %p693
      %p695 = scmp.ne.s32.totalorder %s687, %s689
      %p696 = scmp.eq.s32.totalorder %s91, 1
      %p697 = por %p695, %p696
      %p698 = scmp.ne.s32.totalorder %s689, %s690
      %p699 = scmp.eq.s32.totalorder %s91, 0
      %p700 = por %p698, %p699
      %p701 = scmp.ne.s32.totalorder %s689, %s690
      %p702 = scmp.eq.s32.totalorder %s92, 1
      %p703 = por %p701, %p702
      %p705 = scmp.ne.s32.totalorder %s690, %s704
      %p706 = scmp.eq.s32.totalorder %s92, 0
      %p707 = por %p705, %p706
      %s709 = sadd.s32 %s708, 1
      %p712 = scmp.eq.s32.totalorder %s86, 1
      %p713 = scmp.ne.s32.totalorder %s708, %s710
      %p714 = scmp.eq.s32.totalorder %s86, 0
      %p715 = por %p713, %p714
      %p716 = scmp.ne.s32.totalorder %s708, %s710
      %p717 = scmp.eq.s32.totalorder %s91, 1
      %p718 = por %p716, %p717
      %p719 = scmp.ne.s32.totalorder %s710, %s711
      %p720 = scmp.eq.s32.totalorder %s91, 0
      %p721 = por %p719, %p720
      %p722 = scmp.ne.s32.totalorder %s710, %s711
      %p723 = scmp.eq.s32.totalorder %s92, 1
      %p724 = por %p722, %p723
      %p726 = scmp.ne.s32.totalorder %s711, %s725
      %p727 = scmp.eq.s32.totalorder %s92, 0
      %p728 = por %p726, %p727
      %s730 = sadd.s32 %s729, 1
      %p733 = scmp.eq.s32.totalorder %s86, 1
      %p734 = scmp.ne.s32.totalorder %s729, %s731
      %p735 = scmp.eq.s32.totalorder %s86, 0
      %p736 = por %p734, %p735
      %p737 = scmp.ne.s32.totalorder %s729, %s731
      %p738 = scmp.eq.s32.totalorder %s91, 1
      %p739 = por %p737, %p738
      %p740 = scmp.ne.s32.totalorder %s731, %s732
      %p741 = scmp.eq.s32.totalorder %s91, 0
      %p742 = por %p740, %p741
      %p743 = scmp.ne.s32.totalorder %s731, %s732
      %p744 = scmp.eq.s32.totalorder %s92, 1
      %p745 = por %p743, %p744
      %p747 = scmp.ne.s32.totalorder %s732, %s746
      %p748 = scmp.eq.s32.totalorder %s92, 0
      %p749 = por %p747, %p748
      %s751 = sadd.s32 %s750, 1
      %p754 = scmp.eq.s32.totalorder %s86, 1
      %p755 = scmp.ne.s32.totalorder %s750, %s752
      %p756 = scmp.eq.s32.totalorder %s86, 0
      %p757 = por %p755, %p756
      %p758 = scmp.ne.s32.totalorder %s750, %s752
      %p759 = scmp.eq.s32.totalorder %s91, 1
      %p760 = por %p758, %p759
      %p761 = scmp.ne.s32.totalorder %s752, %s753
      %p762 = scmp.eq.s32.totalorder %s91, 0
      %p763 = por %p761, %p762
      %p764 = scmp.ne.s32.totalorder %s752, %s753
      %p765 = scmp.eq.s32.totalorder %s92, 1
      %p766 = por %p764, %p765
      %p768 = scmp.ne.s32.totalorder %s753, %s767
      %p769 = scmp.eq.s32.totalorder %s92, 0
      %p770 = por %p768, %p769
      %s772 = sadd.s32 %s771, 1
      %p775 = scmp.eq.s32.totalorder %s86, 1
      %p776 = scmp.ne.s32.totalorder %s771, %s773
      %p777 = scmp.eq.s32.totalorder %s86, 0
      %p778 = por %p776, %p777
      %p779 = scmp.ne.s32.totalorder %s771, %s773
      %p780 = scmp.eq.s32.totalorder %s91, 1
      %p781 = por %p779, %p780
      %p782 = scmp.ne.s32.totalorder %s773, %s774
      %p783 = scmp.eq.s32.totalorder %s91, 0
      %p784 = por %p782, %p783
      %p785 = scmp.ne.s32.totalorder %s773, %s774
      %p786 = scmp.eq.s32.totalorder %s92, 1
      %p787 = por %p785, %p786
      %p789 = scmp.ne.s32.totalorder %s774, %s788
      %p790 = scmp.eq.s32.totalorder %s92, 0
      %p791 = por %p789, %p790
      %s792 = ssub.s32 %s86, %s93
      %p793 = scmp.eq.s32.totalorder %s792, 0
      %s795 = sadd.s32 %s794, 1
      %s796 = scalar_select %p793, %s794, %s795
      %p799 = pneg %p793
      %p800 = scmp.eq.s32.totalorder %s86, 1
      %p801 = por %p799, %p800
      %p802 = scmp.ne.s32.totalorder %s794, %s797
      %p803 = scmp.eq.s32.totalorder %s86, 0
      %p804 = por %p802, %p803
      %p805 = scmp.ne.s32.totalorder %s794, %s797
      %p806 = scmp.eq.s32.totalorder %s91, 1
      %p807 = por %p805, %p806
      %p808 = scmp.ne.s32.totalorder %s797, %s798
      %p809 = scmp.eq.s32.totalorder %s91, 0
      %p810 = por %p808, %p809
      %p811 = scmp.ne.s32.totalorder %s797, %s798
      %p812 = scmp.eq.s32.totalorder %s92, 1
      %p813 = por %p811, %p812
      %p815 = scmp.ne.s32.totalorder %s798, %s814
      %p816 = scmp.eq.s32.totalorder %s92, 0
      %p817 = por %p815, %p816
      %s818 = ssub.s32 %s86, %s93
      %p819 = scmp.eq.s32.totalorder %s818, 0
      %s821 = sadd.s32 %s820, 1
      %s822 = scalar_select %p819, %s820, %s821
      %p825 = pneg %p819
      %p826 = scmp.eq.s32.totalorder %s86, 1
      %p827 = por %p825, %p826
      %p828 = scmp.ne.s32.totalorder %s820, %s823
      %p829 = scmp.eq.s32.totalorder %s86, 0
      %p830 = por %p828, %p829
      %p831 = scmp.ne.s32.totalorder %s820, %s823
      %p832 = scmp.eq.s32.totalorder %s91, 1
      %p833 = por %p831, %p832
      %p834 = scmp.ne.s32.totalorder %s823, %s824
      %p835 = scmp.eq.s32.totalorder %s91, 0
      %p836 = por %p834, %p835
      %p837 = scmp.ne.s32.totalorder %s823, %s824
      %p838 = scmp.eq.s32.totalorder %s92, 1
      %p839 = por %p837, %p838
      %p841 = scmp.ne.s32.totalorder %s824, %s840
      %p842 = scmp.eq.s32.totalorder %s92, 0
      %p843 = por %p841, %p842
      %p844 = scmp.le.s32.totalorder 1, %s86
      %p845 = scmp.lt.s32.totalorder %s86, 3
      %p846 = pnand %p844, %p845
      %p847 = pneg %p846
      // Predicated region
      $region9: #{tpu_custom_call.1} parent=5 // pred_check
        _
      $region10: #{tpu_custom_call.1} parent=5 // pred_check_branch
        %849 = sbr.rel (%p846) target = $region12
      $region11: #{tpu_custom_call.1} parent=5 // pred_region
        %s850 = ssub.s32 %s86, 1
        // Predicated region
        $region13: #{tpu_custom_call.1} parent=11 // pred_check
          %p851 = pneg %p133
        $region14: #{tpu_custom_call.1} parent=11 // pred_check_branch
          %853 = sbr.rel (%p851) target = $region16
        $region15: #{tpu_custom_call.1} parent=11 // pred_region
          _
        $region16: #{tpu_custom_call.1} parent=11 // pred_fallthru
          _
        // Predicated region
        $region17: #{tpu_custom_call.1} parent=11 // pred_check
          %p854 = pneg %p154
        $region18: #{tpu_custom_call.1} parent=11 // pred_check_branch
          %856 = sbr.rel (%p854) target = $region20
        $region19: #{tpu_custom_call.1} parent=11 // pred_region
          _
        $region20: #{tpu_custom_call.1} parent=11 // pred_fallthru
          _
        // Predicated region
        $region21: #{tpu_custom_call.1} parent=11 // pred_check
          %p857 = pneg %p175
        $region22: #{tpu_custom_call.1} parent=11 // pred_check_branch
          %859 = sbr.rel (%p857) target = $region24
        $region23: #{tpu_custom_call.1} parent=11 // pred_region
          %861 = vsyncadd [#allocation8], 0
          %s863 = sshll.u32 %s7, 4
          %s864 = int_to_ptr.hbm [resolvable:$true] %s863
          %s865 = sshll.u32 [#allocation7], 4
          %s866 = int_to_ptr.vmem [resolvable:$true] %s865
          %868 = dma.hbm_to_vmem [thread:$0]  %s864, 16, %s866, [#allocation8]
        $region24: #{tpu_custom_call.1} parent=11 // pred_fallthru
          _
        // Predicated region
        $region25: #{tpu_custom_call.1} parent=11 // pred_check
          %p869 = pneg %p196
        $region26: #{tpu_custom_call.1} parent=11 // pred_check_branch
          %871 = sbr.rel (%p869) target = $region28
        $region27: #{tpu_custom_call.1} parent=11 // pred_region
          _
        $region28: #{tpu_custom_call.1} parent=11 // pred_fallthru
          _
        // Predicated region
        $region29: #{tpu_custom_call.1} parent=11 // pred_check
          %p872 = pneg %p217
        $region30: #{tpu_custom_call.1} parent=11 // pred_check_branch
          %874 = sbr.rel (%p872) target = $region32
        $region31: #{tpu_custom_call.1} parent=11 // pred_region
          %876 = vsyncadd [#allocation11], 0
          %s878 = sshll.u32 %s11, 4
          %s879 = int_to_ptr.hbm [resolvable:$true] %s878
          %s880 = sshll.u32 [#allocation10], 4
          %s881 = int_to_ptr.vmem [resolvable:$true] %s880
          %883 = dma.hbm_to_vmem [thread:$0]  %s879, 16, %s881, [#allocation11]
        $region32: #{tpu_custom_call.1} parent=11 // pred_fallthru
          _
        // Predicated region
        $region33: #{tpu_custom_call.1} parent=11 // pred_check
          %p884 = pneg %p238
        $region34: #{tpu_custom_call.1} parent=11 // pred_check_branch
          %886 = sbr.rel (%p884) target = $region36
        $region35: #{tpu_custom_call.1} parent=11 // pred_region
          _
        $region36: #{tpu_custom_call.1} parent=11 // pred_fallthru
          _
        // Predicated region
        $region37: #{tpu_custom_call.1} parent=11 // pred_check
          %p887 = pneg %p259
        $region38: #{tpu_custom_call.1} parent=11 // pred_check_branch
          %889 = sbr.rel (%p887) target = $region40
        $region39: #{tpu_custom_call.1} parent=11 // pred_region
          %891 = vsyncadd [#allocation11], 0
          %s893 = sshll.u32 %s15, 4
          %s894 = int_to_ptr.hbm [resolvable:$true] %s893
          %s895 = sshll.u32 [#allocation12], 4
          %s896 = int_to_ptr.vmem [resolvable:$true] %s895
          %898 = dma.hbm_to_vmem [thread:$0]  %s894, 16, %s896, [#allocation11]
        $region40: #{tpu_custom_call.1} parent=11 // pred_fallthru
          _
        // Predicated region
        $region41: #{tpu_custom_call.1} parent=11 // pred_check
          %p899 = pneg %p280
        $region42: #{tpu_custom_call.1} parent=11 // pred_check_branch
          %901 = sbr.rel (%p899) target = $region44
        $region43: #{tpu_custom_call.1} parent=11 // pred_region
          %903 = vsyncadd [#allocation14], 0
          %s905 = sshll.u32 %s17, 4
          %s906 = int_to_ptr.hbm [resolvable:$true] %s905
          %s907 = sshll.u32 [#allocation13], 4
          %s908 = int_to_ptr.vmem [resolvable:$true] %s907
          %910 = dma.hbm_to_vmem [thread:$0]  %s906, 16, %s908, [#allocation14]
        $region44: #{tpu_custom_call.1} parent=11 // pred_fallthru
          _
        // Predicated region
        $region45: #{tpu_custom_call.1} parent=11 // pred_check
          %p911 = pneg %p301
        $region46: #{tpu_custom_call.1} parent=11 // pred_check_branch
          %913 = sbr.rel (%p911) target = $region48
        $region47: #{tpu_custom_call.1} parent=11 // pred_region
          %915 = vsyncadd [#allocation14], 0
          %s917 = sshll.u32 %s19, 4
          %s918 = int_to_ptr.hbm [resolvable:$true] %s917
          %s919 = sshll.u32 [#allocation15], 4
          %s920 = int_to_ptr.vmem [resolvable:$true] %s919
          %922 = dma.hbm_to_vmem [thread:$0]  %s918, 16, %s920, [#allocation14]
        $region48: #{tpu_custom_call.1} parent=11 // pred_fallthru
          _
        // Predicated region
        $region49: #{tpu_custom_call.1} parent=11 // pred_check
          %p923 = pneg %p322
        $region50: #{tpu_custom_call.1} parent=11 // pred_check_branch
          %925 = sbr.rel (%p923) target = $region52
        $region51: #{tpu_custom_call.1} parent=11 // pred_region
          _
        $region52: #{tpu_custom_call.1} parent=11 // pred_fallthru
          _
        // Predicated region
        $region53: #{tpu_custom_call.1} parent=11 // pred_check
          %p926 = pneg %p343
        $region54: #{tpu_custom_call.1} parent=11 // pred_check_branch
          %928 = sbr.rel (%p926) target = $region56
        $region55: #{tpu_custom_call.1} parent=11 // pred_region
          %930 = vsyncadd [#allocation17], 0
          %s932 = sshll.u32 %s23, 4
          %s933 = int_to_ptr.hbm [resolvable:$true] %s932
          %s934 = sshll.u32 [#allocation16], 4
          %s935 = int_to_ptr.vmem [resolvable:$true] %s934
          %937 = dma.hbm_to_vmem [thread:$0]  %s933, 16, %s935, [#allocation17]
        $region56: #{tpu_custom_call.1} parent=11 // pred_fallthru
          _
        // Predicated region
        $region57: #{tpu_custom_call.1} parent=11 // pred_check
          %p938 = pneg %p364
        $region58: #{tpu_custom_call.1} parent=11 // pred_check_branch
          %940 = sbr.rel (%p938) target = $region60
        $region59: #{tpu_custom_call.1} parent=11 // pred_region
          _
        $region60: #{tpu_custom_call.1} parent=11 // pred_fallthru
          _
        // Predicated region
        $region61: #{tpu_custom_call.1} parent=11 // pred_check
          %p941 = pneg %p385
        $region62: #{tpu_custom_call.1} parent=11 // pred_check_branch
          %943 = sbr.rel (%p941) target = $region64
        $region63: #{tpu_custom_call.1} parent=11 // pred_region
          _
        $region64: #{tpu_custom_call.1} parent=11 // pred_fallthru
          _
        // Predicated region
        $region65: #{tpu_custom_call.1} parent=11 // pred_check
          %p944 = pneg %p406
        $region66: #{tpu_custom_call.1} parent=11 // pred_check_branch
          %946 = sbr.rel (%p944) target = $region68
        $region67: #{tpu_custom_call.1} parent=11 // pred_region
          _
        $region68: #{tpu_custom_call.1} parent=11 // pred_fallthru
          _
        // Predicated region
        $region69: #{tpu_custom_call.1} parent=11 // pred_check
          %p947 = pneg %p427
        $region70: #{tpu_custom_call.1} parent=11 // pred_check_branch
          %949 = sbr.rel (%p947) target = $region72
        $region71: #{tpu_custom_call.1} parent=11 // pred_region
          _
        $region72: #{tpu_custom_call.1} parent=11 // pred_fallthru
          _
        // Predicated region
        $region73: #{tpu_custom_call.1} parent=11 // pred_check
          %p950 = pneg %p448
        $region74: #{tpu_custom_call.1} parent=11 // pred_check_branch
          %952 = sbr.rel (%p950) target = $region76
        $region75: #{tpu_custom_call.1} parent=11 // pred_region
          _
        $region76: #{tpu_custom_call.1} parent=11 // pred_fallthru
          _
        // Predicated region
        $region77: #{tpu_custom_call.1} parent=11 // pred_check
          %p953 = pneg %p469
        $region78: #{tpu_custom_call.1} parent=11 // pred_check_branch
          %955 = sbr.rel (%p953) target = $region80
        $region79: #{tpu_custom_call.1} parent=11 // pred_region
          _
        $region80: #{tpu_custom_call.1} parent=11 // pred_fallthru
          _
        // Predicated region
        $region81: #{tpu_custom_call.1} parent=11 // pred_check
          %p956 = pneg %p490
        $region82: #{tpu_custom_call.1} parent=11 // pred_check_branch
          %958 = sbr.rel (%p956) target = $region84
        $region83: #{tpu_custom_call.1} parent=11 // pred_region
          _
        $region84: #{tpu_custom_call.1} parent=11 // pred_fallthru
          _
        // Predicated region
        $region85: #{tpu_custom_call.1} parent=11 // pred_check
          %p959 = pneg %p511
        $region86: #{tpu_custom_call.1} parent=11 // pred_check_branch
          %961 = sbr.rel (%p959) target = $region88
        $region87: #{tpu_custom_call.1} parent=11 // pred_region
          _
        $region88: #{tpu_custom_call.1} parent=11 // pred_fallthru
          _
        // Predicated region
        $region89: #{tpu_custom_call.1} parent=11 // pred_check
          %p962 = pneg %p532
        $region90: #{tpu_custom_call.1} parent=11 // pred_check_branch
          %964 = sbr.rel (%p962) target = $region92
        $region91: #{tpu_custom_call.1} parent=11 // pred_region
          _
        $region92: #{tpu_custom_call.1} parent=11 // pred_fallthru
          _
        // Predicated region
        $region93: #{tpu_custom_call.1} parent=11 // pred_check
          %p965 = pneg %p553
        $region94: #{tpu_custom_call.1} parent=11 // pred_check_branch
          %967 = sbr.rel (%p965) target = $region96
        $region95: #{tpu_custom_call.1} parent=11 // pred_region
          _
        $region96: #{tpu_custom_call.1} parent=11 // pred_fallthru
          _
        // Predicated region
        $region97: #{tpu_custom_call.1} parent=11 // pred_check
          %p968 = pneg %p574
        $region98: #{tpu_custom_call.1} parent=11 // pred_check_branch
          %970 = sbr.rel (%p968) target = $region100
        $region99: #{tpu_custom_call.1} parent=11 // pred_region
          _
        $region100: #{tpu_custom_call.1} parent=11 // pred_fallthru
          _
        // Predicated region
        $region101: #{tpu_custom_call.1} parent=11 // pred_check
          %p971 = pneg %p595
        $region102: #{tpu_custom_call.1} parent=11 // pred_check_branch
          %973 = sbr.rel (%p971) target = $region104
        $region103: #{tpu_custom_call.1} parent=11 // pred_region
          _
        $region104: #{tpu_custom_call.1} parent=11 // pred_fallthru
          _
        // Predicated region
        $region105: #{tpu_custom_call.1} parent=11 // pred_check
          %p974 = pneg %p616
        $region106: #{tpu_custom_call.1} parent=11 // pred_check_branch
          %976 = sbr.rel (%p974) target = $region108
        $region107: #{tpu_custom_call.1} parent=11 // pred_region
          _
        $region108: #{tpu_custom_call.1} parent=11 // pred_fallthru
          _
        // Predicated region
        $region109: #{tpu_custom_call.1} parent=11 // pred_check
          %p977 = pneg %p637
        $region110: #{tpu_custom_call.1} parent=11 // pred_check_branch
          %979 = sbr.rel (%p977) target = $region112
        $region111: #{tpu_custom_call.1} parent=11 // pred_region
          _
        $region112: #{tpu_custom_call.1} parent=11 // pred_fallthru
          _
        // Predicated region
        $region113: #{tpu_custom_call.1} parent=11 // pred_check
          %p980 = pneg %p658
        $region114: #{tpu_custom_call.1} parent=11 // pred_check_branch
          %982 = sbr.rel (%p980) target = $region116
        $region115: #{tpu_custom_call.1} parent=11 // pred_region
          _
        $region116: #{tpu_custom_call.1} parent=11 // pred_fallthru
          _
        // Predicated region
        $region117: #{tpu_custom_call.1} parent=11 // pred_check
          %p983 = pneg %p679
        $region118: #{tpu_custom_call.1} parent=11 // pred_check_branch
          %985 = sbr.rel (%p983) target = $region120
        $region119: #{tpu_custom_call.1} parent=11 // pred_region
          _
        $region120: #{tpu_custom_call.1} parent=11 // pred_fallthru
          _
        // Predicated region
        $region121: #{tpu_custom_call.1} parent=11 // pred_check
          %p986 = pneg %p700
        $region122: #{tpu_custom_call.1} parent=11 // pred_check_branch
          %988 = sbr.rel (%p986) target = $region124
        $region123: #{tpu_custom_call.1} parent=11 // pred_region
          _
        $region124: #{tpu_custom_call.1} parent=11 // pred_fallthru
          _
        // Predicated region
        $region125: #{tpu_custom_call.1} parent=11 // pred_check
          %p989 = pneg %p721
        $region126: #{tpu_custom_call.1} parent=11 // pred_check_branch
          %991 = sbr.rel (%p989) target = $region128
        $region127: #{tpu_custom_call.1} parent=11 // pred_region
          _
        $region128: #{tpu_custom_call.1} parent=11 // pred_fallthru
          _
        // Predicated region
        $region129: #{tpu_custom_call.1} parent=11 // pred_check
          %p992 = pneg %p742
        $region130: #{tpu_custom_call.1} parent=11 // pred_check_branch
          %994 = sbr.rel (%p992) target = $region132
        $region131: #{tpu_custom_call.1} parent=11 // pred_region
          _
        $region132: #{tpu_custom_call.1} parent=11 // pred_fallthru
          _
        // Predicated region
        $region133: #{tpu_custom_call.1} parent=11 // pred_check
          %p995 = pneg %p763
        $region134: #{tpu_custom_call.1} parent=11 // pred_check_branch
          %997 = sbr.rel (%p995) target = $region136
        $region135: #{tpu_custom_call.1} parent=11 // pred_region
          _
        $region136: #{tpu_custom_call.1} parent=11 // pred_fallthru
          _
        // Predicated region
        $region137: #{tpu_custom_call.1} parent=11 // pred_check
          %p998 = pneg %p784
        $region138: #{tpu_custom_call.1} parent=11 // pred_check_branch
          %1000 = sbr.rel (%p998) target = $region140
        $region139: #{tpu_custom_call.1} parent=11 // pred_region
          _
        $region140: #{tpu_custom_call.1} parent=11 // pred_fallthru
          _
      $region12: #{tpu_custom_call.1} parent=5 // pred_fallthru
        _
      %p1001 = scmp.lt.s32.totalorder %s86, 2
      // Predicated region
      $region141: #{tpu_custom_call.1} parent=5 // pred_check
        %p1002 = pneg %p1001
      $region142: #{tpu_custom_call.1} parent=5 // pred_check_branch
        %1004 = sbr.rel (%p1002) target = $region144
      $region143: #{tpu_custom_call.1} parent=5 // pred_region
        // Predicated region
        $region145: #{tpu_custom_call.1} parent=143 // pred_check
          %p1005 = pneg %p106
        $region146: #{tpu_custom_call.1} parent=143 // pred_check_branch
          %1007 = sbr.rel (%p1005) target = $region148
        $region147: #{tpu_custom_call.1} parent=143 // pred_region
          %p1008 = scmp.lt.s32.totalorder %s86, 1
          %s1009 = scalar_select %p1008, %s86, 1
          %s1010 = smul.addr %s1009, 8
          %s1011 = scalar_lea.vmem %s1, %s1010
        $region148: #{tpu_custom_call.1} parent=143 // pred_fallthru
          _
      $region144: #{tpu_custom_call.1} parent=5 // pred_fallthru
        _
      %p1012 = scmp.le.s32.totalorder 1, %s86
      %p1013 = scmp.lt.s32.totalorder %s86, 3
      %p1014 = pnand %p1012, %p1013
      %p1015 = pneg %p1014
      // Predicated region
      $region149: #{tpu_custom_call.1} parent=5 // pred_check
        _
      $region150: #{tpu_custom_call.1} parent=5 // pred_check_branch
        %1017 = sbr.rel (%p1014) target = $region152
      $region151: #{tpu_custom_call.1} parent=5 // pred_region
        %s1018 = ssub.s32 %s86, 1
        // Predicated region
        $region153: #{tpu_custom_call.1} parent=151 // pred_check
          %p1019 = pneg %p175
        $region154: #{tpu_custom_call.1} parent=151 // pred_check_branch
          %1021 = sbr.rel (%p1019) target = $region156
        $region155: #{tpu_custom_call.1} parent=151 // pred_region
          %1023 = dma.done [#allocation8], 16
        $region156: #{tpu_custom_call.1} parent=151 // pred_fallthru
          _
        // Predicated region
        $region157: #{tpu_custom_call.1} parent=151 // pred_check
          %p1024 = pneg %p217
        $region158: #{tpu_custom_call.1} parent=151 // pred_check_branch
          %1026 = sbr.rel (%p1024) target = $region160
        $region159: #{tpu_custom_call.1} parent=151 // pred_region
          %1028 = dma.done [#allocation11], 16
        $region160: #{tpu_custom_call.1} parent=151 // pred_fallthru
          _
        // Predicated region
        $region161: #{tpu_custom_call.1} parent=151 // pred_check
          %p1029 = pneg %p259
        $region162: #{tpu_custom_call.1} parent=151 // pred_check_branch
          %1031 = sbr.rel (%p1029) target = $region164
        $region163: #{tpu_custom_call.1} parent=151 // pred_region
          %1033 = dma.done [#allocation11], 16
        $region164: #{tpu_custom_call.1} parent=151 // pred_fallthru
          _
        // Predicated region
        $region165: #{tpu_custom_call.1} parent=151 // pred_check
          %p1034 = pneg %p280
        $region166: #{tpu_custom_call.1} parent=151 // pred_check_branch
          %1036 = sbr.rel (%p1034) target = $region168
        $region167: #{tpu_custom_call.1} parent=151 // pred_region
          %1038 = dma.done [#allocation14], 16
        $region168: #{tpu_custom_call.1} parent=151 // pred_fallthru
          _
        // Predicated region
        $region169: #{tpu_custom_call.1} parent=151 // pred_check
          %p1039 = pneg %p301
        $region170: #{tpu_custom_call.1} parent=151 // pred_check_branch
          %1041 = sbr.rel (%p1039) target = $region172
        $region171: #{tpu_custom_call.1} parent=151 // pred_region
          %1043 = dma.done [#allocation14], 16
        $region172: #{tpu_custom_call.1} parent=151 // pred_fallthru
          _
        // Predicated region
        $region173: #{tpu_custom_call.1} parent=151 // pred_check
          %p1044 = pneg %p343
        $region174: #{tpu_custom_call.1} parent=151 // pred_check_branch
          %1046 = sbr.rel (%p1044) target = $region176
        $region175: #{tpu_custom_call.1} parent=151 // pred_region
          %1048 = dma.done [#allocation17], 16
        $region176: #{tpu_custom_call.1} parent=151 // pred_fallthru
          _
        %p1049 = scmp.lt.s32.totalorder %s91, 1
        %s1050 = scalar_select %p1049, %s91, 1
        %s1051 = smul.addr %s1050, 8
        %s1052 = scalar_lea.vmem %s1, %s1051
        %p1053 = pneg %p112
        %p1054 = pneg %p109
        %p1055 = pneg %p133
        %p1056 = pneg %p130
        %p1057 = pneg %p154
        %p1058 = pneg %p151
        %p1059 = pneg %p175
        %p1060 = pneg %p172
        %p1061 = pneg %p196
        %p1062 = pneg %p193
        %p1063 = pneg %p217
        %p1064 = pneg %p214
        %p1065 = pneg %p238
        %p1066 = pneg %p235
        %p1067 = pneg %p259
        %p1068 = pneg %p256
        %p1069 = pneg %p280
        %p1070 = pneg %p277
        %p1071 = pneg %p301
        %p1072 = pneg %p298
        %p1073 = pneg %p322
        %p1074 = pneg %p319
        %p1075 = pneg %p343
        %p1076 = pneg %p340
        %p1077 = pneg %p364
        %p1078 = pneg %p361
        %p1079 = pneg %p385
        %p1080 = pneg %p382
        %p1081 = pneg %p406
        %p1082 = pneg %p403
        %p1083 = pneg %p427
        %p1084 = pneg %p424
        %p1085 = pneg %p448
        %p1086 = pneg %p445
        %p1087 = pneg %p469
        %p1088 = pneg %p466
        %p1089 = pneg %p490
        %p1090 = pneg %p487
        %p1091 = pneg %p511
        %p1092 = pneg %p508
        %p1093 = pneg %p532
        %p1094 = pneg %p529
        %p1095 = pneg %p553
        %p1096 = pneg %p550
        %p1097 = pneg %p574
        %p1098 = pneg %p571
        %p1099 = pneg %p595
        %p1100 = pneg %p592
        %p1101 = pneg %p616
        %p1102 = pneg %p613
        %p1103 = pneg %p637
        %p1104 = pneg %p634
        %p1105 = pneg %p658
        %p1106 = pneg %p655
        %p1107 = pneg %p679
        %p1108 = pneg %p676
        %p1109 = pneg %p700
        %p1110 = pneg %p697
        %p1111 = pneg %p721
        %p1112 = pneg %p718
        %p1113 = pneg %p742
        %p1114 = pneg %p739
        %p1115 = pneg %p763
        %p1116 = pneg %p760
        %p1117 = pneg %p784
        %p1118 = pneg %p781
        %p1119 = pneg %p810
        %p1120 = pneg %p807
        %s1121 = sand.u32 %s797, 1
        %s1122 = scalar_lea.sflag [#allocation9], %s1121
        %s1123 = sand.u32 %s797, 1
        %s1124 = smul.addr %s1123, 8
        %s1125 = scalar_lea.vmem [#allocation18], %s1124
        %p1126 = pneg %p836
        %p1127 = pneg %p833
        %s1128 = sand.u32 %s823, 1
        %s1129 = scalar_lea.sflag [#allocation20], %s1128
        %s1130 = sand.u32 %s823, 1
        %s1131 = smul.addr %s1130, 32
        %s1132 = scalar_lea.vmem [#allocation19], %s1131
        %p1133 = scmp.lt.s32.totalorder %s91, 1
        %s1134 = scalar_select %p1133, %s91, 1
        %s1135 = smul.addr %s1134, 8
        %s1136 = scalar_lea.vmem %s1, %s1135
        %v1138 = vld [vmem:[%s1136] sm:$0xff]
        %v1139 = vld [vmem:[%s5] sm:$0x1]
        %v1140 = vld [vmem:[#allocation7] sm:$0x1]
        %vm1141 = vcmask 261120
        %v1142 = vsel %vm1141, %v1138, 0.0
        %1143 = vadd.xlane.f32.xlu0 %v1142
        %v1144 = vpop.xlane.xlu0 %1143
        %v1145 = vrcp.pop 32.0
        %v1146 = vmul.f32 32.0, %v1145
        %v1147 = vsub.f32 1.0, %v1146
        %v1148 = vmul.f32 %v1145, %v1147
        %v1149 = vadd.f32 %v1145, %v1148
        %vm1150 = vweird.f32 %v1145
        %v1151 = vsel %vm1150, %v1145, %v1149
        %v1152 = vmul.f32 %v1144, %v1151
        %v1153 = vsub.f32 %v1138, %v1152
        %v1154 = vmul.f32 %v1153, %v1153
        %v1155 = vsel %vm1141, %v1154, 0.0
        %1156 = vadd.xlane.f32.xlu0 %v1155
        %v1157 = vpop.xlane.xlu0 %1156
        %v1158 = vmul.f32 %v1157, %v1151
        %v1159 = vadd.f32 %v1158, 1e-05
        %v1160 = vrsqrt.pop %v1159
        %v1161 = vmul.f32 %v1160, %v1159
        %v1162 = vmul.f32 %v1161, %v1160
        %v1163 = vmul.f32 0.5, %v1162
        %v1164 = vsub.f32 1.5, %v1163
        %v1165 = vmul.f32 %v1160, %v1164
        %vm1166 = vweird.f32 %v1159
        %vm1167 = vweird.f32 %v1160
        %vm1168 = vmor %vm1166, %vm1167
        %v1169 = vsel %vm1168, %v1160, %v1165
        %v1170 = vmul.f32 %v1153, %v1169
        %v1172 = vperm.slane %v1139, 0
        %v1174 = vmul.f32 %v1170, %v1172
        %v1176 = vperm.slane %v1140, 0
        %v1178 = vadd.f32 %v1174, %v1176
        %v1179 = vpack.c.bf16 %v1178, %v1178
        %v1180 = vld [vmem:[%s9] sm:$0xf]
        %v1181 = vld [vmem:[%s9 + $0x4] sm:$0xf]
        %v1182 = vld [vmem:[%s9 + $0x8] sm:$0xf]
        %v1183 = vld [vmem:[%s9 + $0xc] sm:$0xf]
        %v1184 = vld [vmem:[#allocation10] sm:$0x1]
        %v1186 = vperm.slane %v1184, 0
        %v1192 = vunpack.c.l.b16 %v1180
        %v1193 = vunpack.c.l.b16 %v1181
        %v1194 = vunpack.c.l.b16 %v1182
        %v1195 = vunpack.c.l.b16 %v1183
        %v1196 = vpack.c.b16 %v1193, %v1192
        %v1197 = vpack.c.b16 %v1195, %v1194
        %v1201 = vsel %vm1141, %v1179, 0
        %1203 = vmatpush.bf16.msra.mxu0 0
        %1204 = vmatpush.bf16.msra.mxu0 0
        %1205 = vmatpush.bf16.msra.mxu0 0
        %1206 = vmatpush.bf16.msra.mxu0 0
        %1207 = vmatpush.bf16.msra.mxu0 0
        %1208 = vmatpush.bf16.msra.mxu0 0
        %1209 = vmatpush.bf16.msra.mxu0 %v1197
        %1210 = vmatpush.bf16.msra.mxu0 %v1196
        %1211 = vmatmul.bf16.gmra.mxu0 %v1201
        %v1212 = vpop.f32.mrf.mxu0
        %v1213 = vadd.f32 %v1186, %v1212
        %v1214 = vpop.f32.mrf.mxu0
        %1215 = vdwg.mxu0
        %v1216 = vmul.f32 %v1213, 0.5
        %v1217 = vtanh.pop %v1216
        %v1218 = vadd.f32 %v1217, 1.0
        %v1219 = vmul.f32 %v1218, 0.5
        %v1220 = vmul.f32 %v1213, %v1219
        %v1221 = vpack.c.bf16 %v1220, %v1220
        %v1222 = vld [vmem:[%s13] sm:$0xf]
        %v1223 = vld [vmem:[%s13 + $0x4] sm:$0xf]
        %v1224 = vld [vmem:[%s13 + $0x8] sm:$0xf]
        %v1225 = vld [vmem:[%s13 + $0xc] sm:$0xf]
        %v1226 = vld [vmem:[%s13 + $0x10] sm:$0xf]
        %v1227 = vld [vmem:[%s13 + $0x14] sm:$0xf]
        %v1228 = vld [vmem:[%s13 + $0x18] sm:$0xf]
        %v1229 = vld [vmem:[%s13 + $0x1c] sm:$0xf]
        %v1230 = vld [vmem:[#allocation12] sm:$0x1]
        %v1232 = vperm.slane %v1230, 0
        %v1242 = vunpack.c.l.b16 %v1222
        %v1243 = vunpack.c.l.b16 %v1223
        %v1244 = vunpack.c.l.b16 %v1224
        %v1245 = vunpack.c.l.b16 %v1225
        %v1246 = vunpack.c.l.b16 %v1226
        %v1247 = vunpack.c.l.b16 %v1227
        %v1248 = vunpack.c.l.b16 %v1228
        %v1249 = vunpack.c.l.b16 %v1229
        %v1250 = vpack.c.b16 %v1243, %v1242
        %v1251 = vpack.c.b16 %v1245, %v1244
        %v1252 = vpack.c.b16 %v1247, %v1246
        %v1253 = vpack.c.b16 %v1249, %v1248
        %vm1258 = vcmask 523264
        %v1260 = vsel %vm1258, %v1221, 0
        %1262 = vmatpush.bf16.msra.mxu0 0
        %1263 = vmatpush.bf16.msra.mxu0 0
        %1264 = vmatpush.bf16.msra.mxu0 0
        %1265 = vmatpush.bf16.msra.mxu0 0
        %1266 = vmatpush.bf16.msra.mxu0 %v1253
        %1267 = vmatpush.bf16.msra.mxu0 %v1252
        %1268 = vmatpush.bf16.msra.mxu0 %v1251
        %1269 = vmatpush.bf16.msra.mxu0 %v1250
        %1270 = vmatmul.bf16.gmra.mxu0 %v1260
        %v1271 = vpop.f32.mrf.mxu0
        %v1272 = vadd.f32 %v1232, %v1271
        %v1273 = vpop.f32.mrf.mxu0
        %1274 = vdwg.mxu0
        %v1275 = vmul.f32 %v1272, 0.5
        %v1276 = vadd.f32 %v1138, %v1275
        %v1277 = vld [vmem:[#allocation13] sm:$0x1]
        %v1278 = vld [vmem:[#allocation15] sm:$0x1]
        %v1279 = vsel %vm1141, %v1276, 0.0
        %1280 = vadd.xlane.f32.xlu0 %v1279
        %v1281 = vpop.xlane.xlu0 %1280
        %v1282 = vmul.f32 %v1281, %v1151
        %v1283 = vsub.f32 %v1276, %v1282
        %v1284 = vmul.f32 %v1283, %v1283
        %v1285 = vsel %vm1141, %v1284, 0.0
        %1286 = vadd.xlane.f32.xlu0 %v1285
        %v1287 = vpop.xlane.xlu0 %1286
        %v1288 = vmul.f32 %v1287, %v1151
        %v1289 = vadd.f32 %v1288, 1e-05
        %v1290 = vrsqrt.pop %v1289
        %v1291 = vmul.f32 %v1290, %v1289
        %v1292 = vmul.f32 %v1291, %v1290
        %v1293 = vmul.f32 0.5, %v1292
        %v1294 = vsub.f32 1.5, %v1293
        %v1295 = vmul.f32 %v1290, %v1294
        %vm1296 = vweird.f32 %v1289
        %vm1297 = vweird.f32 %v1290
        %vm1298 = vmor %vm1296, %vm1297
        %v1299 = vsel %vm1298, %v1290, %v1295
        %v1300 = vmul.f32 %v1283, %v1299
        %v1302 = vperm.slane %v1277, 0
        %v1304 = vmul.f32 %v1300, %v1302
        %v1306 = vperm.slane %v1278, 0
        %v1308 = vadd.f32 %v1304, %v1306
        %v1309 = vpack.c.bf16 %v1308, %v1308
        %v1310 = vld [vmem:[%s21] sm:$0xf]
        %v1311 = vld [vmem:[%s21 + $0x4] sm:$0xf]
        %v1312 = vld [vmem:[%s21 + $0x8] sm:$0xf]
        %v1313 = vld [vmem:[%s21 + $0xc] sm:$0xf]
        %v1318 = vunpack.c.l.b16 %v1310
        %v1319 = vunpack.c.l.b16 %v1311
        %v1320 = vunpack.c.l.b16 %v1312
        %v1321 = vunpack.c.l.b16 %v1313
        %v1322 = vpack.c.b16 %v1319, %v1318
        %v1323 = vpack.c.b16 %v1321, %v1320
        %v1327 = vsel %vm1141, %v1309, 0
        %1329 = vmatpush.bf16.msra.mxu0 0
        %1330 = vmatpush.bf16.msra.mxu0 0
        %1331 = vmatpush.bf16.msra.mxu0 0
        %1332 = vmatpush.bf16.msra.mxu0 0
        %1333 = vmatpush.bf16.msra.mxu0 0
        %1334 = vmatpush.bf16.msra.mxu0 0
        %1335 = vmatpush.bf16.msra.mxu0 %v1323
        %1336 = vmatpush.bf16.msra.mxu0 %v1322
        %1337 = vmatmul.bf16.gmra.mxu0 %v1327
        %v1338 = vpop.f32.mrf.mxu0
        %v1339 = vadd.f32 0.0, %v1338
        %v1340 = vpop.f32.mrf.mxu0
        %1341 = vdwg.mxu0
        %v1342 = vld [vmem:[#allocation16] sm:$0x1]
        %v1344 = vperm.slane %v1342, 0
        %v1346 = vadd.f32 %v1339, %v1344
        %v1347 = vld [vmem:[%s25] sm:$0x1]
        %v1349 = vperm.slane %v1347, 0
        %v1351 = vadd.f32 %v1339, %v1349
        %v1352 = vpack.c.bf16 %v1346, %v1346
        %vm1353 = vcmask 60416
        %1354 = vst.msk [vmem:[#allocation2] sm:$0xf] %vm1353, %v1352
        %v1355 = vpack.c.bf16 %v1351, %v1351
        %1356 = vst.msk [vmem:[#allocation3] sm:$0xf] %vm1353, %v1355
        %v1357 = vpack.c.bf16 %v1339, %v1339
        %1359 = vrot.lane.b32.xlu0 %v1357, 96
        %v1360 = vpop.permute.xlu0 %1359
        %1362 = vst.msk [vmem:[#allocation4] sm:$0xf] %vm1353, %v1360
        %1363 = vrot.lane.b32.xlu0 %v1357, 64
        %v1364 = vpop.permute.xlu0 %1363
        %1366 = vst.msk [vmem:[#allocation5] sm:$0xf] %vm1353, %v1364
        %1368 = vrot.lane.b32.xlu0 %v1352, 120
        %v1369 = vpop.permute.xlu0 %1368
        %s1371 = scalar_lea.vmem [#allocation2], 4
        %1372 = vst.msk [vmem:[%s1371] sm:$0xf] %vm1353, %v1369
        %1374 = vrot.lane.b32.xlu0 %v1355, 120
        %v1375 = vpop.permute.xlu0 %1374
        %s1377 = scalar_lea.vmem [#allocation3], 4
        %1378 = vst.msk [vmem:[%s1377] sm:$0xf] %vm1353, %v1375
        %1379 = vrot.lane.b32.xlu0 %v1357, 88
        %v1380 = vpop.permute.xlu0 %1379
        %s1382 = scalar_lea.vmem [#allocation4], 4
        %1383 = vst.msk [vmem:[%s1382] sm:$0xf] %vm1353, %v1380
        %1384 = vrot.lane.b32.xlu0 %v1357, 56
        %v1385 = vpop.permute.xlu0 %1384
        %s1387 = scalar_lea.vmem [#allocation5], 4
        %1388 = vst.msk [vmem:[%s1387] sm:$0xf] %vm1353, %v1385
        %1389 = vrot.lane.b32.xlu0 %v1352, 112
        %v1390 = vpop.permute.xlu0 %1389
        %s1392 = scalar_lea.vmem [#allocation2], 8
        %1393 = vst.msk [vmem:[%s1392] sm:$0xf] %vm1353, %v1390
        %1394 = vrot.lane.b32.xlu0 %v1355, 112
        %v1395 = vpop.permute.xlu0 %1394
        %s1397 = scalar_lea.vmem [#allocation3], 8
        %1398 = vst.msk [vmem:[%s1397] sm:$0xf] %vm1353, %v1395
        %1399 = vrot.lane.b32.xlu0 %v1357, 80
        %v1400 = vpop.permute.xlu0 %1399
        %s1402 = scalar_lea.vmem [#allocation4], 8
        %1403 = vst.msk [vmem:[%s1402] sm:$0xf] %vm1353, %v1400
        %1404 = vrot.lane.b32.xlu0 %v1357, 48
        %v1405 = vpop.permute.xlu0 %1404
        %s1407 = scalar_lea.vmem [#allocation5], 8
        %1408 = vst.msk [vmem:[%s1407] sm:$0xf] %vm1353, %v1405
        %1409 = vrot.lane.b32.xlu0 %v1352, 104
        %v1410 = vpop.permute.xlu0 %1409
        %s1412 = scalar_lea.vmem [#allocation2], 12
        %1413 = vst.msk [vmem:[%s1412] sm:$0xf] %vm1353, %v1410
        %1414 = vrot.lane.b32.xlu0 %v1355, 104
        %v1415 = vpop.permute.xlu0 %1414
        %s1417 = scalar_lea.vmem [#allocation3], 12
        %1418 = vst.msk [vmem:[%s1417] sm:$0xf] %vm1353, %v1415
        %1419 = vrot.lane.b32.xlu0 %v1357, 72
        %v1420 = vpop.permute.xlu0 %1419
        %s1422 = scalar_lea.vmem [#allocation4], 12
        %1423 = vst.msk [vmem:[%s1422] sm:$0xf] %vm1353, %v1420
        %1424 = vrot.lane.b32.xlu0 %v1357, 40
        %v1425 = vpop.permute.xlu0 %1424
        %s1427 = scalar_lea.vmem [#allocation5], 12
        %1428 = vst.msk [vmem:[%s1427] sm:$0xf] %vm1353, %v1425
        %v1429 = vld [vmem:[#allocation2] sm:$0xf]
        %v1430 = vld [vmem:[#allocation2 + $0x4] sm:$0xf]
        %v1431 = vld [vmem:[#allocation2 + $0x8] sm:$0xf]
        %v1432 = vld [vmem:[#allocation2 + $0xc] sm:$0xf]
        %v1433 = vld [vmem:[#allocation4] sm:$0xf]
        %v1434 = vld [vmem:[#allocation4 + $0x4] sm:$0xf]
        %v1435 = vld [vmem:[#allocation4 + $0x8] sm:$0xf]
        %v1436 = vld [vmem:[#allocation4 + $0xc] sm:$0xf]
        %v1437 = vld [vmem:[#allocation3] sm:$0xf]
        %v1438 = vld [vmem:[#allocation3 + $0x4] sm:$0xf]
        %v1439 = vld [vmem:[#allocation3 + $0x8] sm:$0xf]
        %v1440 = vld [vmem:[#allocation3 + $0xc] sm:$0xf]
        %v1441 = vld [vmem:[%s3] sm:$0xf]
        %v1442 = vld [vmem:[%s3 + $0x4] sm:$0xf]
        %v1443 = vld [vmem:[%s3 + $0x8] sm:$0xf]
        %v1444 = vld [vmem:[%s3 + $0xc] sm:$0xf]
        %v1445 = vld [vmem:[%s3 + $0x10] sm:$0xf]
        %v1446 = vld [vmem:[%s3 + $0x14] sm:$0xf]
        %v1447 = vld [vmem:[%s3 + $0x18] sm:$0xf]
        %v1448 = vld [vmem:[%s3 + $0x1c] sm:$0xf]
        %v1451 = vunpack.c.l.b16 %v1441
        %v1452 = vunpack.c.l.b16 %v1442
        %v1453 = vpack.c.b16 %v1452, %v1451
        %vm1454 = vcmask 64512
        %v1456 = vsel %vm1454, %v1437, 0
        %v1459 = vsel %vm1454, %v1453, 0
        %1461 = vmatpush.bf16.xpose.msra.mxu0 0
        %1462 = vmatpush.bf16.xpose.msra.mxu0 0
        %1463 = vmatpush.bf16.xpose.msra.mxu0 0
        %1464 = vmatpush.bf16.xpose.msra.mxu0 0
        %1465 = vmatpush.bf16.xpose.msra.mxu0 0
        %1466 = vmatpush.bf16.xpose.msra.mxu0 0
        %1467 = vmatpush.bf16.xpose.msra.mxu0 0
        %1468 = vmatpush.bf16.xpose.msra.mxu0 %v1459
        %1469 = vmatmul.bf16.gmra.mxu0 %v1456
        %v1470 = vpop.f32.mrf.mxu0
        %v1471 = vadd.f32 0.0, %v1470
        %v1472 = vpop.f32.mrf.mxu0
        %1473 = vdwg.mxu0
        %v1476 = vunpack.c.l.b16 %v1443
        %v1477 = vunpack.c.l.b16 %v1444
        %v1478 = vpack.c.b16 %v1477, %v1476
        %v1480 = vsel %vm1454, %v1438, 0
        %v1483 = vsel %vm1454, %v1478, 0
        %1485 = vmatpush.bf16.xpose.msra.mxu0 0
        %1486 = vmatpush.bf16.xpose.msra.mxu0 0
        %1487 = vmatpush.bf16.xpose.msra.mxu0 0
        %1488 = vmatpush.bf16.xpose.msra.mxu0 0
        %1489 = vmatpush.bf16.xpose.msra.mxu0 0
        %1490 = vmatpush.bf16.xpose.msra.mxu0 0
        %1491 = vmatpush.bf16.xpose.msra.mxu0 0
        %1492 = vmatpush.bf16.xpose.msra.mxu0 %v1483
        %1493 = vmatmul.bf16.gmra.mxu0 %v1480
        %v1494 = vpop.f32.mrf.mxu0
        %v1495 = vadd.f32 0.0, %v1494
        %v1496 = vpop.f32.mrf.mxu0
        %1497 = vdwg.mxu0
        %v1500 = vunpack.c.l.b16 %v1445
        %v1501 = vunpack.c.l.b16 %v1446
        %v1502 = vpack.c.b16 %v1501, %v1500
        %v1504 = vsel %vm1454, %v1439, 0
        %v1507 = vsel %vm1454, %v1502, 0
        %1509 = vmatpush.bf16.xpose.msra.mxu0 0
        %1510 = vmatpush.bf16.xpose.msra.mxu0 0
        %1511 = vmatpush.bf16.xpose.msra.mxu0 0
        %1512 = vmatpush.bf16.xpose.msra.mxu0 0
        %1513 = vmatpush.bf16.xpose.msra.mxu0 0
        %1514 = vmatpush.bf16.xpose.msra.mxu0 0
        %1515 = vmatpush.bf16.xpose.msra.mxu0 0
        %1516 = vmatpush.bf16.xpose.msra.mxu0 %v1507
        %1517 = vmatmul.bf16.gmra.mxu0 %v1504
        %v1518 = vpop.f32.mrf.mxu0
        %v1519 = vadd.f32 0.0, %v1518
        %v1520 = vpop.f32.mrf.mxu0
        %1521 = vdwg.mxu0
        %v1524 = vunpack.c.l.b16 %v1447
        %v1525 = vunpack.c.l.b16 %v1448
        %v1526 = vpack.c.b16 %v1525, %v1524
        %v1528 = vsel %vm1454, %v1440, 0
        %v1531 = vsel %vm1454, %v1526, 0
        %1533 = vmatpush.bf16.xpose.msra.mxu0 0
        %1534 = vmatpush.bf16.xpose.msra.mxu0 0
        %1535 = vmatpush.bf16.xpose.msra.mxu0 0
        %1536 = vmatpush.bf16.xpose.msra.mxu0 0
        %1537 = vmatpush.bf16.xpose.msra.mxu0 0
        %1538 = vmatpush.bf16.xpose.msra.mxu0 0
        %1539 = vmatpush.bf16.xpose.msra.mxu0 0
        %1540 = vmatpush.bf16.xpose.msra.mxu0 %v1531
        %1541 = vmatmul.bf16.gmra.mxu0 %v1528
        %v1542 = vpop.f32.mrf.mxu0
        %v1543 = vadd.f32 0.0, %v1542
        %v1544 = vpop.f32.mrf.mxu0
        %1545 = vdwg.mxu0
        %1550 = vrot.lane.b32.xlu0 %v1471, 1
        %v1551 = vpop.permute.xlu0 %1550
        %1552 = vrot.lane.b32.xlu0 %v1495, 1
        %v1553 = vpop.permute.xlu0 %1552
        %1554 = vrot.lane.b32.xlu0 %v1519, 1
        %v1555 = vpop.permute.xlu0 %1554
        %1556 = vrot.lane.b32.xlu0 %v1543, 1
        %v1557 = vpop.permute.xlu0 %1556
        %1562 = vrot.lane.b32.xlu0 %v1471, 2
        %v1563 = vpop.permute.xlu0 %1562
        %1564 = vrot.lane.b32.xlu0 %v1495, 2
        %v1565 = vpop.permute.xlu0 %1564
        %1566 = vrot.lane.b32.xlu0 %v1519, 2
        %v1567 = vpop.permute.xlu0 %1566
        %1568 = vrot.lane.b32.xlu0 %v1543, 2
        %v1569 = vpop.permute.xlu0 %1568
        %1574 = vrot.lane.b32.xlu0 %v1471, 3
        %v1575 = vpop.permute.xlu0 %1574
        %1576 = vrot.lane.b32.xlu0 %v1495, 3
        %v1577 = vpop.permute.xlu0 %1576
        %1578 = vrot.lane.b32.xlu0 %v1519, 3
        %v1579 = vpop.permute.xlu0 %1578
        %1580 = vrot.lane.b32.xlu0 %v1543, 3
        %v1581 = vpop.permute.xlu0 %1580
        %1586 = vrot.lane.b32.xlu0 %v1471, 4
        %v1587 = vpop.permute.xlu0 %1586
        %1588 = vrot.lane.b32.xlu0 %v1495, 4
        %v1589 = vpop.permute.xlu0 %1588
        %1590 = vrot.lane.b32.xlu0 %v1519, 4
        %v1591 = vpop.permute.xlu0 %1590
        %1592 = vrot.lane.b32.xlu0 %v1543, 4
        %v1593 = vpop.permute.xlu0 %1592
        %1598 = vrot.lane.b32.xlu0 %v1471, 5
        %v1599 = vpop.permute.xlu0 %1598
        %1600 = vrot.lane.b32.xlu0 %v1495, 5
        %v1601 = vpop.permute.xlu0 %1600
        %1602 = vrot.lane.b32.xlu0 %v1519, 5
        %v1603 = vpop.permute.xlu0 %1602
        %1604 = vrot.lane.b32.xlu0 %v1543, 5
        %v1605 = vpop.permute.xlu0 %1604
        %1610 = vrot.lane.b32.xlu0 %v1471, 6
        %v1611 = vpop.permute.xlu0 %1610
        %1612 = vrot.lane.b32.xlu0 %v1495, 6
        %v1613 = vpop.permute.xlu0 %1612
        %1614 = vrot.lane.b32.xlu0 %v1519, 6
        %v1615 = vpop.permute.xlu0 %1614
        %1616 = vrot.lane.b32.xlu0 %v1543, 6
        %v1617 = vpop.permute.xlu0 %1616
        %1622 = vrot.lane.b32.xlu0 %v1471, 7
        %v1623 = vpop.permute.xlu0 %1622
        %1624 = vrot.lane.b32.xlu0 %v1495, 7
        %v1625 = vpop.permute.xlu0 %1624
        %1626 = vrot.lane.b32.xlu0 %v1519, 7
        %v1627 = vpop.permute.xlu0 %1626
        %1628 = vrot.lane.b32.xlu0 %v1543, 7
        %v1629 = vpop.permute.xlu0 %1628
        %vm1634 = vcmask 1040384
        %v1635 = vsel %vm1634, %v1471, %v1551
        %v1636 = vsel %vm1634, %v1495, %v1553
        %v1637 = vsel %vm1634, %v1519, %v1555
        %v1638 = vsel %vm1634, %v1543, %v1557
        %vm1639 = vcmask 1041408
        %v1640 = vsel %vm1639, %v1635, %v1563
        %v1641 = vsel %vm1639, %v1636, %v1565
        %v1642 = vsel %vm1639, %v1637, %v1567
        %v1643 = vsel %vm1639, %v1638, %v1569
        %vm1644 = vcmask 1042432
        %v1645 = vsel %vm1644, %v1640, %v1575
        %v1646 = vsel %vm1644, %v1641, %v1577
        %v1647 = vsel %vm1644, %v1642, %v1579
        %v1648 = vsel %vm1644, %v1643, %v1581
        %vm1649 = vcmask 1043456
        %v1650 = vsel %vm1649, %v1645, %v1587
        %v1651 = vsel %vm1649, %v1646, %v1589
        %v1652 = vsel %vm1649, %v1647, %v1591
        %v1653 = vsel %vm1649, %v1648, %v1593
        %vm1654 = vcmask 1044480
        %v1655 = vsel %vm1654, %v1650, %v1599
        %v1656 = vsel %vm1654, %v1651, %v1601
        %v1657 = vsel %vm1654, %v1652, %v1603
        %v1658 = vsel %vm1654, %v1653, %v1605
        %vm1659 = vcmask 1045504
        %v1660 = vsel %vm1659, %v1655, %v1611
        %v1661 = vsel %vm1659, %v1656, %v1613
        %v1662 = vsel %vm1659, %v1657, %v1615
        %v1663 = vsel %vm1659, %v1658, %v1617
        %vm1664 = vcmask 1046528
        %v1665 = vsel %vm1664, %v1660, %v1623
        %v1666 = vsel %vm1664, %v1661, %v1625
        %v1667 = vsel %vm1664, %v1662, %v1627
        %v1668 = vsel %vm1664, %v1663, %v1629
        %1670 = vrot.lane.b32.xlu0 %v1665, 121
        %v1671 = vpop.permute.xlu0 %1670
        %v1674 = vsel %vm1454, %v1429, 0
        %v1677 = vsel %vm1454, %v1433, 0
        %1679 = vmatpush.bf16.xpose.msra.mxu0 0
        %1680 = vmatpush.bf16.xpose.msra.mxu0 0
        %1681 = vmatpush.bf16.xpose.msra.mxu0 0
        %1682 = vmatpush.bf16.xpose.msra.mxu0 0
        %1683 = vmatpush.bf16.xpose.msra.mxu0 0
        %1684 = vmatpush.bf16.xpose.msra.mxu0 0
        %1685 = vmatpush.bf16.xpose.msra.mxu0 0
        %1686 = vmatpush.bf16.xpose.msra.mxu0 %v1677
        %1687 = vmatmul.bf16.gmra.mxu0 %v1674
        %v1688 = vpop.f32.mrf.mxu0
        %v1689 = vadd.f32 %v1671, %v1688
        %v1690 = vpop.f32.mrf.mxu0
        %1691 = vdwg.mxu0
        %1693 = vrot.lane.b32.xlu0 %v1666, 121
        %v1694 = vpop.permute.xlu0 %1693
        %v1697 = vsel %vm1454, %v1430, 0
        %v1700 = vsel %vm1454, %v1434, 0
        %1702 = vmatpush.bf16.xpose.msra.mxu0 0
        %1703 = vmatpush.bf16.xpose.msra.mxu0 0
        %1704 = vmatpush.bf16.xpose.msra.mxu0 0
        %1705 = vmatpush.bf16.xpose.msra.mxu0 0
        %1706 = vmatpush.bf16.xpose.msra.mxu0 0
        %1707 = vmatpush.bf16.xpose.msra.mxu0 0
        %1708 = vmatpush.bf16.xpose.msra.mxu0 0
        %1709 = vmatpush.bf16.xpose.msra.mxu0 %v1700
        %1710 = vmatmul.bf16.gmra.mxu0 %v1697
        %v1711 = vpop.f32.mrf.mxu0
        %v1712 = vadd.f32 %v1694, %v1711
        %v1713 = vpop.f32.mrf.mxu0
        %1714 = vdwg.mxu0
        %1716 = vrot.lane.b32.xlu0 %v1667, 121
        %v1717 = vpop.permute.xlu0 %1716
        %v1720 = vsel %vm1454, %v1431, 0
        %v1723 = vsel %vm1454, %v1435, 0
        %1725 = vmatpush.bf16.xpose.msra.mxu0 0
        %1726 = vmatpush.bf16.xpose.msra.mxu0 0
        %1727 = vmatpush.bf16.xpose.msra.mxu0 0
        %1728 = vmatpush.bf16.xpose.msra.mxu0 0
        %1729 = vmatpush.bf16.xpose.msra.mxu0 0
        %1730 = vmatpush.bf16.xpose.msra.mxu0 0
        %1731 = vmatpush.bf16.xpose.msra.mxu0 0
        %1732 = vmatpush.bf16.xpose.msra.mxu0 %v1723
        %1733 = vmatmul.bf16.gmra.mxu0 %v1720
        %v1734 = vpop.f32.mrf.mxu0
        %v1735 = vadd.f32 %v1717, %v1734
        %v1736 = vpop.f32.mrf.mxu0
        %1737 = vdwg.mxu0
        %1739 = vrot.lane.b32.xlu0 %v1668, 121
        %v1740 = vpop.permute.xlu0 %1739
        %v1743 = vsel %vm1454, %v1432, 0
        %v1746 = vsel %vm1454, %v1436, 0
        %1748 = vmatpush.bf16.xpose.msra.mxu0 0
        %1749 = vmatpush.bf16.xpose.msra.mxu0 0
        %1750 = vmatpush.bf16.xpose.msra.mxu0 0
        %1751 = vmatpush.bf16.xpose.msra.mxu0 0
        %1752 = vmatpush.bf16.xpose.msra.mxu0 0
        %1753 = vmatpush.bf16.xpose.msra.mxu0 0
        %1754 = vmatpush.bf16.xpose.msra.mxu0 0
        %1755 = vmatpush.bf16.xpose.msra.mxu0 %v1746
        %1756 = vmatmul.bf16.gmra.mxu0 %v1743
        %v1757 = vpop.f32.mrf.mxu0
        %v1758 = vadd.f32 %v1740, %v1757
        %v1759 = vpop.f32.mrf.mxu0
        %1760 = vdwg.mxu0
        %v1761 = vmul.f32 %v1689, 0.17677669
        %v1762 = vmul.f32 %v1712, 0.17677669
        %v1763 = vmul.f32 %v1735, 0.17677669
        %v1764 = vmul.f32 %v1758, 0.17677669
        %v1765 = vsel %vm1454, %v1761, -inf
        %1766 = vmax.xlane.f32.xlu0 %v1765
        %v1767 = vpop.xlane.xlu0 %1766
        %v1768 = vsel %vm1454, %v1762, -inf
        %1769 = vmax.xlane.f32.xlu0 %v1768
        %v1770 = vpop.xlane.xlu0 %1769
        %v1771 = vsel %vm1454, %v1763, -inf
        %1772 = vmax.xlane.f32.xlu0 %v1771
        %v1773 = vpop.xlane.xlu0 %1772
        %v1774 = vsel %vm1454, %v1764, -inf
        %1775 = vmax.xlane.f32.xlu0 %v1774
        %v1776 = vpop.xlane.xlu0 %1775
        %v1777 = vsub.f32 %v1761, %v1767
        %v1778 = vsub.f32 %v1762, %v1770
        %v1779 = vsub.f32 %v1763, %v1773
        %v1780 = vsub.f32 %v1764, %v1776
        %v1781 = vmul.f32 %v1777, 1.442695
        %v1782 = vpow.pop %v1781
        %v1783 = vmul.f32 %v1778, 1.442695
        %v1784 = vpow.pop %v1783
        %v1785 = vmul.f32 %v1779, 1.442695
        %v1786 = vpow.pop %v1785
        %v1787 = vmul.f32 %v1780, 1.442695
        %v1788 = vpow.pop %v1787
        %v1789 = vsel %vm1454, %v1782, 0.0
        %1790 = vadd.xlane.f32.xlu0 %v1789
        %v1791 = vpop.xlane.xlu0 %1790
        %v1792 = vsel %vm1454, %v1784, 0.0
        %1793 = vadd.xlane.f32.xlu0 %v1792
        %v1794 = vpop.xlane.xlu0 %1793
        %v1795 = vsel %vm1454, %v1786, 0.0
        %1796 = vadd.xlane.f32.xlu0 %v1795
        %v1797 = vpop.xlane.xlu0 %1796
        %v1798 = vsel %vm1454, %v1788, 0.0
        %1799 = vadd.xlane.f32.xlu0 %v1798
        %v1800 = vpop.xlane.xlu0 %1799
        %v1801 = vrcp.pop %v1791
        %v1802 = vmul.f32 %v1791, %v1801
        %v1803 = vsub.f32 1.0, %v1802
        %v1804 = vmul.f32 %v1801, %v1803
        %v1805 = vadd.f32 %v1801, %v1804
        %vm1806 = vweird.f32 %v1791
        %vm1807 = vweird.f32 %v1801
        %vm1808 = vmor %vm1806, %vm1807
        %v1809 = vsel %vm1808, %v1801, %v1805
        %v1810 = vand.u32 2147483647, %v1791
        %vm1811 = vcmp.eq.f32.partialorder %v1810, 8.507059e+37
        %v1812 = vand.u32 %v1791, 2147483648
        %v1813 = vor.u32 1.1754944e-38, %v1812
        %v1814 = vsel %vm1811, %v1813, %v1809
        %v1815 = vrcp.pop %v1794
        %v1816 = vmul.f32 %v1794, %v1815
        %v1817 = vsub.f32 1.0, %v1816
        %v1818 = vmul.f32 %v1815, %v1817
        %v1819 = vadd.f32 %v1815, %v1818
        %vm1820 = vweird.f32 %v1794
        %vm1821 = vweird.f32 %v1815
        %vm1822 = vmor %vm1820, %vm1821
        %v1823 = vsel %vm1822, %v1815, %v1819
        %v1824 = vand.u32 2147483647, %v1794
        %vm1825 = vcmp.eq.f32.partialorder %v1824, 8.507059e+37
        %v1826 = vand.u32 %v1794, 2147483648
        %v1827 = vor.u32 1.1754944e-38, %v1826
        %v1828 = vsel %vm1825, %v1827, %v1823
        %v1829 = vrcp.pop %v1797
        %v1830 = vmul.f32 %v1797, %v1829
        %v1831 = vsub.f32 1.0, %v1830
        %v1832 = vmul.f32 %v1829, %v1831
        %v1833 = vadd.f32 %v1829, %v1832
        %vm1834 = vweird.f32 %v1797
        %vm1835 = vweird.f32 %v1829
        %vm1836 = vmor %vm1834, %vm1835
        %v1837 = vsel %vm1836, %v1829, %v1833
        %v1838 = vand.u32 2147483647, %v1797
        %vm1839 = vcmp.eq.f32.partialorder %v1838, 8.507059e+37
        %v1840 = vand.u32 %v1797, 2147483648
        %v1841 = vor.u32 1.1754944e-38, %v1840
        %v1842 = vsel %vm1839, %v1841, %v1837
        %v1843 = vrcp.pop %v1800
        %v1844 = vmul.f32 %v1800, %v1843
        %v1845 = vsub.f32 1.0, %v1844
        %v1846 = vmul.f32 %v1843, %v1845
        %v1847 = vadd.f32 %v1843, %v1846
        %vm1848 = vweird.f32 %v1800
        %vm1849 = vweird.f32 %v1843
        %vm1850 = vmor %vm1848, %vm1849
        %v1851 = vsel %vm1850, %v1843, %v1847
        %v1852 = vand.u32 2147483647, %v1800
        %vm1853 = vcmp.eq.f32.partialorder %v1852, 8.507059e+37
        %v1854 = vand.u32 %v1800, 2147483648
        %v1855 = vor.u32 1.1754944e-38, %v1854
        %v1856 = vsel %vm1853, %v1855, %v1851
        %v1857 = vmul.f32 %v1782, %v1814
        %v1858 = vmul.f32 %v1784, %v1828
        %v1859 = vmul.f32 %v1786, %v1842
        %v1860 = vmul.f32 %v1788, %v1856
        %1861 = vst.msk [vmem:[%s1132] sm:$0xff] %vm1454, %v1857
        %1862 = vst.msk [vmem:[%s1132 + $0x8] sm:$0xff] %vm1454, %v1858
        %1863 = vst.msk [vmem:[%s1132 + $0x10] sm:$0xff] %vm1454, %v1859
        %1864 = vst.msk [vmem:[%s1132 + $0x18] sm:$0xff] %vm1454, %v1860
        %v1865 = vpack.c.bf16 %v1857, %v1857
        %v1866 = vpack.c.bf16 %v1858, %v1858
        %v1867 = vpack.c.bf16 %v1859, %v1859
        %v1868 = vpack.c.bf16 %v1860, %v1860
        %v1869 = vld [vmem:[#allocation5] sm:$0xf]
        %v1870 = vld [vmem:[#allocation5 + $0x4] sm:$0xf]
        %v1871 = vld [vmem:[#allocation5 + $0x8] sm:$0xf]
        %v1872 = vld [vmem:[#allocation5 + $0xc] sm:$0xf]
        %v1874 = vsel %vm1454, %v1865, 0
        %v1877 = vsel %vm1649, %v1869, 0
        %1879 = vmatpush.bf16.msra.mxu0 0
        %1880 = vmatpush.bf16.msra.mxu0 0
        %1881 = vmatpush.bf16.msra.mxu0 0
        %1882 = vmatpush.bf16.msra.mxu0 0
        %1883 = vmatpush.bf16.msra.mxu0 0
        %1884 = vmatpush.bf16.msra.mxu0 0
        %1885 = vmatpush.bf16.msra.mxu0 0
        %1886 = vmatpush.bf16.msra.mxu0 %v1877
        %1887 = vmatmul.bf16.gmra.mxu0 %v1874
        %v1888 = vpop.f32.mrf.mxu0
        %v1889 = vadd.f32 0.0, %v1888
        %v1890 = vpop.f32.mrf.mxu0
        %1891 = vdwg.mxu0
        %v1893 = vsel %vm1454, %v1866, 0
        %v1896 = vsel %vm1649, %v1870, 0
        %1898 = vmatpush.bf16.msra.mxu0 0
        %1899 = vmatpush.bf16.msra.mxu0 0
        %1900 = vmatpush.bf16.msra.mxu0 0
        %1901 = vmatpush.bf16.msra.mxu0 0
        %1902 = vmatpush.bf16.msra.mxu0 0
        %1903 = vmatpush.bf16.msra.mxu0 0
        %1904 = vmatpush.bf16.msra.mxu0 0
        %1905 = vmatpush.bf16.msra.mxu0 %v1896
        %1906 = vmatmul.bf16.gmra.mxu0 %v1893
        %v1907 = vpop.f32.mrf.mxu0
        %v1908 = vadd.f32 0.0, %v1907
        %v1909 = vpop.f32.mrf.mxu0
        %1910 = vdwg.mxu0
        %v1912 = vsel %vm1454, %v1867, 0
        %v1915 = vsel %vm1649, %v1871, 0
        %1917 = vmatpush.bf16.msra.mxu0 0
        %1918 = vmatpush.bf16.msra.mxu0 0
        %1919 = vmatpush.bf16.msra.mxu0 0
        %1920 = vmatpush.bf16.msra.mxu0 0
        %1921 = vmatpush.bf16.msra.mxu0 0
        %1922 = vmatpush.bf16.msra.mxu0 0
        %1923 = vmatpush.bf16.msra.mxu0 0
        %1924 = vmatpush.bf16.msra.mxu0 %v1915
        %1925 = vmatmul.bf16.gmra.mxu0 %v1912
        %v1926 = vpop.f32.mrf.mxu0
        %v1927 = vadd.f32 0.0, %v1926
        %v1928 = vpop.f32.mrf.mxu0
        %1929 = vdwg.mxu0
        %v1931 = vsel %vm1454, %v1868, 0
        %v1934 = vsel %vm1649, %v1872, 0
        %1936 = vmatpush.bf16.msra.mxu0 0
        %1937 = vmatpush.bf16.msra.mxu0 0
        %1938 = vmatpush.bf16.msra.mxu0 0
        %1939 = vmatpush.bf16.msra.mxu0 0
        %1940 = vmatpush.bf16.msra.mxu0 0
        %1941 = vmatpush.bf16.msra.mxu0 0
        %1942 = vmatpush.bf16.msra.mxu0 0
        %1943 = vmatpush.bf16.msra.mxu0 %v1934
        %1944 = vmatmul.bf16.gmra.mxu0 %v1931
        %v1945 = vpop.f32.mrf.mxu0
        %v1946 = vadd.f32 0.0, %v1945
        %v1947 = vpop.f32.mrf.mxu0
        %1948 = vdwg.mxu0
        %v1949 = vpack.c.bf16 %v1889, %v1889
        %1950 = vst.msk [vmem:[#allocation6] sm:$0xf] %vm1353, %v1949
        %v1951 = vpack.c.bf16 %v1908, %v1908
        %1953 = vrot.lane.b32.xlu0 %v1951, 8
        %v1954 = vpop.permute.xlu0 %1953
        %vm1956 = vcmask 126016
        %1957 = vst.msk [vmem:[#allocation6] sm:$0xf] %vm1956, %v1954
        %v1958 = vpack.c.bf16 %v1927, %v1927
        %1960 = vrot.lane.b32.xlu0 %v1958, 16
        %v1961 = vpop.permute.xlu0 %1960
        %vm1963 = vcmask 191616
        %1964 = vst.msk [vmem:[#allocation6] sm:$0xf] %vm1963, %v1961
        %v1965 = vpack.c.bf16 %v1946, %v1946
        %1967 = vrot.lane.b32.xlu0 %v1965, 24
        %v1968 = vpop.permute.xlu0 %1967
        %vm1970 = vcmask 257216
        %1971 = vst.msk [vmem:[#allocation6] sm:$0xf] %vm1970, %v1968
        %v1972 = vld [vmem:[#allocation6] sm:$0xf]
        %v1973 = vld [vmem:[%s27] sm:$0xf]
        %v1974 = vld [vmem:[%s27 + $0x4] sm:$0xf]
        %v1975 = vld [vmem:[%s27 + $0x8] sm:$0xf]
        %v1976 = vld [vmem:[%s27 + $0xc] sm:$0xf]
        %v1981 = vunpack.c.l.b16 %v1973
        %v1982 = vunpack.c.l.b16 %v1974
        %v1983 = vunpack.c.l.b16 %v1975
        %v1984 = vunpack.c.l.b16 %v1976
        %v1985 = vpack.c.b16 %v1982, %v1981
        %v1986 = vpack.c.b16 %v1984, %v1983
        %v1990 = vsel %vm1141, %v1972, 0
        %1992 = vmatpush.bf16.msra.mxu0 0
        %1993 = vmatpush.bf16.msra.mxu0 0
        %1994 = vmatpush.bf16.msra.mxu0 0
        %1995 = vmatpush.bf16.msra.mxu0 0
        %1996 = vmatpush.bf16.msra.mxu0 0
        %1997 = vmatpush.bf16.msra.mxu0 0
        %1998 = vmatpush.bf16.msra.mxu0 %v1986
        %1999 = vmatpush.bf16.msra.mxu0 %v1985
        %2000 = vmatmul.bf16.gmra.mxu0 %v1990
        %v2001 = vpop.f32.mrf.mxu0
        %v2002 = vadd.f32 0.0, %v2001
        %v2003 = vpop.f32.mrf.mxu0
        %2004 = vdwg.mxu0
        %v2005 = vadd.f32 %v1276, %v2002
        %v2006 = vld [vmem:[%s29] sm:$0x1]
        %v2008 = vperm.slane %v2006, 0
        %v2010 = vadd.f32 %v2005, %v2008
        %v2011 = vld [vmem:[%s31] sm:$0x1]
        %v2012 = vld [vmem:[%s33] sm:$0x1]
        %v2013 = vsel %vm1141, %v2010, 0.0
        %2014 = vadd.xlane.f32.xlu0 %v2013
        %v2015 = vpop.xlane.xlu0 %2014
        %v2016 = vmul.f32 %v2015, %v1151
        %v2017 = vsub.f32 %v2010, %v2016
        %v2018 = vmul.f32 %v2017, %v2017
        %v2019 = vsel %vm1141, %v2018, 0.0
        %2020 = vadd.xlane.f32.xlu0 %v2019
        %v2021 = vpop.xlane.xlu0 %2020
        %v2022 = vmul.f32 %v2021, %v1151
        %v2023 = vadd.f32 %v2022, 1e-05
        %v2024 = vrsqrt.pop %v2023
        %v2025 = vmul.f32 %v2024, %v2023
        %v2026 = vmul.f32 %v2025, %v2024
        %v2027 = vmul.f32 0.5, %v2026
        %v2028 = vsub.f32 1.5, %v2027
        %v2029 = vmul.f32 %v2024, %v2028
        %vm2030 = vweird.f32 %v2023
        %vm2031 = vweird.f32 %v2024
        %vm2032 = vmor %vm2030, %vm2031
        %v2033 = vsel %vm2032, %v2024, %v2029
        %v2034 = vmul.f32 %v2017, %v2033
        %v2036 = vperm.slane %v2011, 0
        %v2038 = vmul.f32 %v2034, %v2036
        %v2040 = vperm.slane %v2012, 0
        %v2042 = vadd.f32 %v2038, %v2040
        %v2043 = vpack.c.bf16 %v2042, %v2042
        %v2044 = vld [vmem:[%s35] sm:$0xf]
        %v2045 = vld [vmem:[%s35 + $0x4] sm:$0xf]
        %v2046 = vld [vmem:[%s35 + $0x8] sm:$0xf]
        %v2047 = vld [vmem:[%s35 + $0xc] sm:$0xf]
        %v2048 = vld [vmem:[%s37] sm:$0x1]
        %v2050 = vperm.slane %v2048, 0
        %v2056 = vunpack.c.l.b16 %v2044
        %v2057 = vunpack.c.l.b16 %v2045
        %v2058 = vunpack.c.l.b16 %v2046
        %v2059 = vunpack.c.l.b16 %v2047
        %v2060 = vpack.c.b16 %v2057, %v2056
        %v2061 = vpack.c.b16 %v2059, %v2058
        %v2065 = vsel %vm1141, %v2043, 0
        %2067 = vmatpush.bf16.msra.mxu0 0
        %2068 = vmatpush.bf16.msra.mxu0 0
        %2069 = vmatpush.bf16.msra.mxu0 0
        %2070 = vmatpush.bf16.msra.mxu0 0
        %2071 = vmatpush.bf16.msra.mxu0 0
        %2072 = vmatpush.bf16.msra.mxu0 0
        %2073 = vmatpush.bf16.msra.mxu0 %v2061
        %2074 = vmatpush.bf16.msra.mxu0 %v2060
        %2075 = vmatmul.bf16.gmra.mxu0 %v2065
        %v2076 = vpop.f32.mrf.mxu0
        %v2077 = vadd.f32 %v2050, %v2076
        %v2078 = vpop.f32.mrf.mxu0
        %2079 = vdwg.mxu0
        %v2080 = vmul.f32 %v2077, 0.5
        %v2081 = vtanh.pop %v2080
        %v2082 = vadd.f32 %v2081, 1.0
        %v2083 = vmul.f32 %v2082, 0.5
        %2085 = vrot.lane.b32.xlu0 %v2083, 96
        %v2086 = vpop.permute.xlu0 %2085
        %v2088 = vmul.f32 %v2077, %v2086
        %v2089 = vlaneseq
        %v2090 = vshrl.u32 %v2089, 7
        %v2091 = vld [vmem:[%s39 + $0x3] sm:$0x1]
        %v2092 = vperm.slane %v2091, 0
        %v2093 = vmul.f32 %v2088, %v2092
        %v2094 = vrot.slane %v2088, 5
        %v2095 = vadd.s32 %v2090, 4294967293
        %vm2096 = vcmp.ge.s32.totalorder %v2095, 0
        %vm2097 = vcmp.lt.s32.totalorder %v2095, 8
        %vm2098 = vmand %vm2096, %vm2097
        %v2099 = vsel %vm2098, %v2094, 0.0
        %v2100 = vld [vmem:[%s39] sm:$0x1]
        %v2101 = vperm.slane %v2100, 0
        %v2102 = vmul.f32 %v2099, %v2101
        %v2103 = vadd.f32 %v2093, %v2102
        %v2104 = vrot.slane %v2088, 6
        %v2105 = vadd.s32 %v2090, 4294967294
        %vm2106 = vcmp.ge.s32.totalorder %v2105, 0
        %vm2107 = vcmp.lt.s32.totalorder %v2105, 8
        %vm2108 = vmand %vm2106, %vm2107
        %v2109 = vsel %vm2108, %v2104, 0.0
        %v2110 = vld [vmem:[%s39 + $0x1] sm:$0x1]
        %v2111 = vperm.slane %v2110, 0
        %v2112 = vmul.f32 %v2109, %v2111
        %v2113 = vadd.f32 %v2103, %v2112
        %v2114 = vrot.slane %v2088, 7
        %v2115 = vadd.s32 %v2090, 4294967295
        %vm2116 = vcmp.ge.s32.totalorder %v2115, 0
        %vm2117 = vcmp.lt.s32.totalorder %v2115, 8
        %vm2118 = vmand %vm2116, %vm2117
        %v2119 = vsel %vm2118, %v2114, 0.0
        %v2120 = vld [vmem:[%s39 + $0x2] sm:$0x1]
        %v2121 = vperm.slane %v2120, 0
        %v2122 = vmul.f32 %v2119, %v2121
        %v2123 = vadd.f32 %v2113, %v2122
        %v2124 = vrot.slane %v2088, 1
        %v2125 = vadd.s32 %v2090, 1
        %vm2126 = vcmp.ge.s32.totalorder %v2125, 0
        %vm2127 = vcmp.lt.s32.totalorder %v2125, 8
        %vm2128 = vmand %vm2126, %vm2127
        %v2129 = vsel %vm2128, %v2124, 0.0
        %v2130 = vld [vmem:[%s39 + $0x4] sm:$0x1]
        %v2131 = vperm.slane %v2130, 0
        %v2132 = vmul.f32 %v2129, %v2131
        %v2133 = vadd.f32 %v2123, %v2132
        %v2134 = vrot.slane %v2088, 2
        %v2135 = vadd.s32 %v2090, 2
        %vm2136 = vcmp.ge.s32.totalorder %v2135, 0
        %vm2137 = vcmp.lt.s32.totalorder %v2135, 8
        %vm2138 = vmand %vm2136, %vm2137
        %v2139 = vsel %vm2138, %v2134, 0.0
        %v2140 = vld [vmem:[%s39 + $0x5] sm:$0x1]
        %v2141 = vperm.slane %v2140, 0
        %v2142 = vmul.f32 %v2139, %v2141
        %v2143 = vadd.f32 %v2133, %v2142
        %v2144 = vrot.slane %v2088, 3
        %v2145 = vadd.s32 %v2090, 3
        %vm2146 = vcmp.ge.s32.totalorder %v2145, 0
        %vm2147 = vcmp.lt.s32.totalorder %v2145, 8
        %vm2148 = vmand %vm2146, %vm2147
        %v2149 = vsel %vm2148, %v2144, 0.0
        %v2150 = vld [vmem:[%s39 + $0x6] sm:$0x1]
        %v2151 = vperm.slane %v2150, 0
        %v2152 = vmul.f32 %v2149, %v2151
        %v2153 = vadd.f32 %v2143, %v2152
        %v2154 = vld [vmem:[%s41] sm:$0x1]
        %v2156 = vperm.slane %v2154, 0
        %v2158 = vadd.f32 %v2153, %v2156
        %v2159 = vld [vmem:[%s43] sm:$0x1]
        %v2160 = vld [vmem:[%s45] sm:$0x1]
        %v2161 = vsel %vm1141, %v2158, 0.0
        %2162 = vadd.xlane.f32.xlu0 %v2161
        %v2163 = vpop.xlane.xlu0 %2162
        %v2164 = vmul.f32 %v2163, %v1151
        %v2165 = vsub.f32 %v2158, %v2164
        %v2166 = vmul.f32 %v2165, %v2165
        %v2167 = vsel %vm1141, %v2166, 0.0
        %2168 = vadd.xlane.f32.xlu0 %v2167
        %v2169 = vpop.xlane.xlu0 %2168
        %v2170 = vmul.f32 %v2169, %v1151
        %v2171 = vadd.f32 %v2170, 1e-05
        %v2172 = vrsqrt.pop %v2171
        %v2173 = vmul.f32 %v2172, %v2171
        %v2174 = vmul.f32 %v2173, %v2172
        %v2175 = vmul.f32 0.5, %v2174
        %v2176 = vsub.f32 1.5, %v2175
        %v2177 = vmul.f32 %v2172, %v2176
        %vm2178 = vweird.f32 %v2171
        %vm2179 = vweird.f32 %v2172
        %vm2180 = vmor %vm2178, %vm2179
        %v2181 = vsel %vm2180, %v2172, %v2177
        %v2182 = vmul.f32 %v2165, %v2181
        %v2184 = vperm.slane %v2159, 0
        %v2186 = vmul.f32 %v2182, %v2184
        %v2188 = vperm.slane %v2160, 0
        %v2190 = vadd.f32 %v2186, %v2188
        %v2191 = vmul.f32 %v2190, 0.5
        %v2192 = vtanh.pop %v2191
        %v2193 = vadd.f32 %v2192, 1.0
        %v2194 = vmul.f32 %v2193, 0.5
        %v2195 = vmul.f32 %v2190, %v2194
        %v2196 = vpack.c.bf16 %v2195, %v2195
        %v2197 = vld [vmem:[%s47] sm:$0xf]
        %v2198 = vld [vmem:[%s47 + $0x4] sm:$0xf]
        %v2199 = vld [vmem:[%s47 + $0x8] sm:$0xf]
        %v2200 = vld [vmem:[%s47 + $0xc] sm:$0xf]
        %v2205 = vunpack.c.l.b16 %v2197
        %v2206 = vunpack.c.l.b16 %v2198
        %v2207 = vunpack.c.l.b16 %v2199
        %v2208 = vunpack.c.l.b16 %v2200
        %v2209 = vpack.c.b16 %v2206, %v2205
        %v2210 = vpack.c.b16 %v2208, %v2207
        %v2214 = vsel %vm1141, %v2196, 0
        %2216 = vmatpush.bf16.msra.mxu0 0
        %2217 = vmatpush.bf16.msra.mxu0 0
        %2218 = vmatpush.bf16.msra.mxu0 0
        %2219 = vmatpush.bf16.msra.mxu0 0
        %2220 = vmatpush.bf16.msra.mxu0 0
        %2221 = vmatpush.bf16.msra.mxu0 0
        %2222 = vmatpush.bf16.msra.mxu0 %v2210
        %2223 = vmatpush.bf16.msra.mxu0 %v2209
        %2224 = vmatmul.bf16.gmra.mxu0 %v2214
        %v2225 = vpop.f32.mrf.mxu0
        %v2226 = vadd.f32 0.0, %v2225
        %v2227 = vpop.f32.mrf.mxu0
        %2228 = vdwg.mxu0
        %v2229 = vadd.f32 %v2010, %v2226
        %v2230 = vld [vmem:[%s49] sm:$0x1]
        %v2232 = vperm.slane %v2230, 0
        %v2234 = vadd.f32 %v2229, %v2232
        %v2235 = vld [vmem:[%s51] sm:$0x1]
        %v2236 = vld [vmem:[%s53] sm:$0x1]
        %v2237 = vsel %vm1141, %v2234, 0.0
        %2238 = vadd.xlane.f32.xlu0 %v2237
        %v2239 = vpop.xlane.xlu0 %2238
        %v2240 = vmul.f32 %v2239, %v1151
        %v2241 = vsub.f32 %v2234, %v2240
        %v2242 = vmul.f32 %v2241, %v2241
        %v2243 = vsel %vm1141, %v2242, 0.0
        %2244 = vadd.xlane.f32.xlu0 %v2243
        %v2245 = vpop.xlane.xlu0 %2244
        %v2246 = vmul.f32 %v2245, %v1151
        %v2247 = vadd.f32 %v2246, 1e-05
        %v2248 = vrsqrt.pop %v2247
        %v2249 = vmul.f32 %v2248, %v2247
        %v2250 = vmul.f32 %v2249, %v2248
        %v2251 = vmul.f32 0.5, %v2250
        %v2252 = vsub.f32 1.5, %v2251
        %v2253 = vmul.f32 %v2248, %v2252
        %vm2254 = vweird.f32 %v2247
        %vm2255 = vweird.f32 %v2248
        %vm2256 = vmor %vm2254, %vm2255
        %v2257 = vsel %vm2256, %v2248, %v2253
        %v2258 = vmul.f32 %v2241, %v2257
        %v2260 = vperm.slane %v2235, 0
        %v2262 = vmul.f32 %v2258, %v2260
        %v2264 = vperm.slane %v2236, 0
        %v2266 = vadd.f32 %v2262, %v2264
        %v2267 = vpack.c.bf16 %v2266, %v2266
        %v2268 = vld [vmem:[%s55] sm:$0xf]
        %v2269 = vld [vmem:[%s55 + $0x4] sm:$0xf]
        %v2270 = vld [vmem:[%s55 + $0x8] sm:$0xf]
        %v2271 = vld [vmem:[%s55 + $0xc] sm:$0xf]
        %v2272 = vld [vmem:[%s57] sm:$0x1]
        %v2274 = vperm.slane %v2272, 0
        %v2280 = vunpack.c.l.b16 %v2268
        %v2281 = vunpack.c.l.b16 %v2269
        %v2282 = vunpack.c.l.b16 %v2270
        %v2283 = vunpack.c.l.b16 %v2271
        %v2284 = vpack.c.b16 %v2281, %v2280
        %v2285 = vpack.c.b16 %v2283, %v2282
        %v2289 = vsel %vm1141, %v2267, 0
        %2291 = vmatpush.bf16.msra.mxu0 0
        %2292 = vmatpush.bf16.msra.mxu0 0
        %2293 = vmatpush.bf16.msra.mxu0 0
        %2294 = vmatpush.bf16.msra.mxu0 0
        %2295 = vmatpush.bf16.msra.mxu0 0
        %2296 = vmatpush.bf16.msra.mxu0 0
        %2297 = vmatpush.bf16.msra.mxu0 %v2285
        %2298 = vmatpush.bf16.msra.mxu0 %v2284
        %2299 = vmatmul.bf16.gmra.mxu0 %v2289
        %v2300 = vpop.f32.mrf.mxu0
        %v2301 = vadd.f32 %v2274, %v2300
        %v2302 = vpop.f32.mrf.mxu0
        %2303 = vdwg.mxu0
        %v2304 = vmul.f32 %v2301, 0.5
        %v2305 = vtanh.pop %v2304
        %v2306 = vadd.f32 %v2305, 1.0
        %v2307 = vmul.f32 %v2306, 0.5
        %v2308 = vmul.f32 %v2301, %v2307
        %v2309 = vpack.c.bf16 %v2308, %v2308
        %v2310 = vld [vmem:[%s59] sm:$0xf]
        %v2311 = vld [vmem:[%s59 + $0x4] sm:$0xf]
        %v2312 = vld [vmem:[%s59 + $0x8] sm:$0xf]
        %v2313 = vld [vmem:[%s59 + $0xc] sm:$0xf]
        %v2314 = vld [vmem:[%s59 + $0x10] sm:$0xf]
        %v2315 = vld [vmem:[%s59 + $0x14] sm:$0xf]
        %v2316 = vld [vmem:[%s59 + $0x18] sm:$0xf]
        %v2317 = vld [vmem:[%s59 + $0x1c] sm:$0xf]
        %v2318 = vld [vmem:[%s61] sm:$0x1]
        %v2320 = vperm.slane %v2318, 0
        %v2330 = vunpack.c.l.b16 %v2310
        %v2331 = vunpack.c.l.b16 %v2311
        %v2332 = vunpack.c.l.b16 %v2312
        %v2333 = vunpack.c.l.b16 %v2313
        %v2334 = vunpack.c.l.b16 %v2314
        %v2335 = vunpack.c.l.b16 %v2315
        %v2336 = vunpack.c.l.b16 %v2316
        %v2337 = vunpack.c.l.b16 %v2317
        %v2338 = vpack.c.b16 %v2331, %v2330
        %v2339 = vpack.c.b16 %v2333, %v2332
        %v2340 = vpack.c.b16 %v2335, %v2334
        %v2341 = vpack.c.b16 %v2337, %v2336
        %v2347 = vsel %vm1258, %v2309, 0
        %2349 = vmatpush.bf16.msra.mxu0 0
        %2350 = vmatpush.bf16.msra.mxu0 0
        %2351 = vmatpush.bf16.msra.mxu0 0
        %2352 = vmatpush.bf16.msra.mxu0 0
        %2353 = vmatpush.bf16.msra.mxu0 %v2341
        %2354 = vmatpush.bf16.msra.mxu0 %v2340
        %2355 = vmatpush.bf16.msra.mxu0 %v2339
        %2356 = vmatpush.bf16.msra.mxu0 %v2338
        %2357 = vmatmul.bf16.gmra.mxu0 %v2347
        %v2358 = vpop.f32.mrf.mxu0
        %v2359 = vadd.f32 %v2320, %v2358
        %v2360 = vpop.f32.mrf.mxu0
        %2361 = vdwg.mxu0
        %v2362 = vmul.f32 %v2359, 0.5
        %v2363 = vadd.f32 %v2234, %v2362
        %v2364 = vld [vmem:[%s63] sm:$0x1]
        %v2365 = vld [vmem:[%s65] sm:$0x1]
        %v2366 = vsel %vm1141, %v2363, 0.0
        %2367 = vadd.xlane.f32.xlu0 %v2366
        %v2368 = vpop.xlane.xlu0 %2367
        %v2369 = vmul.f32 %v2368, %v1151
        %v2370 = vsub.f32 %v2363, %v2369
        %v2371 = vmul.f32 %v2370, %v2370
        %v2372 = vsel %vm1141, %v2371, 0.0
        %2373 = vadd.xlane.f32.xlu0 %v2372
        %v2374 = vpop.xlane.xlu0 %2373
        %v2375 = vmul.f32 %v2374, %v1151
        %v2376 = vadd.f32 %v2375, 1e-05
        %v2377 = vrsqrt.pop %v2376
        %v2378 = vmul.f32 %v2377, %v2376
        %v2379 = vmul.f32 %v2378, %v2377
        %v2380 = vmul.f32 0.5, %v2379
        %v2381 = vsub.f32 1.5, %v2380
        %v2382 = vmul.f32 %v2377, %v2381
        %vm2383 = vweird.f32 %v2376
        %vm2384 = vweird.f32 %v2377
        %vm2385 = vmor %vm2383, %vm2384
        %v2386 = vsel %vm2385, %v2377, %v2382
        %v2387 = vmul.f32 %v2370, %v2386
        %v2389 = vperm.slane %v2364, 0
        %v2391 = vmul.f32 %v2387, %v2389
        %v2393 = vperm.slane %v2365, 0
        %v2395 = vadd.f32 %v2391, %v2393
        %2396 = vst.msk [vmem:[%s1125] sm:$0xff] %vm1141, %v2395
        %s2397 = sand.u32 %s797, 1
        %s2398 = scalar_lea.sflag [#allocation9], %s2397
        %s2399 = sand.u32 %s797, 1
        %s2400 = smul.addr %s2399, 8
        %s2401 = scalar_lea.vmem [#allocation18], %s2400
        %s2402 = sand.u32 %s823, 1
        %s2403 = scalar_lea.sflag [#allocation20], %s2402
        %s2404 = sand.u32 %s823, 1
        %s2405 = smul.addr %s2404, 32
        %s2406 = scalar_lea.vmem [#allocation19], %s2405
        // Predicated region
        $region177: #{tpu_custom_call.1} parent=151 // pred_check
          %p2407 = pneg %p807
        $region178: #{tpu_custom_call.1} parent=151 // pred_check_branch
          %2409 = sbr.rel (%p2407) target = $region180
        $region179: #{tpu_custom_call.1} parent=151 // pred_region
          %2411 = vsyncadd %s2398, 0
          %s2412 = smul.addr %s91, 8
          %s2413 = scalar_lea.hbm %s67, %s2412
          %s2415 = sshll.u32 %s2401, 4
          %s2416 = int_to_ptr.vmem [resolvable:$true] %s2415
          %s2417 = sshll.u32 %s2413, 4
          %s2418 = int_to_ptr.hbm [resolvable:$true] %s2417
          %2420 = dma.vmem_to_hbm [thread:$0]  %s2416, 128, %s2418, %s2398
        $region180: #{tpu_custom_call.1} parent=151 // pred_fallthru
          _
        // Predicated region
        $region181: #{tpu_custom_call.1} parent=151 // pred_check
          %p2421 = pneg %p833
        $region182: #{tpu_custom_call.1} parent=151 // pred_check_branch
          %2423 = sbr.rel (%p2421) target = $region184
        $region183: #{tpu_custom_call.1} parent=151 // pred_region
          %2425 = vsyncadd %s2403, 0
          %s2426 = smul.addr %s91, 4
          %s2427 = smul.addr %s2426, 8
          %s2428 = scalar_lea.hbm %s69, %s2427
          %s2429 = sshll.u32 %s2406, 4
          %s2430 = int_to_ptr.vmem [resolvable:$true] %s2429
          %s2431 = sshll.u32 %s2428, 4
          %s2432 = int_to_ptr.hbm [resolvable:$true] %s2431
          %2437 = dma.vmem_to_hbm [thread:$0]  %s2430, 512, %s2432, %s2403, 128, 128, 8
        $region184: #{tpu_custom_call.1} parent=151 // pred_fallthru
          _
      $region152: #{tpu_custom_call.1} parent=5 // pred_fallthru
        _
      %p2438 = scmp.le.s32.totalorder 2, %s86
      // Predicated region
      $region185: #{tpu_custom_call.1} parent=5 // pred_check
        %p2439 = pneg %p2438
      $region186: #{tpu_custom_call.1} parent=5 // pred_check_branch
        %2441 = sbr.rel (%p2439) target = $region188
      $region187: #{tpu_custom_call.1} parent=5 // pred_region
        %s2442 = ssub.s32 %s86, 2
        // Predicated region
        $region189: #{tpu_custom_call.1} parent=187 // pred_check
          %p2443 = pneg %p813
        $region190: #{tpu_custom_call.1} parent=187 // pred_check_branch
          %2445 = sbr.rel (%p2443) target = $region192
        $region191: #{tpu_custom_call.1} parent=187 // pred_region
          %s2446 = sand.u32 %s798, 1
          %s2447 = scalar_lea.sflag [#allocation9], %s2446
          %s2448 = sand.u32 %s798, 1
          %s2449 = smul.addr %s2448, 8
          %s2450 = scalar_lea.vmem [#allocation18], %s2449
          %2452 = dma.done %s2447, 128
        $region192: #{tpu_custom_call.1} parent=187 // pred_fallthru
          _
        // Predicated region
        $region193: #{tpu_custom_call.1} parent=187 // pred_check
          %p2453 = pneg %p839
        $region194: #{tpu_custom_call.1} parent=187 // pred_check_branch
          %2455 = sbr.rel (%p2453) target = $region196
        $region195: #{tpu_custom_call.1} parent=187 // pred_region
          %s2456 = sand.u32 %s824, 1
          %s2457 = scalar_lea.sflag [#allocation20], %s2456
          %s2458 = sand.u32 %s824, 1
          %s2459 = smul.addr %s2458, 32
          %s2460 = scalar_lea.vmem [#allocation19], %s2459
          %2462 = dma.done %s2457, 512
        $region196: #{tpu_custom_call.1} parent=187 // pred_fallthru
          _
      $region188: #{tpu_custom_call.1} parent=5 // pred_fallthru
        _
    $region6: #{tpu_custom_call.1} parent=1 // loop_footer
      %s90 = sadd.s32 1, %s86
    $region7: #{tpu_custom_call.1} parent=1 // loop_footer_branch
      %85 = sbr.rel target = $region3
    $region8: #{tpu_custom_call.1} parent=1 // loop_exit
      _
    %2463 = vsyncpa [#allocation8], 1
    %s2464 = scalar_lea.sflag [#allocation8], 1
    %2465 = vsyncpa %s2464, 1
    %2466 = vsyncpa [#allocation11], 1
    %2467 = vsyncpa [#allocation14], 1
    %2468 = vsyncpa [#allocation17], 1
    %2469 = vsyncpa [#allocation9], 1
    %s2470 = scalar_lea.sflag [#allocation9], 1
    %2471 = vsyncpa %s2470, 1
    %2472 = vsyncpa [#allocation20], 1
    %s2473 = scalar_lea.sflag [#allocation20], 1
    %2474 = vsyncpa %s2473, 1

</llo_original>
